<compile_context>
chip_gen: v6e
topology: v6e:2x2x1
jax: 0.10.0
libtpu: 0.0.40
codegen_flags: <defaults>
</compile_context>

<pallas_src>
import functools
import math

import jax
import jax.numpy as jnp
from jax.experimental import pallas as pl
from jax.experimental.pallas import tpu as pltpu


# ------------------------------ Fused kernel ----------------------------------
def _make_fused_kernel(T, B, H, L):
    """Builds the fused kernel for L stacked LSTM layers + linear head.

    Kernel ref layout (positional):
      inputs : x2 (T*B, D_in),
               [wih_t (D_l, 4H), whh_t (H, 4H), b (1, 4H)] * L,
               fc_w_t (H, 1), fc_b (1, 1)
      outputs: y (T*B, 1)
      scratch: gx_sc (T*B, 4H), act_sc (T*B, H)
    """

    def kernel(x_ref, *args):
        layer_refs = args[:3 * L]
        fcw_ref, fcb_ref, out_ref, gx_sc, act_sc = args[3 * L:]

        def run_layer(inp_2d, wih_ref, whh_ref, b_ref):
            # Hoisted input projection for ALL timesteps: one MXU matmul.
            gx_sc[...] = (jnp.dot(inp_2d, wih_ref[...],
                                  preferred_element_type=jnp.float32)
                          + b_ref[...])                         # (T*B, 4H)

            whh = whh_ref[...]                                  # (H, 4H) in vregs
            h = None
            c = None

            # Serial recurrence (static unroll).  h/c stay in vregs; only the
            # per-step hidden activation is written to VMEM for the next layer.
            for t in range(T):
                r0 = t * B
                gates_x = gx_sc[r0:r0 + B, :]                   # (B, 4H)
                if t == 0:
                    gates = gates_x                             # h0 == 0
                else:
                    gates = gates_x + jnp.dot(
                        h, whh, preferred_element_type=jnp.float32)

                # Lane-dense nonlinearities over the full 4H=128 lanes,
                # then slice into PyTorch gate order i, f, g, o.
                sig = jax.nn.sigmoid(gates)
                th = jnp.tanh(gates)
                i_g = sig[:, 0 * H:1 * H]
                f_g = sig[:, 1 * H:2 * H]
                g_g = th[:, 2 * H:3 * H]
                o_g = sig[:, 3 * H:4 * H]

                if t == 0:
                    c = i_g * g_g                               # c0 == 0
                else:
                    c = f_g * c + i_g * g_g
                h = o_g * jnp.tanh(c)
                act_sc[r0:r0 + B, :] = h                        # next layer's input

        # Layer 0 reads the (time-major flattened) input; later layers read
        # the previous layer's activations from VMEM scratch (loaded as a
        # value before that layer overwrites act_sc).
        run_layer(x_ref[...], *layer_refs[0:3])
        for l in range(1, L):
            run_layer(act_sc[...], *layer_refs[3 * l:3 * l + 3])

        # Fused FC head: one (T*B, H) @ (H, 1) matmul + bias.
        out_ref[...] = (jnp.dot(act_sc[...], fcw_ref[...],
                                preferred_element_type=jnp.float32)
                        + fcb_ref[...])

    return kernel


# --------------------------------- Wrapper -------------------------------------
def stress_lstm_forward(x, params):
    """x: (B, T, input_size) batch_first, like the PyTorch module.  Returns (B, T)."""
    B, T, D_in = x.shape
    H = params["lstm1"][0][1].shape[1]          # W_hh: (4H, H)
    layers = list(params["lstm1"]) + list(params["lstm2"])
    L = len(layers)

    # Time-major flatten: row t*B + b == x[b, t].
    x_tm = jnp.transpose(x, (1, 0, 2)).reshape(T * B, D_in)

    layer_args = []
    for (wih, whh, bih, bhh) in layers:
        layer_args += [wih.T, whh.T, (bih + bhh).reshape(1, 4 * H)]

    fc_w_t = params["fc_w"].T                   # (H, 1)
    fc_b = params["fc_b"].reshape(1, 1)

    n_inputs = 1 + 3 * L + 2
    vmem_spec = pl.BlockSpec(memory_space=pltpu.MemorySpace.VMEM)

    y = pl.pallas_call(
        _make_fused_kernel(T, B, H, L),
        out_shape=jax.ShapeDtypeStruct((T * B, 1), jnp.float32),
        in_specs=[vmem_spec] * n_inputs,
        out_specs=vmem_spec,
        scratch_shapes=[
            pltpu.VMEM((T * B, 4 * H), jnp.float32),   # precomputed input gates
            pltpu.VMEM((T * B, H), jnp.float32),       # inter-layer activations
        ],
        # Tiny working set here; the raised scoped limit only matters for
        # larger H / T (and is safely below every chip's physical VMEM).
        compiler_params=pltpu.CompilerParams(vmem_limit_bytes=32 * 1024 * 1024),
    )(x_tm, *layer_args, fc_w_t, fc_b)

    # (T*B, 1) -> (B, T), matching fc(out).squeeze(-1) with batch_first.
    return y[:, 0].reshape(T, B).T


# ---------------------------- Deterministic params ----------------------------
def init_params(key, input_size, hidden_size, num_layers):
    k = 1.0 / math.sqrt(hidden_size)

    def uni(kk, shape):
        return jax.random.uniform(kk, shape, jnp.float32, -k, k)

    params = {"lstm1": [], "lstm2": []}
    for name, in0 in (("lstm1", input_size), ("lstm2", hidden_size)):
        for layer in range(num_layers):
            d_in = in0 if layer == 0 else hidden_size
            key, k1, k2, k3, k4 = jax.random.split(key, 5)
            params[name].append((
                uni(k1, (4 * hidden_size, d_in)),         # W_ih
                uni(k2, (4 * hidden_size, hidden_size)),  # W_hh
                uni(k3, (4 * hidden_size,)),              # b_ih
                uni(k4, (4 * hidden_size,)),              # b_hh
            ))
    key, kw, kb = jax.random.split(key, 3)
    params["fc_w"] = uni(kw, (1, hidden_size))
    params["fc_b"] = uni(kb, (1,))
    return params


# ------------------------------ Pure-JAX reference -----------------------------
def _lstm_layer_ref(x_btd, wih, whh, bih, bhh):
    B, T, _ = x_btd.shape
    H = whh.shape[1]
    h = jnp.zeros((B, H), jnp.float32)
    c = jnp.zeros((B, H), jnp.float32)
    mm = functools.partial(jnp.matmul, precision=jax.lax.Precision.HIGHEST)
    outs = []
    for t in range(T):
        gates = mm(x_btd[:, t], wih.T) + bih + mm(h, whh.T) + bhh
        i = jax.nn.sigmoid(gates[:, :H])
        f = jax.nn.sigmoid(gates[:, H:2 * H])
        g = jnp.tanh(gates[:, 2 * H:3 * H])
        o = jax.nn.sigmoid(gates[:, 3 * H:])
        c = f * c + i * g
        h = o * jnp.tanh(c)
        outs.append(h)
    return jnp.stack(outs, axis=1)


def stress_lstm_ref(x, params):
    h = x
    for p in params["lstm1"]:
        h = _lstm_layer_ref(h, *p)
    for p in params["lstm2"]:
        h = _lstm_layer_ref(h, *p)
    return jnp.einsum("bth,oh->bto", h, params["fc_w"])[..., 0] + params["fc_b"][0]


# ------------------------------------ Main ------------------------------------
if __name__ == "__main__":
    B, T = 2, 8
    input_size, hidden_size, num_layers = 8, 32, 2

    key = jax.random.PRNGKey(0)
    key, kx, kp = jax.random.split(key, 3)
    x = jax.random.normal(kx, (B, T, input_size), jnp.float32)
    params = init_params(kp, input_size, hidden_size, num_layers)

    y = stress_lstm_forward(x, params)
    y = jax.block_until_ready(y)

    y_ref = stress_lstm_ref(x, params)
    assert y.shape == (B, T), y.shape
    assert jnp.allclose(y, y_ref, atol=2e-3, rtol=2e-3), (y, y_ref)

    print("KERNEL_OK")
</pallas_src>

<mosaic_0001>
module attributes {stable_mosaic.version = 11 : i64} {
  func.func @kernel(%arg0: memref<16x8xf32, #tpu.memory_space<vmem>>, %arg1: memref<8x128xf32, #tpu.memory_space<vmem>>, %arg2: memref<32x128xf32, #tpu.memory_space<vmem>>, %arg3: memref<1x128xf32, #tpu.memory_space<vmem>>, %arg4: memref<32x128xf32, #tpu.memory_space<vmem>>, %arg5: memref<32x128xf32, #tpu.memory_space<vmem>>, %arg6: memref<1x128xf32, #tpu.memory_space<vmem>>, %arg7: memref<32x128xf32, #tpu.memory_space<vmem>>, %arg8: memref<32x128xf32, #tpu.memory_space<vmem>>, %arg9: memref<1x128xf32, #tpu.memory_space<vmem>>, %arg10: memref<32x128xf32, #tpu.memory_space<vmem>>, %arg11: memref<32x128xf32, #tpu.memory_space<vmem>>, %arg12: memref<1x128xf32, #tpu.memory_space<vmem>>, %arg13: memref<32x1xf32, #tpu.memory_space<vmem>>, %arg14: memref<1x1xf32, #tpu.memory_space<vmem>>, %arg15: memref<16x1xf32, #tpu.memory_space<vmem>>, %arg16: memref<16x128xf32, #tpu.memory_space<vmem>>, %arg17: memref<16x32xf32, #tpu.memory_space<vmem>>) attributes {dimension_semantics = [], scalar_prefetch = 0 : i64, scratch_operands = 2 : i64, tpu.core_type = #tpu.core_type<tc>} {
    %c0 = arith.constant 0 : index
    %c0_0 = arith.constant 0 : index
    %0 = vector.load %arg0[%c0, %c0_0] : memref<16x8xf32, #tpu.memory_space<vmem>>, vector<16x8xf32>
    %c0_1 = arith.constant 0 : index
    %c0_2 = arith.constant 0 : index
    %1 = vector.load %arg1[%c0_1, %c0_2] : memref<8x128xf32, #tpu.memory_space<vmem>>, vector<8x128xf32>
    %cst = arith.constant dense<0.000000e+00> : vector<16x128xf32>
    %2 = tpu.matmul %0, %1, %cst {dimension_numbers = #tpu.dot_dimension_numbers<[1], [0], [0], [1], [0, 0, 1, 1], [], []>} : vector<16x8xf32>, vector<8x128xf32>, vector<16x128xf32> -> vector<16x128xf32>
    %c0_3 = arith.constant 0 : index
    %c0_4 = arith.constant 0 : index
    %3 = vector.load %arg3[%c0_3, %c0_4] : memref<1x128xf32, #tpu.memory_space<vmem>>, vector<1x128xf32>
    %4 = vector.broadcast %3 : vector<1x128xf32> to vector<16x128xf32>
    %5 = arith.addf %2, %4 : vector<16x128xf32>
    %c0_5 = arith.constant 0 : index
    %c0_6 = arith.constant 0 : index
    %6 = vector.load %arg16[%c0_5, %c0_6] : memref<16x128xf32, #tpu.memory_space<vmem>>, vector<16x128xf32>
    tpu.vector_store %arg16[%c0_5, %c0_6], %5 {strides = array<i32>} : memref<16x128xf32, #tpu.memory_space<vmem>>, vector<16x128xf32>,
    %c0_7 = arith.constant 0 : index
    %c0_8 = arith.constant 0 : index
    %7 = vector.load %arg2[%c0_7, %c0_8] : memref<32x128xf32, #tpu.memory_space<vmem>>, vector<32x128xf32>
    %c0_9 = arith.constant 0 : index
    %c0_10 = arith.constant 0 : index
    %8 = vector.load %arg16[%c0_9, %c0_10] : memref<16x128xf32, #tpu.memory_space<vmem>>, vector<2x128xf32>
    %9 = arith.negf %8 : vector<2x128xf32>
    %10 = math.exp %9 : vector<2x128xf32>
    %cst_11 = arith.constant 1.000000e+00 : f32
    %11 = vector.broadcast %cst_11 : f32 to vector<2x128xf32>
    %12 = arith.addf %11, %10 : vector<2x128xf32>
    %13 = arith.divf %11, %12 : vector<2x128xf32>
    %14 = math.tanh %8 : vector<2x128xf32>
    %15 = vector.extract_strided_slice %13 {offsets = [0, 0], sizes = [2, 32], strides = [1, 1]} : vector<2x128xf32> to vector<2x32xf32>
    %16 = vector.extract_strided_slice %14 {offsets = [0, 64], sizes = [2, 32], strides = [1, 1]} : vector<2x128xf32> to vector<2x32xf32>
    %17 = vector.extract_strided_slice %13 {offsets = [0, 96], sizes = [2, 32], strides = [1, 1]} : vector<2x128xf32> to vector<2x32xf32>
    %18 = arith.mulf %15, %16 : vector<2x32xf32>
    %19 = math.tanh %18 : vector<2x32xf32>
    %20 = arith.mulf %17, %19 : vector<2x32xf32>
    %c0_12 = arith.constant 0 : index
    %c0_13 = arith.constant 0 : index
    %21 = vector.load %arg17[%c0_12, %c0_13] : memref<16x32xf32, #tpu.memory_space<vmem>>, vector<2x32xf32>
    tpu.vector_store %arg17[%c0_12, %c0_13], %20 {strides = array<i32>} : memref<16x32xf32, #tpu.memory_space<vmem>>, vector<2x32xf32>,
    %c2 = arith.constant 2 : index
    %c0_14 = arith.constant 0 : index
    %22 = vector.load %arg16[%c2, %c0_14] : memref<16x128xf32, #tpu.memory_space<vmem>>, vector<2x128xf32>
    %cst_15 = arith.constant dense<0.000000e+00> : vector<2x128xf32>
    %23 = tpu.matmul %20, %7, %cst_15 {dimension_numbers = #tpu.dot_dimension_numbers<[1], [0], [0], [1], [0, 0, 1, 1], [], []>} : vector<2x32xf32>, vector<32x128xf32>, vector<2x128xf32> -> vector<2x128xf32>
    %24 = arith.addf %22, %23 : vector<2x128xf32>
    %25 = arith.negf %24 : vector<2x128xf32>
    %26 = math.exp %25 : vector<2x128xf32>
    %cst_16 = arith.constant 1.000000e+00 : f32
    %27 = vector.broadcast %cst_16 : f32 to vector<2x128xf32>
    %28 = arith.addf %27, %26 : vector<2x128xf32>
    %29 = arith.divf %27, %28 : vector<2x128xf32>
    %30 = math.tanh %24 : vector<2x128xf32>
    %31 = vector.extract_strided_slice %29 {offsets = [0, 0], sizes = [2, 32], strides = [1, 1]} : vector<2x128xf32> to vector<2x32xf32>
    %32 = vector.extract_strided_slice %29 {offsets = [0, 32], sizes = [2, 32], strides = [1, 1]} : vector<2x128xf32> to vector<2x32xf32>
    %33 = vector.extract_strided_slice %30 {offsets = [0, 64], sizes = [2, 32], strides = [1, 1]} : vector<2x128xf32> to vector<2x32xf32>
    %34 = vector.extract_strided_slice %29 {offsets = [0, 96], sizes = [2, 32], strides = [1, 1]} : vector<2x128xf32> to vector<2x32xf32>
    %35 = arith.mulf %32, %18 : vector<2x32xf32>
    %36 = arith.mulf %31, %33 : vector<2x32xf32>
    %37 = arith.addf %35, %36 : vector<2x32xf32>
    %38 = math.tanh %37 : vector<2x32xf32>
    %39 = arith.mulf %34, %38 : vector<2x32xf32>
    %c2_17 = arith.constant 2 : index
    %c0_18 = arith.constant 0 : index
    %40 = vector.load %arg17[%c2_17, %c0_18] : memref<16x32xf32, #tpu.memory_space<vmem>>, vector<2x32xf32>
    tpu.vector_store %arg17[%c2_17, %c0_18], %39 {strides = array<i32>} : memref<16x32xf32, #tpu.memory_space<vmem>>, vector<2x32xf32>,
    %c4 = arith.constant 4 : index
    %c0_19 = arith.constant 0 : index
    %41 = vector.load %arg16[%c4, %c0_19] : memref<16x128xf32, #tpu.memory_space<vmem>>, vector<2x128xf32>
    %cst_20 = arith.constant dense<0.000000e+00> : vector<2x128xf32>
    %42 = tpu.matmul %39, %7, %cst_20 {dimension_numbers = #tpu.dot_dimension_numbers<[1], [0], [0], [1], [0, 0, 1, 1], [], []>} : vector<2x32xf32>, vector<32x128xf32>, vector<2x128xf32> -> vector<2x128xf32>
    %43 = arith.addf %41, %42 : vector<2x128xf32>
    %44 = arith.negf %43 : vector<2x128xf32>
    %45 = math.exp %44 : vector<2x128xf32>
    %cst_21 = arith.constant 1.000000e+00 : f32
    %46 = vector.broadcast %cst_21 : f32 to vector<2x128xf32>
    %47 = arith.addf %46, %45 : vector<2x128xf32>
    %48 = arith.divf %46, %47 : vector<2x128xf32>
    %49 = math.tanh %43 : vector<2x128xf32>
    %50 = vector.extract_strided_slice %48 {offsets = [0, 0], sizes = [2, 32], strides = [1, 1]} : vector<2x128xf32> to vector<2x32xf32>
    %51 = vector.extract_strided_slice %48 {offsets = [0, 32], sizes = [2, 32], strides = [1, 1]} : vector<2x128xf32> to vector<2x32xf32>
    %52 = vector.extract_strided_slice %49 {offsets = [0, 64], sizes = [2, 32], strides = [1, 1]} : vector<2x128xf32> to vector<2x32xf32>
    %53 = vector.extract_strided_slice %48 {offsets = [0, 96], sizes = [2, 32], strides = [1, 1]} : vector<2x128xf32> to vector<2x32xf32>
    %54 = arith.mulf %51, %37 : vector<2x32xf32>
    %55 = arith.mulf %50, %52 : vector<2x32xf32>
    %56 = arith.addf %54, %55 : vector<2x32xf32>
    %57 = math.tanh %56 : vector<2x32xf32>
    %58 = arith.mulf %53, %57 : vector<2x32xf32>
    %c4_22 = arith.constant 4 : index
    %c0_23 = arith.constant 0 : index
    %59 = vector.load %arg17[%c4_22, %c0_23] : memref<16x32xf32, #tpu.memory_space<vmem>>, vector<2x32xf32>
    tpu.vector_store %arg17[%c4_22, %c0_23], %58 {strides = array<i32>} : memref<16x32xf32, #tpu.memory_space<vmem>>, vector<2x32xf32>,
    %c6 = arith.constant 6 : index
    %c0_24 = arith.constant 0 : index
    %60 = vector.load %arg16[%c6, %c0_24] : memref<16x128xf32, #tpu.memory_space<vmem>>, vector<2x128xf32>
    %cst_25 = arith.constant dense<0.000000e+00> : vector<2x128xf32>
    %61 = tpu.matmul %58, %7, %cst_25 {dimension_numbers = #tpu.dot_dimension_numbers<[1], [0], [0], [1], [0, 0, 1, 1], [], []>} : vector<2x32xf32>, vector<32x128xf32>, vector<2x128xf32> -> vector<2x128xf32>
    %62 = arith.addf %60, %61 : vector<2x128xf32>
    %63 = arith.negf %62 : vector<2x128xf32>
    %64 = math.exp %63 : vector<2x128xf32>
    %cst_26 = arith.constant 1.000000e+00 : f32
    %65 = vector.broadcast %cst_26 : f32 to vector<2x128xf32>
    %66 = arith.addf %65, %64 : vector<2x128xf32>
    %67 = arith.divf %65, %66 : vector<2x128xf32>
    %68 = math.tanh %62 : vector<2x128xf32>
    %69 = vector.extract_strided_slice %67 {offsets = [0, 0], sizes = [2, 32], strides = [1, 1]} : vector<2x128xf32> to vector<2x32xf32>
    %70 = vector.extract_strided_slice %67 {offsets = [0, 32], sizes = [2, 32], strides = [1, 1]} : vector<2x128xf32> to vector<2x32xf32>
    %71 = vector.extract_strided_slice %68 {offsets = [0, 64], sizes = [2, 32], strides = [1, 1]} : vector<2x128xf32> to vector<2x32xf32>
    %72 = vector.extract_strided_slice %67 {offsets = [0, 96], sizes = [2, 32], strides = [1, 1]} : vector<2x128xf32> to vector<2x32xf32>
    %73 = arith.mulf %70, %56 : vector<2x32xf32>
    %74 = arith.mulf %69, %71 : vector<2x32xf32>
    %75 = arith.addf %73, %74 : vector<2x32xf32>
    %76 = math.tanh %75 : vector<2x32xf32>
    %77 = arith.mulf %72, %76 : vector<2x32xf32>
    %c6_27 = arith.constant 6 : index
    %c0_28 = arith.constant 0 : index
    %78 = vector.load %arg17[%c6_27, %c0_28] : memref<16x32xf32, #tpu.memory_space<vmem>>, vector<2x32xf32>
    tpu.vector_store %arg17[%c6_27, %c0_28], %77 {strides = array<i32>} : memref<16x32xf32, #tpu.memory_space<vmem>>, vector<2x32xf32>,
    %c8 = arith.constant 8 : index
    %c0_29 = arith.constant 0 : index
    %79 = vector.load %arg16[%c8, %c0_29] : memref<16x128xf32, #tpu.memory_space<vmem>>, vector<2x128xf32>
    %cst_30 = arith.constant dense<0.000000e+00> : vector<2x128xf32>
    %80 = tpu.matmul %77, %7, %cst_30 {dimension_numbers = #tpu.dot_dimension_numbers<[1], [0], [0], [1], [0, 0, 1, 1], [], []>} : vector<2x32xf32>, vector<32x128xf32>, vector<2x128xf32> -> vector<2x128xf32>
    %81 = arith.addf %79, %80 : vector<2x128xf32>
    %82 = arith.negf %81 : vector<2x128xf32>
    %83 = math.exp %82 : vector<2x128xf32>
    %cst_31 = arith.constant 1.000000e+00 : f32
    %84 = vector.broadcast %cst_31 : f32 to vector<2x128xf32>
    %85 = arith.addf %84, %83 : vector<2x128xf32>
    %86 = arith.divf %84, %85 : vector<2x128xf32>
    %87 = math.tanh %81 : vector<2x128xf32>
    %88 = vector.extract_strided_slice %86 {offsets = [0, 0], sizes = [2, 32], strides = [1, 1]} : vector<2x128xf32> to vector<2x32xf32>
    %89 = vector.extract_strided_slice %86 {offsets = [0, 32], sizes = [2, 32], strides = [1, 1]} : vector<2x128xf32> to vector<2x32xf32>
    %90 = vector.extract_strided_slice %87 {offsets = [0, 64], sizes = [2, 32], strides = [1, 1]} : vector<2x128xf32> to vector<2x32xf32>
    %91 = vector.extract_strided_slice %86 {offsets = [0, 96], sizes = [2, 32], strides = [1, 1]} : vector<2x128xf32> to vector<2x32xf32>
    %92 = arith.mulf %89, %75 : vector<2x32xf32>
    %93 = arith.mulf %88, %90 : vector<2x32xf32>
    %94 = arith.addf %92, %93 : vector<2x32xf32>
    %95 = math.tanh %94 : vector<2x32xf32>
    %96 = arith.mulf %91, %95 : vector<2x32xf32>
    %c8_32 = arith.constant 8 : index
    %c0_33 = arith.constant 0 : index
    %97 = vector.load %arg17[%c8_32, %c0_33] : memref<16x32xf32, #tpu.memory_space<vmem>>, vector<2x32xf32>
    tpu.vector_store %arg17[%c8_32, %c0_33], %96 {strides = array<i32>} : memref<16x32xf32, #tpu.memory_space<vmem>>, vector<2x32xf32>,
    %c10 = arith.constant 10 : index
    %c0_34 = arith.constant 0 : index
    %98 = vector.load %arg16[%c10, %c0_34] : memref<16x128xf32, #tpu.memory_space<vmem>>, vector<2x128xf32>
    %cst_35 = arith.constant dense<0.000000e+00> : vector<2x128xf32>
    %99 = tpu.matmul %96, %7, %cst_35 {dimension_numbers = #tpu.dot_dimension_numbers<[1], [0], [0], [1], [0, 0, 1, 1], [], []>} : vector<2x32xf32>, vector<32x128xf32>, vector<2x128xf32> -> vector<2x128xf32>
    %100 = arith.addf %98, %99 : vector<2x128xf32>
    %101 = arith.negf %100 : vector<2x128xf32>
    %102 = math.exp %101 : vector<2x128xf32>
    %cst_36 = arith.constant 1.000000e+00 : f32
    %103 = vector.broadcast %cst_36 : f32 to vector<2x128xf32>
    %104 = arith.addf %103, %102 : vector<2x128xf32>
    %105 = arith.divf %103, %104 : vector<2x128xf32>
    %106 = math.tanh %100 : vector<2x128xf32>
    %107 = vector.extract_strided_slice %105 {offsets = [0, 0], sizes = [2, 32], strides = [1, 1]} : vector<2x128xf32> to vector<2x32xf32>
    %108 = vector.extract_strided_slice %105 {offsets = [0, 32], sizes = [2, 32], strides = [1, 1]} : vector<2x128xf32> to vector<2x32xf32>
    %109 = vector.extract_strided_slice %106 {offsets = [0, 64], sizes = [2, 32], strides = [1, 1]} : vector<2x128xf32> to vector<2x32xf32>
    %110 = vector.extract_strided_slice %105 {offsets = [0, 96], sizes = [2, 32], strides = [1, 1]} : vector<2x128xf32> to vector<2x32xf32>
    %111 = arith.mulf %108, %94 : vector<2x32xf32>
    %112 = arith.mulf %107, %109 : vector<2x32xf32>
    %113 = arith.addf %111, %112 : vector<2x32xf32>
    %114 = math.tanh %113 : vector<2x32xf32>
    %115 = arith.mulf %110, %114 : vector<2x32xf32>
    %c10_37 = arith.constant 10 : index
    %c0_38 = arith.constant 0 : index
    %116 = vector.load %arg17[%c10_37, %c0_38] : memref<16x32xf32, #tpu.memory_space<vmem>>, vector<2x32xf32>
    tpu.vector_store %arg17[%c10_37, %c0_38], %115 {strides = array<i32>} : memref<16x32xf32, #tpu.memory_space<vmem>>, vector<2x32xf32>,
    %c12 = arith.constant 12 : index
    %c0_39 = arith.constant 0 : index
    %117 = vector.load %arg16[%c12, %c0_39] : memref<16x128xf32, #tpu.memory_space<vmem>>, vector<2x128xf32>
    %cst_40 = arith.constant dense<0.000000e+00> : vector<2x128xf32>
    %118 = tpu.matmul %115, %7, %cst_40 {dimension_numbers = #tpu.dot_dimension_numbers<[1], [0], [0], [1], [0, 0, 1, 1], [], []>} : vector<2x32xf32>, vector<32x128xf32>, vector<2x128xf32> -> vector<2x128xf32>
    %119 = arith.addf %117, %118 : vector<2x128xf32>
    %120 = arith.negf %119 : vector<2x128xf32>
    %121 = math.exp %120 : vector<2x128xf32>
    %cst_41 = arith.constant 1.000000e+00 : f32
    %122 = vector.broadcast %cst_41 : f32 to vector<2x128xf32>
    %123 = arith.addf %122, %121 : vector<2x128xf32>
    %124 = arith.divf %122, %123 : vector<2x128xf32>
    %125 = math.tanh %119 : vector<2x128xf32>
    %126 = vector.extract_strided_slice %124 {offsets = [0, 0], sizes = [2, 32], strides = [1, 1]} : vector<2x128xf32> to vector<2x32xf32>
    %127 = vector.extract_strided_slice %124 {offsets = [0, 32], sizes = [2, 32], strides = [1, 1]} : vector<2x128xf32> to vector<2x32xf32>
    %128 = vector.extract_strided_slice %125 {offsets = [0, 64], sizes = [2, 32], strides = [1, 1]} : vector<2x128xf32> to vector<2x32xf32>
    %129 = vector.extract_strided_slice %124 {offsets = [0, 96], sizes = [2, 32], strides = [1, 1]} : vector<2x128xf32> to vector<2x32xf32>
    %130 = arith.mulf %127, %113 : vector<2x32xf32>
    %131 = arith.mulf %126, %128 : vector<2x32xf32>
    %132 = arith.addf %130, %131 : vector<2x32xf32>
    %133 = math.tanh %132 : vector<2x32xf32>
    %134 = arith.mulf %129, %133 : vector<2x32xf32>
    %c12_42 = arith.constant 12 : index
    %c0_43 = arith.constant 0 : index
    %135 = vector.load %arg17[%c12_42, %c0_43] : memref<16x32xf32, #tpu.memory_space<vmem>>, vector<2x32xf32>
    tpu.vector_store %arg17[%c12_42, %c0_43], %134 {strides = array<i32>} : memref<16x32xf32, #tpu.memory_space<vmem>>, vector<2x32xf32>,
    %c14 = arith.constant 14 : index
    %c0_44 = arith.constant 0 : index
    %136 = vector.load %arg16[%c14, %c0_44] : memref<16x128xf32, #tpu.memory_space<vmem>>, vector<2x128xf32>
    %cst_45 = arith.constant dense<0.000000e+00> : vector<2x128xf32>
    %137 = tpu.matmul %134, %7, %cst_45 {dimension_numbers = #tpu.dot_dimension_numbers<[1], [0], [0], [1], [0, 0, 1, 1], [], []>} : vector<2x32xf32>, vector<32x128xf32>, vector<2x128xf32> -> vector<2x128xf32>
    %138 = arith.addf %136, %137 : vector<2x128xf32>
    %139 = arith.negf %138 : vector<2x128xf32>
    %140 = math.exp %139 : vector<2x128xf32>
    %cst_46 = arith.constant 1.000000e+00 : f32
    %141 = vector.broadcast %cst_46 : f32 to vector<2x128xf32>
    %142 = arith.addf %141, %140 : vector<2x128xf32>
    %143 = arith.divf %141, %142 : vector<2x128xf32>
    %144 = math.tanh %138 : vector<2x128xf32>
    %145 = vector.extract_strided_slice %143 {offsets = [0, 0], sizes = [2, 32], strides = [1, 1]} : vector<2x128xf32> to vector<2x32xf32>
    %146 = vector.extract_strided_slice %143 {offsets = [0, 32], sizes = [2, 32], strides = [1, 1]} : vector<2x128xf32> to vector<2x32xf32>
    %147 = vector.extract_strided_slice %144 {offsets = [0, 64], sizes = [2, 32], strides = [1, 1]} : vector<2x128xf32> to vector<2x32xf32>
    %148 = vector.extract_strided_slice %143 {offsets = [0, 96], sizes = [2, 32], strides = [1, 1]} : vector<2x128xf32> to vector<2x32xf32>
    %149 = arith.mulf %146, %132 : vector<2x32xf32>
    %150 = arith.mulf %145, %147 : vector<2x32xf32>
    %151 = arith.addf %149, %150 : vector<2x32xf32>
    %152 = math.tanh %151 : vector<2x32xf32>
    %153 = arith.mulf %148, %152 : vector<2x32xf32>
    %c14_47 = arith.constant 14 : index
    %c0_48 = arith.constant 0 : index
    %154 = vector.load %arg17[%c14_47, %c0_48] : memref<16x32xf32, #tpu.memory_space<vmem>>, vector<2x32xf32>
    tpu.vector_store %arg17[%c14_47, %c0_48], %153 {strides = array<i32>} : memref<16x32xf32, #tpu.memory_space<vmem>>, vector<2x32xf32>,
    %c0_49 = arith.constant 0 : index
    %c0_50 = arith.constant 0 : index
    %155 = vector.load %arg17[%c0_49, %c0_50] : memref<16x32xf32, #tpu.memory_space<vmem>>, vector<16x32xf32>
    %c0_51 = arith.constant 0 : index
    %c0_52 = arith.constant 0 : index
    %156 = vector.load %arg4[%c0_51, %c0_52] : memref<32x128xf32, #tpu.memory_space<vmem>>, vector<32x128xf32>
    %cst_53 = arith.constant dense<0.000000e+00> : vector<16x128xf32>
    %157 = tpu.matmul %155, %156, %cst_53 {dimension_numbers = #tpu.dot_dimension_numbers<[1], [0], [0], [1], [0, 0, 1, 1], [], []>} : vector<16x32xf32>, vector<32x128xf32>, vector<16x128xf32> -> vector<16x128xf32>
    %c0_54 = arith.constant 0 : index
    %c0_55 = arith.constant 0 : index
    %158 = vector.load %arg6[%c0_54, %c0_55] : memref<1x128xf32, #tpu.memory_space<vmem>>, vector<1x128xf32>
    %159 = vector.broadcast %158 : vector<1x128xf32> to vector<16x128xf32>
    %160 = arith.addf %157, %159 : vector<16x128xf32>
    %c0_56 = arith.constant 0 : index
    %c0_57 = arith.constant 0 : index
    %161 = vector.load %arg16[%c0_56, %c0_57] : memref<16x128xf32, #tpu.memory_space<vmem>>, vector<16x128xf32>
    tpu.vector_store %arg16[%c0_56, %c0_57], %160 {strides = array<i32>} : memref<16x128xf32, #tpu.memory_space<vmem>>, vector<16x128xf32>,
    %c0_58 = arith.constant 0 : index
    %c0_59 = arith.constant 0 : index
    %162 = vector.load %arg5[%c0_58, %c0_59] : memref<32x128xf32, #tpu.memory_space<vmem>>, vector<32x128xf32>
    %c0_60 = arith.constant 0 : index
    %c0_61 = arith.constant 0 : index
    %163 = vector.load %arg16[%c0_60, %c0_61] : memref<16x128xf32, #tpu.memory_space<vmem>>, vector<2x128xf32>
    %164 = arith.negf %163 : vector<2x128xf32>
    %165 = math.exp %164 : vector<2x128xf32>
    %cst_62 = arith.constant 1.000000e+00 : f32
    %166 = vector.broadcast %cst_62 : f32 to vector<2x128xf32>
    %167 = arith.addf %166, %165 : vector<2x128xf32>
    %168 = arith.divf %166, %167 : vector<2x128xf32>
    %169 = math.tanh %163 : vector<2x128xf32>
    %170 = vector.extract_strided_slice %168 {offsets = [0, 0], sizes = [2, 32], strides = [1, 1]} : vector<2x128xf32> to vector<2x32xf32>
    %171 = vector.extract_strided_slice %169 {offsets = [0, 64], sizes = [2, 32], strides = [1, 1]} : vector<2x128xf32> to vector<2x32xf32>
    %172 = vector.extract_strided_slice %168 {offsets = [0, 96], sizes = [2, 32], strides = [1, 1]} : vector<2x128xf32> to vector<2x32xf32>
    %173 = arith.mulf %170, %171 : vector<2x32xf32>
    %174 = math.tanh %173 : vector<2x32xf32>
    %175 = arith.mulf %172, %174 : vector<2x32xf32>
    %c0_63 = arith.constant 0 : index
    %c0_64 = arith.constant 0 : index
    %176 = vector.load %arg17[%c0_63, %c0_64] : memref<16x32xf32, #tpu.memory_space<vmem>>, vector<2x32xf32>
    tpu.vector_store %arg17[%c0_63, %c0_64], %175 {strides = array<i32>} : memref<16x32xf32, #tpu.memory_space<vmem>>, vector<2x32xf32>,
    %c2_65 = arith.constant 2 : index
    %c0_66 = arith.constant 0 : index
    %177 = vector.load %arg16[%c2_65, %c0_66] : memref<16x128xf32, #tpu.memory_space<vmem>>, vector<2x128xf32>
    %cst_67 = arith.constant dense<0.000000e+00> : vector<2x128xf32>
    %178 = tpu.matmul %175, %162, %cst_67 {dimension_numbers = #tpu.dot_dimension_numbers<[1], [0], [0], [1], [0, 0, 1, 1], [], []>} : vector<2x32xf32>, vector<32x128xf32>, vector<2x128xf32> -> vector<2x128xf32>
    %179 = arith.addf %177, %178 : vector<2x128xf32>
    %180 = arith.negf %179 : vector<2x128xf32>
    %181 = math.exp %180 : vector<2x128xf32>
    %cst_68 = arith.constant 1.000000e+00 : f32
    %182 = vector.broadcast %cst_68 : f32 to vector<2x128xf32>
    %183 = arith.addf %182, %181 : vector<2x128xf32>
    %184 = arith.divf %182, %183 : vector<2x128xf32>
    %185 = math.tanh %179 : vector<2x128xf32>
    %186 = vector.extract_strided_slice %184 {offsets = [0, 0], sizes = [2, 32], strides = [1, 1]} : vector<2x128xf32> to vector<2x32xf32>
    %187 = vector.extract_strided_slice %184 {offsets = [0, 32], sizes = [2, 32], strides = [1, 1]} : vector<2x128xf32> to vector<2x32xf32>
    %188 = vector.extract_strided_slice %185 {offsets = [0, 64], sizes = [2, 32], strides = [1, 1]} : vector<2x128xf32> to vector<2x32xf32>
    %189 = vector.extract_strided_slice %184 {offsets = [0, 96], sizes = [2, 32], strides = [1, 1]} : vector<2x128xf32> to vector<2x32xf32>
    %190 = arith.mulf %187, %173 : vector<2x32xf32>
    %191 = arith.mulf %186, %188 : vector<2x32xf32>
    %192 = arith.addf %190, %191 : vector<2x32xf32>
    %193 = math.tanh %192 : vector<2x32xf32>
    %194 = arith.mulf %189, %193 : vector<2x32xf32>
    %c2_69 = arith.constant 2 : index
    %c0_70 = arith.constant 0 : index
    %195 = vector.load %arg17[%c2_69, %c0_70] : memref<16x32xf32, #tpu.memory_space<vmem>>, vector<2x32xf32>
    tpu.vector_store %arg17[%c2_69, %c0_70], %194 {strides = array<i32>} : memref<16x32xf32, #tpu.memory_space<vmem>>, vector<2x32xf32>,
    %c4_71 = arith.constant 4 : index
    %c0_72 = arith.constant 0 : index
    %196 = vector.load %arg16[%c4_71, %c0_72] : memref<16x128xf32, #tpu.memory_space<vmem>>, vector<2x128xf32>
    %cst_73 = arith.constant dense<0.000000e+00> : vector<2x128xf32>
    %197 = tpu.matmul %194, %162, %cst_73 {dimension_numbers = #tpu.dot_dimension_numbers<[1], [0], [0], [1], [0, 0, 1, 1], [], []>} : vector<2x32xf32>, vector<32x128xf32>, vector<2x128xf32> -> vector<2x128xf32>
    %198 = arith.addf %196, %197 : vector<2x128xf32>
    %199 = arith.negf %198 : vector<2x128xf32>
    %200 = math.exp %199 : vector<2x128xf32>
    %cst_74 = arith.constant 1.000000e+00 : f32
    %201 = vector.broadcast %cst_74 : f32 to vector<2x128xf32>
    %202 = arith.addf %201, %200 : vector<2x128xf32>
    %203 = arith.divf %201, %202 : vector<2x128xf32>
    %204 = math.tanh %198 : vector<2x128xf32>
    %205 = vector.extract_strided_slice %203 {offsets = [0, 0], sizes = [2, 32], strides = [1, 1]} : vector<2x128xf32> to vector<2x32xf32>
    %206 = vector.extract_strided_slice %203 {offsets = [0, 32], sizes = [2, 32], strides = [1, 1]} : vector<2x128xf32> to vector<2x32xf32>
    %207 = vector.extract_strided_slice %204 {offsets = [0, 64], sizes = [2, 32], strides = [1, 1]} : vector<2x128xf32> to vector<2x32xf32>
    %208 = vector.extract_strided_slice %203 {offsets = [0, 96], sizes = [2, 32], strides = [1, 1]} : vector<2x128xf32> to vector<2x32xf32>
    %209 = arith.mulf %206, %192 : vector<2x32xf32>
    %210 = arith.mulf %205, %207 : vector<2x32xf32>
    %211 = arith.addf %209, %210 : vector<2x32xf32>
    %212 = math.tanh %211 : vector<2x32xf32>
    %213 = arith.mulf %208, %212 : vector<2x32xf32>
    %c4_75 = arith.constant 4 : index
    %c0_76 = arith.constant 0 : index
    %214 = vector.load %arg17[%c4_75, %c0_76] : memref<16x32xf32, #tpu.memory_space<vmem>>, vector<2x32xf32>
    tpu.vector_store %arg17[%c4_75, %c0_76], %213 {strides = array<i32>} : memref<16x32xf32, #tpu.memory_space<vmem>>, vector<2x32xf32>,
    %c6_77 = arith.constant 6 : index
    %c0_78 = arith.constant 0 : index
    %215 = vector.load %arg16[%c6_77, %c0_78] : memref<16x128xf32, #tpu.memory_space<vmem>>, vector<2x128xf32>
    %cst_79 = arith.constant dense<0.000000e+00> : vector<2x128xf32>
    %216 = tpu.matmul %213, %162, %cst_79 {dimension_numbers = #tpu.dot_dimension_numbers<[1], [0], [0], [1], [0, 0, 1, 1], [], []>} : vector<2x32xf32>, vector<32x128xf32>, vector<2x128xf32> -> vector<2x128xf32>
    %217 = arith.addf %215, %216 : vector<2x128xf32>
    %218 = arith.negf %217 : vector<2x128xf32>
    %219 = math.exp %218 : vector<2x128xf32>
    %cst_80 = arith.constant 1.000000e+00 : f32
    %220 = vector.broadcast %cst_80 : f32 to vector<2x128xf32>
    %221 = arith.addf %220, %219 : vector<2x128xf32>
    %222 = arith.divf %220, %221 : vector<2x128xf32>
    %223 = math.tanh %217 : vector<2x128xf32>
    %224 = vector.extract_strided_slice %222 {offsets = [0, 0], sizes = [2, 32], strides = [1, 1]} : vector<2x128xf32> to vector<2x32xf32>
    %225 = vector.extract_strided_slice %222 {offsets = [0, 32], sizes = [2, 32], strides = [1, 1]} : vector<2x128xf32> to vector<2x32xf32>
    %226 = vector.extract_strided_slice %223 {offsets = [0, 64], sizes = [2, 32], strides = [1, 1]} : vector<2x128xf32> to vector<2x32xf32>
    %227 = vector.extract_strided_slice %222 {offsets = [0, 96], sizes = [2, 32], strides = [1, 1]} : vector<2x128xf32> to vector<2x32xf32>
    %228 = arith.mulf %225, %211 : vector<2x32xf32>
    %229 = arith.mulf %224, %226 : vector<2x32xf32>
    %230 = arith.addf %228, %229 : vector<2x32xf32>
    %231 = math.tanh %230 : vector<2x32xf32>
    %232 = arith.mulf %227, %231 : vector<2x32xf32>
    %c6_81 = arith.constant 6 : index
    %c0_82 = arith.constant 0 : index
    %233 = vector.load %arg17[%c6_81, %c0_82] : memref<16x32xf32, #tpu.memory_space<vmem>>, vector<2x32xf32>
    tpu.vector_store %arg17[%c6_81, %c0_82], %232 {strides = array<i32>} : memref<16x32xf32, #tpu.memory_space<vmem>>, vector<2x32xf32>,
    %c8_83 = arith.constant 8 : index
    %c0_84 = arith.constant 0 : index
    %234 = vector.load %arg16[%c8_83, %c0_84] : memref<16x128xf32, #tpu.memory_space<vmem>>, vector<2x128xf32>
    %cst_85 = arith.constant dense<0.000000e+00> : vector<2x128xf32>
    %235 = tpu.matmul %232, %162, %cst_85 {dimension_numbers = #tpu.dot_dimension_numbers<[1], [0], [0], [1], [0, 0, 1, 1], [], []>} : vector<2x32xf32>, vector<32x128xf32>, vector<2x128xf32> -> vector<2x128xf32>
    %236 = arith.addf %234, %235 : vector<2x128xf32>
    %237 = arith.negf %236 : vector<2x128xf32>
    %238 = math.exp %237 : vector<2x128xf32>
    %cst_86 = arith.constant 1.000000e+00 : f32
    %239 = vector.broadcast %cst_86 : f32 to vector<2x128xf32>
    %240 = arith.addf %239, %238 : vector<2x128xf32>
    %241 = arith.divf %239, %240 : vector<2x128xf32>
    %242 = math.tanh %236 : vector<2x128xf32>
    %243 = vector.extract_strided_slice %241 {offsets = [0, 0], sizes = [2, 32], strides = [1, 1]} : vector<2x128xf32> to vector<2x32xf32>
    %244 = vector.extract_strided_slice %241 {offsets = [0, 32], sizes = [2, 32], strides = [1, 1]} : vector<2x128xf32> to vector<2x32xf32>
    %245 = vector.extract_strided_slice %242 {offsets = [0, 64], sizes = [2, 32], strides = [1, 1]} : vector<2x128xf32> to vector<2x32xf32>
    %246 = vector.extract_strided_slice %241 {offsets = [0, 96], sizes = [2, 32], strides = [1, 1]} : vector<2x128xf32> to vector<2x32xf32>
    %247 = arith.mulf %244, %230 : vector<2x32xf32>
    %248 = arith.mulf %243, %245 : vector<2x32xf32>
    %249 = arith.addf %247, %248 : vector<2x32xf32>
    %250 = math.tanh %249 : vector<2x32xf32>
    %251 = arith.mulf %246, %250 : vector<2x32xf32>
    %c8_87 = arith.constant 8 : index
    %c0_88 = arith.constant 0 : index
    %252 = vector.load %arg17[%c8_87, %c0_88] : memref<16x32xf32, #tpu.memory_space<vmem>>, vector<2x32xf32>
    tpu.vector_store %arg17[%c8_87, %c0_88], %251 {strides = array<i32>} : memref<16x32xf32, #tpu.memory_space<vmem>>, vector<2x32xf32>,
    %c10_89 = arith.constant 10 : index
    %c0_90 = arith.constant 0 : index
    %253 = vector.load %arg16[%c10_89, %c0_90] : memref<16x128xf32, #tpu.memory_space<vmem>>, vector<2x128xf32>
    %cst_91 = arith.constant dense<0.000000e+00> : vector<2x128xf32>
    %254 = tpu.matmul %251, %162, %cst_91 {dimension_numbers = #tpu.dot_dimension_numbers<[1], [0], [0], [1], [0, 0, 1, 1], [], []>} : vector<2x32xf32>, vector<32x128xf32>, vector<2x128xf32> -> vector<2x128xf32>
    %255 = arith.addf %253, %254 : vector<2x128xf32>
    %256 = arith.negf %255 : vector<2x128xf32>
    %257 = math.exp %256 : vector<2x128xf32>
    %cst_92 = arith.constant 1.000000e+00 : f32
    %258 = vector.broadcast %cst_92 : f32 to vector<2x128xf32>
    %259 = arith.addf %258, %257 : vector<2x128xf32>
    %260 = arith.divf %258, %259 : vector<2x128xf32>
    %261 = math.tanh %255 : vector<2x128xf32>
    %262 = vector.extract_strided_slice %260 {offsets = [0, 0], sizes = [2, 32], strides = [1, 1]} : vector<2x128xf32> to vector<2x32xf32>
    %263 = vector.extract_strided_slice %260 {offsets = [0, 32], sizes = [2, 32], strides = [1, 1]} : vector<2x128xf32> to vector<2x32xf32>
    %264 = vector.extract_strided_slice %261 {offsets = [0, 64], sizes = [2, 32], strides = [1, 1]} : vector<2x128xf32> to vector<2x32xf32>
    %265 = vector.extract_strided_slice %260 {offsets = [0, 96], sizes = [2, 32], strides = [1, 1]} : vector<2x128xf32> to vector<2x32xf32>
    %266 = arith.mulf %263, %249 : vector<2x32xf32>
    %267 = arith.mulf %262, %264 : vector<2x32xf32>
    %268 = arith.addf %266, %267 : vector<2x32xf32>
    %269 = math.tanh %268 : vector<2x32xf32>
    %270 = arith.mulf %265, %269 : vector<2x32xf32>
    %c10_93 = arith.constant 10 : index
    %c0_94 = arith.constant 0 : index
    %271 = vector.load %arg17[%c10_93, %c0_94] : memref<16x32xf32, #tpu.memory_space<vmem>>, vector<2x32xf32>
    tpu.vector_store %arg17[%c10_93, %c0_94], %270 {strides = array<i32>} : memref<16x32xf32, #tpu.memory_space<vmem>>, vector<2x32xf32>,
    %c12_95 = arith.constant 12 : index
    %c0_96 = arith.constant 0 : index
    %272 = vector.load %arg16[%c12_95, %c0_96] : memref<16x128xf32, #tpu.memory_space<vmem>>, vector<2x128xf32>
    %cst_97 = arith.constant dense<0.000000e+00> : vector<2x128xf32>
    %273 = tpu.matmul %270, %162, %cst_97 {dimension_numbers = #tpu.dot_dimension_numbers<[1], [0], [0], [1], [0, 0, 1, 1], [], []>} : vector<2x32xf32>, vector<32x128xf32>, vector<2x128xf32> -> vector<2x128xf32>
    %274 = arith.addf %272, %273 : vector<2x128xf32>
    %275 = arith.negf %274 : vector<2x128xf32>
    %276 = math.exp %275 : vector<2x128xf32>
    %cst_98 = arith.constant 1.000000e+00 : f32
    %277 = vector.broadcast %cst_98 : f32 to vector<2x128xf32>
    %278 = arith.addf %277, %276 : vector<2x128xf32>
    %279 = arith.divf %277, %278 : vector<2x128xf32>
    %280 = math.tanh %274 : vector<2x128xf32>
    %281 = vector.extract_strided_slice %279 {offsets = [0, 0], sizes = [2, 32], strides = [1, 1]} : vector<2x128xf32> to vector<2x32xf32>
    %282 = vector.extract_strided_slice %279 {offsets = [0, 32], sizes = [2, 32], strides = [1, 1]} : vector<2x128xf32> to vector<2x32xf32>
    %283 = vector.extract_strided_slice %280 {offsets = [0, 64], sizes = [2, 32], strides = [1, 1]} : vector<2x128xf32> to vector<2x32xf32>
    %284 = vector.extract_strided_slice %279 {offsets = [0, 96], sizes = [2, 32], strides = [1, 1]} : vector<2x128xf32> to vector<2x32xf32>
    %285 = arith.mulf %282, %268 : vector<2x32xf32>
    %286 = arith.mulf %281, %283 : vector<2x32xf32>
    %287 = arith.addf %285, %286 : vector<2x32xf32>
    %288 = math.tanh %287 : vector<2x32xf32>
    %289 = arith.mulf %284, %288 : vector<2x32xf32>
    %c12_99 = arith.constant 12 : index
    %c0_100 = arith.constant 0 : index
    %290 = vector.load %arg17[%c12_99, %c0_100] : memref<16x32xf32, #tpu.memory_space<vmem>>, vector<2x32xf32>
    tpu.vector_store %arg17[%c12_99, %c0_100], %289 {strides = array<i32>} : memref<16x32xf32, #tpu.memory_space<vmem>>, vector<2x32xf32>,
    %c14_101 = arith.constant 14 : index
    %c0_102 = arith.constant 0 : index
    %291 = vector.load %arg16[%c14_101, %c0_102] : memref<16x128xf32, #tpu.memory_space<vmem>>, vector<2x128xf32>
    %cst_103 = arith.constant dense<0.000000e+00> : vector<2x128xf32>
    %292 = tpu.matmul %289, %162, %cst_103 {dimension_numbers = #tpu.dot_dimension_numbers<[1], [0], [0], [1], [0, 0, 1, 1], [], []>} : vector<2x32xf32>, vector<32x128xf32>, vector<2x128xf32> -> vector<2x128xf32>
    %293 = arith.addf %291, %292 : vector<2x128xf32>
    %294 = arith.negf %293 : vector<2x128xf32>
    %295 = math.exp %294 : vector<2x128xf32>
    %cst_104 = arith.constant 1.000000e+00 : f32
    %296 = vector.broadcast %cst_104 : f32 to vector<2x128xf32>
    %297 = arith.addf %296, %295 : vector<2x128xf32>
    %298 = arith.divf %296, %297 : vector<2x128xf32>
    %299 = math.tanh %293 : vector<2x128xf32>
    %300 = vector.extract_strided_slice %298 {offsets = [0, 0], sizes = [2, 32], strides = [1, 1]} : vector<2x128xf32> to vector<2x32xf32>
    %301 = vector.extract_strided_slice %298 {offsets = [0, 32], sizes = [2, 32], strides = [1, 1]} : vector<2x128xf32> to vector<2x32xf32>
    %302 = vector.extract_strided_slice %299 {offsets = [0, 64], sizes = [2, 32], strides = [1, 1]} : vector<2x128xf32> to vector<2x32xf32>
    %303 = vector.extract_strided_slice %298 {offsets = [0, 96], sizes = [2, 32], strides = [1, 1]} : vector<2x128xf32> to vector<2x32xf32>
    %304 = arith.mulf %301, %287 : vector<2x32xf32>
    %305 = arith.mulf %300, %302 : vector<2x32xf32>
    %306 = arith.addf %304, %305 : vector<2x32xf32>
    %307 = math.tanh %306 : vector<2x32xf32>
    %308 = arith.mulf %303, %307 : vector<2x32xf32>
    %c14_105 = arith.constant 14 : index
    %c0_106 = arith.constant 0 : index
    %309 = vector.load %arg17[%c14_105, %c0_106] : memref<16x32xf32, #tpu.memory_space<vmem>>, vector<2x32xf32>
    tpu.vector_store %arg17[%c14_105, %c0_106], %308 {strides = array<i32>} : memref<16x32xf32, #tpu.memory_space<vmem>>, vector<2x32xf32>,
    %c0_107 = arith.constant 0 : index
    %c0_108 = arith.constant 0 : index
    %310 = vector.load %arg17[%c0_107, %c0_108] : memref<16x32xf32, #tpu.memory_space<vmem>>, vector<16x32xf32>
    %c0_109 = arith.constant 0 : index
    %c0_110 = arith.constant 0 : index
    %311 = vector.load %arg7[%c0_109, %c0_110] : memref<32x128xf32, #tpu.memory_space<vmem>>, vector<32x128xf32>
    %cst_111 = arith.constant dense<0.000000e+00> : vector<16x128xf32>
    %312 = tpu.matmul %310, %311, %cst_111 {dimension_numbers = #tpu.dot_dimension_numbers<[1], [0], [0], [1], [0, 0, 1, 1], [], []>} : vector<16x32xf32>, vector<32x128xf32>, vector<16x128xf32> -> vector<16x128xf32>
    %c0_112 = arith.constant 0 : index
    %c0_113 = arith.constant 0 : index
    %313 = vector.load %arg9[%c0_112, %c0_113] : memref<1x128xf32, #tpu.memory_space<vmem>>, vector<1x128xf32>
    %314 = vector.broadcast %313 : vector<1x128xf32> to vector<16x128xf32>
    %315 = arith.addf %312, %314 : vector<16x128xf32>
    %c0_114 = arith.constant 0 : index
    %c0_115 = arith.constant 0 : index
    %316 = vector.load %arg16[%c0_114, %c0_115] : memref<16x128xf32, #tpu.memory_space<vmem>>, vector<16x128xf32>
    tpu.vector_store %arg16[%c0_114, %c0_115], %315 {strides = array<i32>} : memref<16x128xf32, #tpu.memory_space<vmem>>, vector<16x128xf32>,
    %c0_116 = arith.constant 0 : index
    %c0_117 = arith.constant 0 : index
    %317 = vector.load %arg8[%c0_116, %c0_117] : memref<32x128xf32, #tpu.memory_space<vmem>>, vector<32x128xf32>
    %c0_118 = arith.constant 0 : index
    %c0_119 = arith.constant 0 : index
    %318 = vector.load %arg16[%c0_118, %c0_119] : memref<16x128xf32, #tpu.memory_space<vmem>>, vector<2x128xf32>
    %319 = arith.negf %318 : vector<2x128xf32>
    %320 = math.exp %319 : vector<2x128xf32>
    %cst_120 = arith.constant 1.000000e+00 : f32
    %321 = vector.broadcast %cst_120 : f32 to vector<2x128xf32>
    %322 = arith.addf %321, %320 : vector<2x128xf32>
    %323 = arith.divf %321, %322 : vector<2x128xf32>
    %324 = math.tanh %318 : vector<2x128xf32>
    %325 = vector.extract_strided_slice %323 {offsets = [0, 0], sizes = [2, 32], strides = [1, 1]} : vector<2x128xf32> to vector<2x32xf32>
    %326 = vector.extract_strided_slice %324 {offsets = [0, 64], sizes = [2, 32], strides = [1, 1]} : vector<2x128xf32> to vector<2x32xf32>
    %327 = vector.extract_strided_slice %323 {offsets = [0, 96], sizes = [2, 32], strides = [1, 1]} : vector<2x128xf32> to vector<2x32xf32>
    %328 = arith.mulf %325, %326 : vector<2x32xf32>
    %329 = math.tanh %328 : vector<2x32xf32>
    %330 = arith.mulf %327, %329 : vector<2x32xf32>
    %c0_121 = arith.constant 0 : index
    %c0_122 = arith.constant 0 : index
    %331 = vector.load %arg17[%c0_121, %c0_122] : memref<16x32xf32, #tpu.memory_space<vmem>>, vector<2x32xf32>
    tpu.vector_store %arg17[%c0_121, %c0_122], %330 {strides = array<i32>} : memref<16x32xf32, #tpu.memory_space<vmem>>, vector<2x32xf32>,
    %c2_123 = arith.constant 2 : index
    %c0_124 = arith.constant 0 : index
    %332 = vector.load %arg16[%c2_123, %c0_124] : memref<16x128xf32, #tpu.memory_space<vmem>>, vector<2x128xf32>
    %cst_125 = arith.constant dense<0.000000e+00> : vector<2x128xf32>
    %333 = tpu.matmul %330, %317, %cst_125 {dimension_numbers = #tpu.dot_dimension_numbers<[1], [0], [0], [1], [0, 0, 1, 1], [], []>} : vector<2x32xf32>, vector<32x128xf32>, vector<2x128xf32> -> vector<2x128xf32>
    %334 = arith.addf %332, %333 : vector<2x128xf32>
    %335 = arith.negf %334 : vector<2x128xf32>
    %336 = math.exp %335 : vector<2x128xf32>
    %cst_126 = arith.constant 1.000000e+00 : f32
    %337 = vector.broadcast %cst_126 : f32 to vector<2x128xf32>
    %338 = arith.addf %337, %336 : vector<2x128xf32>
    %339 = arith.divf %337, %338 : vector<2x128xf32>
    %340 = math.tanh %334 : vector<2x128xf32>
    %341 = vector.extract_strided_slice %339 {offsets = [0, 0], sizes = [2, 32], strides = [1, 1]} : vector<2x128xf32> to vector<2x32xf32>
    %342 = vector.extract_strided_slice %339 {offsets = [0, 32], sizes = [2, 32], strides = [1, 1]} : vector<2x128xf32> to vector<2x32xf32>
    %343 = vector.extract_strided_slice %340 {offsets = [0, 64], sizes = [2, 32], strides = [1, 1]} : vector<2x128xf32> to vector<2x32xf32>
    %344 = vector.extract_strided_slice %339 {offsets = [0, 96], sizes = [2, 32], strides = [1, 1]} : vector<2x128xf32> to vector<2x32xf32>
    %345 = arith.mulf %342, %328 : vector<2x32xf32>
    %346 = arith.mulf %341, %343 : vector<2x32xf32>
    %347 = arith.addf %345, %346 : vector<2x32xf32>
    %348 = math.tanh %347 : vector<2x32xf32>
    %349 = arith.mulf %344, %348 : vector<2x32xf32>
    %c2_127 = arith.constant 2 : index
    %c0_128 = arith.constant 0 : index
    %350 = vector.load %arg17[%c2_127, %c0_128] : memref<16x32xf32, #tpu.memory_space<vmem>>, vector<2x32xf32>
    tpu.vector_store %arg17[%c2_127, %c0_128], %349 {strides = array<i32>} : memref<16x32xf32, #tpu.memory_space<vmem>>, vector<2x32xf32>,
    %c4_129 = arith.constant 4 : index
    %c0_130 = arith.constant 0 : index
    %351 = vector.load %arg16[%c4_129, %c0_130] : memref<16x128xf32, #tpu.memory_space<vmem>>, vector<2x128xf32>
    %cst_131 = arith.constant dense<0.000000e+00> : vector<2x128xf32>
    %352 = tpu.matmul %349, %317, %cst_131 {dimension_numbers = #tpu.dot_dimension_numbers<[1], [0], [0], [1], [0, 0, 1, 1], [], []>} : vector<2x32xf32>, vector<32x128xf32>, vector<2x128xf32> -> vector<2x128xf32>
    %353 = arith.addf %351, %352 : vector<2x128xf32>
    %354 = arith.negf %353 : vector<2x128xf32>
    %355 = math.exp %354 : vector<2x128xf32>
    %cst_132 = arith.constant 1.000000e+00 : f32
    %356 = vector.broadcast %cst_132 : f32 to vector<2x128xf32>
    %357 = arith.addf %356, %355 : vector<2x128xf32>
    %358 = arith.divf %356, %357 : vector<2x128xf32>
    %359 = math.tanh %353 : vector<2x128xf32>
    %360 = vector.extract_strided_slice %358 {offsets = [0, 0], sizes = [2, 32], strides = [1, 1]} : vector<2x128xf32> to vector<2x32xf32>
    %361 = vector.extract_strided_slice %358 {offsets = [0, 32], sizes = [2, 32], strides = [1, 1]} : vector<2x128xf32> to vector<2x32xf32>
    %362 = vector.extract_strided_slice %359 {offsets = [0, 64], sizes = [2, 32], strides = [1, 1]} : vector<2x128xf32> to vector<2x32xf32>
    %363 = vector.extract_strided_slice %358 {offsets = [0, 96], sizes = [2, 32], strides = [1, 1]} : vector<2x128xf32> to vector<2x32xf32>
    %364 = arith.mulf %361, %347 : vector<2x32xf32>
    %365 = arith.mulf %360, %362 : vector<2x32xf32>
    %366 = arith.addf %364, %365 : vector<2x32xf32>
    %367 = math.tanh %366 : vector<2x32xf32>
    %368 = arith.mulf %363, %367 : vector<2x32xf32>
    %c4_133 = arith.constant 4 : index
    %c0_134 = arith.constant 0 : index
    %369 = vector.load %arg17[%c4_133, %c0_134] : memref<16x32xf32, #tpu.memory_space<vmem>>, vector<2x32xf32>
    tpu.vector_store %arg17[%c4_133, %c0_134], %368 {strides = array<i32>} : memref<16x32xf32, #tpu.memory_space<vmem>>, vector<2x32xf32>,
    %c6_135 = arith.constant 6 : index
    %c0_136 = arith.constant 0 : index
    %370 = vector.load %arg16[%c6_135, %c0_136] : memref<16x128xf32, #tpu.memory_space<vmem>>, vector<2x128xf32>
    %cst_137 = arith.constant dense<0.000000e+00> : vector<2x128xf32>
    %371 = tpu.matmul %368, %317, %cst_137 {dimension_numbers = #tpu.dot_dimension_numbers<[1], [0], [0], [1], [0, 0, 1, 1], [], []>} : vector<2x32xf32>, vector<32x128xf32>, vector<2x128xf32> -> vector<2x128xf32>
    %372 = arith.addf %370, %371 : vector<2x128xf32>
    %373 = arith.negf %372 : vector<2x128xf32>
    %374 = math.exp %373 : vector<2x128xf32>
    %cst_138 = arith.constant 1.000000e+00 : f32
    %375 = vector.broadcast %cst_138 : f32 to vector<2x128xf32>
    %376 = arith.addf %375, %374 : vector<2x128xf32>
    %377 = arith.divf %375, %376 : vector<2x128xf32>
    %378 = math.tanh %372 : vector<2x128xf32>
    %379 = vector.extract_strided_slice %377 {offsets = [0, 0], sizes = [2, 32], strides = [1, 1]} : vector<2x128xf32> to vector<2x32xf32>
    %380 = vector.extract_strided_slice %377 {offsets = [0, 32], sizes = [2, 32], strides = [1, 1]} : vector<2x128xf32> to vector<2x32xf32>
    %381 = vector.extract_strided_slice %378 {offsets = [0, 64], sizes = [2, 32], strides = [1, 1]} : vector<2x128xf32> to vector<2x32xf32>
    %382 = vector.extract_strided_slice %377 {offsets = [0, 96], sizes = [2, 32], strides = [1, 1]} : vector<2x128xf32> to vector<2x32xf32>
    %383 = arith.mulf %380, %366 : vector<2x32xf32>
    %384 = arith.mulf %379, %381 : vector<2x32xf32>
    %385 = arith.addf %383, %384 : vector<2x32xf32>
    %386 = math.tanh %385 : vector<2x32xf32>
    %387 = arith.mulf %382, %386 : vector<2x32xf32>
    %c6_139 = arith.constant 6 : index
    %c0_140 = arith.constant 0 : index
    %388 = vector.load %arg17[%c6_139, %c0_140] : memref<16x32xf32, #tpu.memory_space<vmem>>, vector<2x32xf32>
    tpu.vector_store %arg17[%c6_139, %c0_140], %387 {strides = array<i32>} : memref<16x32xf32, #tpu.memory_space<vmem>>, vector<2x32xf32>,
    %c8_141 = arith.constant 8 : index
    %c0_142 = arith.constant 0 : index
    %389 = vector.load %arg16[%c8_141, %c0_142] : memref<16x128xf32, #tpu.memory_space<vmem>>, vector<2x128xf32>
    %cst_143 = arith.constant dense<0.000000e+00> : vector<2x128xf32>
    %390 = tpu.matmul %387, %317, %cst_143 {dimension_numbers = #tpu.dot_dimension_numbers<[1], [0], [0], [1], [0, 0, 1, 1], [], []>} : vector<2x32xf32>, vector<32x128xf32>, vector<2x128xf32> -> vector<2x128xf32>
    %391 = arith.addf %389, %390 : vector<2x128xf32>
    %392 = arith.negf %391 : vector<2x128xf32>
    %393 = math.exp %392 : vector<2x128xf32>
    %cst_144 = arith.constant 1.000000e+00 : f32
    %394 = vector.broadcast %cst_144 : f32 to vector<2x128xf32>
    %395 = arith.addf %394, %393 : vector<2x128xf32>
    %396 = arith.divf %394, %395 : vector<2x128xf32>
    %397 = math.tanh %391 : vector<2x128xf32>
    %398 = vector.extract_strided_slice %396 {offsets = [0, 0], sizes = [2, 32], strides = [1, 1]} : vector<2x128xf32> to vector<2x32xf32>
    %399 = vector.extract_strided_slice %396 {offsets = [0, 32], sizes = [2, 32], strides = [1, 1]} : vector<2x128xf32> to vector<2x32xf32>
    %400 = vector.extract_strided_slice %397 {offsets = [0, 64], sizes = [2, 32], strides = [1, 1]} : vector<2x128xf32> to vector<2x32xf32>
    %401 = vector.extract_strided_slice %396 {offsets = [0, 96], sizes = [2, 32], strides = [1, 1]} : vector<2x128xf32> to vector<2x32xf32>
    %402 = arith.mulf %399, %385 : vector<2x32xf32>
    %403 = arith.mulf %398, %400 : vector<2x32xf32>
    %404 = arith.addf %402, %403 : vector<2x32xf32>
    %405 = math.tanh %404 : vector<2x32xf32>
    %406 = arith.mulf %401, %405 : vector<2x32xf32>
    %c8_145 = arith.constant 8 : index
    %c0_146 = arith.constant 0 : index
    %407 = vector.load %arg17[%c8_145, %c0_146] : memref<16x32xf32, #tpu.memory_space<vmem>>, vector<2x32xf32>
    tpu.vector_store %arg17[%c8_145, %c0_146], %406 {strides = array<i32>} : memref<16x32xf32, #tpu.memory_space<vmem>>, vector<2x32xf32>,
    %c10_147 = arith.constant 10 : index
    %c0_148 = arith.constant 0 : index
    %408 = vector.load %arg16[%c10_147, %c0_148] : memref<16x128xf32, #tpu.memory_space<vmem>>, vector<2x128xf32>
    %cst_149 = arith.constant dense<0.000000e+00> : vector<2x128xf32>
    %409 = tpu.matmul %406, %317, %cst_149 {dimension_numbers = #tpu.dot_dimension_numbers<[1], [0], [0], [1], [0, 0, 1, 1], [], []>} : vector<2x32xf32>, vector<32x128xf32>, vector<2x128xf32> -> vector<2x128xf32>
    %410 = arith.addf %408, %409 : vector<2x128xf32>
    %411 = arith.negf %410 : vector<2x128xf32>
    %412 = math.exp %411 : vector<2x128xf32>
    %cst_150 = arith.constant 1.000000e+00 : f32
    %413 = vector.broadcast %cst_150 : f32 to vector<2x128xf32>
    %414 = arith.addf %413, %412 : vector<2x128xf32>
    %415 = arith.divf %413, %414 : vector<2x128xf32>
    %416 = math.tanh %410 : vector<2x128xf32>
    %417 = vector.extract_strided_slice %415 {offsets = [0, 0], sizes = [2, 32], strides = [1, 1]} : vector<2x128xf32> to vector<2x32xf32>
    %418 = vector.extract_strided_slice %415 {offsets = [0, 32], sizes = [2, 32], strides = [1, 1]} : vector<2x128xf32> to vector<2x32xf32>
    %419 = vector.extract_strided_slice %416 {offsets = [0, 64], sizes = [2, 32], strides = [1, 1]} : vector<2x128xf32> to vector<2x32xf32>
    %420 = vector.extract_strided_slice %415 {offsets = [0, 96], sizes = [2, 32], strides = [1, 1]} : vector<2x128xf32> to vector<2x32xf32>
    %421 = arith.mulf %418, %404 : vector<2x32xf32>
    %422 = arith.mulf %417, %419 : vector<2x32xf32>
    %423 = arith.addf %421, %422 : vector<2x32xf32>
    %424 = math.tanh %423 : vector<2x32xf32>
    %425 = arith.mulf %420, %424 : vector<2x32xf32>
    %c10_151 = arith.constant 10 : index
    %c0_152 = arith.constant 0 : index
    %426 = vector.load %arg17[%c10_151, %c0_152] : memref<16x32xf32, #tpu.memory_space<vmem>>, vector<2x32xf32>
    tpu.vector_store %arg17[%c10_151, %c0_152], %425 {strides = array<i32>} : memref<16x32xf32, #tpu.memory_space<vmem>>, vector<2x32xf32>,
    %c12_153 = arith.constant 12 : index
    %c0_154 = arith.constant 0 : index
    %427 = vector.load %arg16[%c12_153, %c0_154] : memref<16x128xf32, #tpu.memory_space<vmem>>, vector<2x128xf32>
    %cst_155 = arith.constant dense<0.000000e+00> : vector<2x128xf32>
    %428 = tpu.matmul %425, %317, %cst_155 {dimension_numbers = #tpu.dot_dimension_numbers<[1], [0], [0], [1], [0, 0, 1, 1], [], []>} : vector<2x32xf32>, vector<32x128xf32>, vector<2x128xf32> -> vector<2x128xf32>
    %429 = arith.addf %427, %428 : vector<2x128xf32>
    %430 = arith.negf %429 : vector<2x128xf32>
    %431 = math.exp %430 : vector<2x128xf32>
    %cst_156 = arith.constant 1.000000e+00 : f32
    %432 = vector.broadcast %cst_156 : f32 to vector<2x128xf32>
    %433 = arith.addf %432, %431 : vector<2x128xf32>
    %434 = arith.divf %432, %433 : vector<2x128xf32>
    %435 = math.tanh %429 : vector<2x128xf32>
    %436 = vector.extract_strided_slice %434 {offsets = [0, 0], sizes = [2, 32], strides = [1, 1]} : vector<2x128xf32> to vector<2x32xf32>
    %437 = vector.extract_strided_slice %434 {offsets = [0, 32], sizes = [2, 32], strides = [1, 1]} : vector<2x128xf32> to vector<2x32xf32>
    %438 = vector.extract_strided_slice %435 {offsets = [0, 64], sizes = [2, 32], strides = [1, 1]} : vector<2x128xf32> to vector<2x32xf32>
    %439 = vector.extract_strided_slice %434 {offsets = [0, 96], sizes = [2, 32], strides = [1, 1]} : vector<2x128xf32> to vector<2x32xf32>
    %440 = arith.mulf %437, %423 : vector<2x32xf32>
    %441 = arith.mulf %436, %438 : vector<2x32xf32>
    %442 = arith.addf %440, %441 : vector<2x32xf32>
    %443 = math.tanh %442 : vector<2x32xf32>
    %444 = arith.mulf %439, %443 : vector<2x32xf32>
    %c12_157 = arith.constant 12 : index
    %c0_158 = arith.constant 0 : index
    %445 = vector.load %arg17[%c12_157, %c0_158] : memref<16x32xf32, #tpu.memory_space<vmem>>, vector<2x32xf32>
    tpu.vector_store %arg17[%c12_157, %c0_158], %444 {strides = array<i32>} : memref<16x32xf32, #tpu.memory_space<vmem>>, vector<2x32xf32>,
    %c14_159 = arith.constant 14 : index
    %c0_160 = arith.constant 0 : index
    %446 = vector.load %arg16[%c14_159, %c0_160] : memref<16x128xf32, #tpu.memory_space<vmem>>, vector<2x128xf32>
    %cst_161 = arith.constant dense<0.000000e+00> : vector<2x128xf32>
    %447 = tpu.matmul %444, %317, %cst_161 {dimension_numbers = #tpu.dot_dimension_numbers<[1], [0], [0], [1], [0, 0, 1, 1], [], []>} : vector<2x32xf32>, vector<32x128xf32>, vector<2x128xf32> -> vector<2x128xf32>
    %448 = arith.addf %446, %447 : vector<2x128xf32>
    %449 = arith.negf %448 : vector<2x128xf32>
    %450 = math.exp %449 : vector<2x128xf32>
    %cst_162 = arith.constant 1.000000e+00 : f32
    %451 = vector.broadcast %cst_162 : f32 to vector<2x128xf32>
    %452 = arith.addf %451, %450 : vector<2x128xf32>
    %453 = arith.divf %451, %452 : vector<2x128xf32>
    %454 = math.tanh %448 : vector<2x128xf32>
    %455 = vector.extract_strided_slice %453 {offsets = [0, 0], sizes = [2, 32], strides = [1, 1]} : vector<2x128xf32> to vector<2x32xf32>
    %456 = vector.extract_strided_slice %453 {offsets = [0, 32], sizes = [2, 32], strides = [1, 1]} : vector<2x128xf32> to vector<2x32xf32>
    %457 = vector.extract_strided_slice %454 {offsets = [0, 64], sizes = [2, 32], strides = [1, 1]} : vector<2x128xf32> to vector<2x32xf32>
    %458 = vector.extract_strided_slice %453 {offsets = [0, 96], sizes = [2, 32], strides = [1, 1]} : vector<2x128xf32> to vector<2x32xf32>
    %459 = arith.mulf %456, %442 : vector<2x32xf32>
    %460 = arith.mulf %455, %457 : vector<2x32xf32>
    %461 = arith.addf %459, %460 : vector<2x32xf32>
    %462 = math.tanh %461 : vector<2x32xf32>
    %463 = arith.mulf %458, %462 : vector<2x32xf32>
    %c14_163 = arith.constant 14 : index
    %c0_164 = arith.constant 0 : index
    %464 = vector.load %arg17[%c14_163, %c0_164] : memref<16x32xf32, #tpu.memory_space<vmem>>, vector<2x32xf32>
    tpu.vector_store %arg17[%c14_163, %c0_164], %463 {strides = array<i32>} : memref<16x32xf32, #tpu.memory_space<vmem>>, vector<2x32xf32>,
    %c0_165 = arith.constant 0 : index
    %c0_166 = arith.constant 0 : index
    %465 = vector.load %arg17[%c0_165, %c0_166] : memref<16x32xf32, #tpu.memory_space<vmem>>, vector<16x32xf32>
    %c0_167 = arith.constant 0 : index
    %c0_168 = arith.constant 0 : index
    %466 = vector.load %arg10[%c0_167, %c0_168] : memref<32x128xf32, #tpu.memory_space<vmem>>, vector<32x128xf32>
    %cst_169 = arith.constant dense<0.000000e+00> : vector<16x128xf32>
    %467 = tpu.matmul %465, %466, %cst_169 {dimension_numbers = #tpu.dot_dimension_numbers<[1], [0], [0], [1], [0, 0, 1, 1], [], []>} : vector<16x32xf32>, vector<32x128xf32>, vector<16x128xf32> -> vector<16x128xf32>
    %c0_170 = arith.constant 0 : index
    %c0_171 = arith.constant 0 : index
    %468 = vector.load %arg12[%c0_170, %c0_171] : memref<1x128xf32, #tpu.memory_space<vmem>>, vector<1x128xf32>
    %469 = vector.broadcast %468 : vector<1x128xf32> to vector<16x128xf32>
    %470 = arith.addf %467, %469 : vector<16x128xf32>
    %c0_172 = arith.constant 0 : index
    %c0_173 = arith.constant 0 : index
    %471 = vector.load %arg16[%c0_172, %c0_173] : memref<16x128xf32, #tpu.memory_space<vmem>>, vector<16x128xf32>
    tpu.vector_store %arg16[%c0_172, %c0_173], %470 {strides = array<i32>} : memref<16x128xf32, #tpu.memory_space<vmem>>, vector<16x128xf32>,
    %c0_174 = arith.constant 0 : index
    %c0_175 = arith.constant 0 : index
    %472 = vector.load %arg11[%c0_174, %c0_175] : memref<32x128xf32, #tpu.memory_space<vmem>>, vector<32x128xf32>
    %c0_176 = arith.constant 0 : index
    %c0_177 = arith.constant 0 : index
    %473 = vector.load %arg16[%c0_176, %c0_177] : memref<16x128xf32, #tpu.memory_space<vmem>>, vector<2x128xf32>
    %474 = arith.negf %473 : vector<2x128xf32>
    %475 = math.exp %474 : vector<2x128xf32>
    %cst_178 = arith.constant 1.000000e+00 : f32
    %476 = vector.broadcast %cst_178 : f32 to vector<2x128xf32>
    %477 = arith.addf %476, %475 : vector<2x128xf32>
    %478 = arith.divf %476, %477 : vector<2x128xf32>
    %479 = math.tanh %473 : vector<2x128xf32>
    %480 = vector.extract_strided_slice %478 {offsets = [0, 0], sizes = [2, 32], strides = [1, 1]} : vector<2x128xf32> to vector<2x32xf32>
    %481 = vector.extract_strided_slice %479 {offsets = [0, 64], sizes = [2, 32], strides = [1, 1]} : vector<2x128xf32> to vector<2x32xf32>
    %482 = vector.extract_strided_slice %478 {offsets = [0, 96], sizes = [2, 32], strides = [1, 1]} : vector<2x128xf32> to vector<2x32xf32>
    %483 = arith.mulf %480, %481 : vector<2x32xf32>
    %484 = math.tanh %483 : vector<2x32xf32>
    %485 = arith.mulf %482, %484 : vector<2x32xf32>
    %c0_179 = arith.constant 0 : index
    %c0_180 = arith.constant 0 : index
    %486 = vector.load %arg17[%c0_179, %c0_180] : memref<16x32xf32, #tpu.memory_space<vmem>>, vector<2x32xf32>
    tpu.vector_store %arg17[%c0_179, %c0_180], %485 {strides = array<i32>} : memref<16x32xf32, #tpu.memory_space<vmem>>, vector<2x32xf32>,
    %c2_181 = arith.constant 2 : index
    %c0_182 = arith.constant 0 : index
    %487 = vector.load %arg16[%c2_181, %c0_182] : memref<16x128xf32, #tpu.memory_space<vmem>>, vector<2x128xf32>
    %cst_183 = arith.constant dense<0.000000e+00> : vector<2x128xf32>
    %488 = tpu.matmul %485, %472, %cst_183 {dimension_numbers = #tpu.dot_dimension_numbers<[1], [0], [0], [1], [0, 0, 1, 1], [], []>} : vector<2x32xf32>, vector<32x128xf32>, vector<2x128xf32> -> vector<2x128xf32>
    %489 = arith.addf %487, %488 : vector<2x128xf32>
    %490 = arith.negf %489 : vector<2x128xf32>
    %491 = math.exp %490 : vector<2x128xf32>
    %cst_184 = arith.constant 1.000000e+00 : f32
    %492 = vector.broadcast %cst_184 : f32 to vector<2x128xf32>
    %493 = arith.addf %492, %491 : vector<2x128xf32>
    %494 = arith.divf %492, %493 : vector<2x128xf32>
    %495 = math.tanh %489 : vector<2x128xf32>
    %496 = vector.extract_strided_slice %494 {offsets = [0, 0], sizes = [2, 32], strides = [1, 1]} : vector<2x128xf32> to vector<2x32xf32>
    %497 = vector.extract_strided_slice %494 {offsets = [0, 32], sizes = [2, 32], strides = [1, 1]} : vector<2x128xf32> to vector<2x32xf32>
    %498 = vector.extract_strided_slice %495 {offsets = [0, 64], sizes = [2, 32], strides = [1, 1]} : vector<2x128xf32> to vector<2x32xf32>
    %499 = vector.extract_strided_slice %494 {offsets = [0, 96], sizes = [2, 32], strides = [1, 1]} : vector<2x128xf32> to vector<2x32xf32>
    %500 = arith.mulf %497, %483 : vector<2x32xf32>
    %501 = arith.mulf %496, %498 : vector<2x32xf32>
    %502 = arith.addf %500, %501 : vector<2x32xf32>
    %503 = math.tanh %502 : vector<2x32xf32>
    %504 = arith.mulf %499, %503 : vector<2x32xf32>
    %c2_185 = arith.constant 2 : index
    %c0_186 = arith.constant 0 : index
    %505 = vector.load %arg17[%c2_185, %c0_186] : memref<16x32xf32, #tpu.memory_space<vmem>>, vector<2x32xf32>
    tpu.vector_store %arg17[%c2_185, %c0_186], %504 {strides = array<i32>} : memref<16x32xf32, #tpu.memory_space<vmem>>, vector<2x32xf32>,
    %c4_187 = arith.constant 4 : index
    %c0_188 = arith.constant 0 : index
    %506 = vector.load %arg16[%c4_187, %c0_188] : memref<16x128xf32, #tpu.memory_space<vmem>>, vector<2x128xf32>
    %cst_189 = arith.constant dense<0.000000e+00> : vector<2x128xf32>
    %507 = tpu.matmul %504, %472, %cst_189 {dimension_numbers = #tpu.dot_dimension_numbers<[1], [0], [0], [1], [0, 0, 1, 1], [], []>} : vector<2x32xf32>, vector<32x128xf32>, vector<2x128xf32> -> vector<2x128xf32>
    %508 = arith.addf %506, %507 : vector<2x128xf32>
    %509 = arith.negf %508 : vector<2x128xf32>
    %510 = math.exp %509 : vector<2x128xf32>
    %cst_190 = arith.constant 1.000000e+00 : f32
    %511 = vector.broadcast %cst_190 : f32 to vector<2x128xf32>
    %512 = arith.addf %511, %510 : vector<2x128xf32>
    %513 = arith.divf %511, %512 : vector<2x128xf32>
    %514 = math.tanh %508 : vector<2x128xf32>
    %515 = vector.extract_strided_slice %513 {offsets = [0, 0], sizes = [2, 32], strides = [1, 1]} : vector<2x128xf32> to vector<2x32xf32>
    %516 = vector.extract_strided_slice %513 {offsets = [0, 32], sizes = [2, 32], strides = [1, 1]} : vector<2x128xf32> to vector<2x32xf32>
    %517 = vector.extract_strided_slice %514 {offsets = [0, 64], sizes = [2, 32], strides = [1, 1]} : vector<2x128xf32> to vector<2x32xf32>
    %518 = vector.extract_strided_slice %513 {offsets = [0, 96], sizes = [2, 32], strides = [1, 1]} : vector<2x128xf32> to vector<2x32xf32>
    %519 = arith.mulf %516, %502 : vector<2x32xf32>
    %520 = arith.mulf %515, %517 : vector<2x32xf32>
    %521 = arith.addf %519, %520 : vector<2x32xf32>
    %522 = math.tanh %521 : vector<2x32xf32>
    %523 = arith.mulf %518, %522 : vector<2x32xf32>
    %c4_191 = arith.constant 4 : index
    %c0_192 = arith.constant 0 : index
    %524 = vector.load %arg17[%c4_191, %c0_192] : memref<16x32xf32, #tpu.memory_space<vmem>>, vector<2x32xf32>
    tpu.vector_store %arg17[%c4_191, %c0_192], %523 {strides = array<i32>} : memref<16x32xf32, #tpu.memory_space<vmem>>, vector<2x32xf32>,
    %c6_193 = arith.constant 6 : index
    %c0_194 = arith.constant 0 : index
    %525 = vector.load %arg16[%c6_193, %c0_194] : memref<16x128xf32, #tpu.memory_space<vmem>>, vector<2x128xf32>
    %cst_195 = arith.constant dense<0.000000e+00> : vector<2x128xf32>
    %526 = tpu.matmul %523, %472, %cst_195 {dimension_numbers = #tpu.dot_dimension_numbers<[1], [0], [0], [1], [0, 0, 1, 1], [], []>} : vector<2x32xf32>, vector<32x128xf32>, vector<2x128xf32> -> vector<2x128xf32>
    %527 = arith.addf %525, %526 : vector<2x128xf32>
    %528 = arith.negf %527 : vector<2x128xf32>
    %529 = math.exp %528 : vector<2x128xf32>
    %cst_196 = arith.constant 1.000000e+00 : f32
    %530 = vector.broadcast %cst_196 : f32 to vector<2x128xf32>
    %531 = arith.addf %530, %529 : vector<2x128xf32>
    %532 = arith.divf %530, %531 : vector<2x128xf32>
    %533 = math.tanh %527 : vector<2x128xf32>
    %534 = vector.extract_strided_slice %532 {offsets = [0, 0], sizes = [2, 32], strides = [1, 1]} : vector<2x128xf32> to vector<2x32xf32>
    %535 = vector.extract_strided_slice %532 {offsets = [0, 32], sizes = [2, 32], strides = [1, 1]} : vector<2x128xf32> to vector<2x32xf32>
    %536 = vector.extract_strided_slice %533 {offsets = [0, 64], sizes = [2, 32], strides = [1, 1]} : vector<2x128xf32> to vector<2x32xf32>
    %537 = vector.extract_strided_slice %532 {offsets = [0, 96], sizes = [2, 32], strides = [1, 1]} : vector<2x128xf32> to vector<2x32xf32>
    %538 = arith.mulf %535, %521 : vector<2x32xf32>
    %539 = arith.mulf %534, %536 : vector<2x32xf32>
    %540 = arith.addf %538, %539 : vector<2x32xf32>
    %541 = math.tanh %540 : vector<2x32xf32>
    %542 = arith.mulf %537, %541 : vector<2x32xf32>
    %c6_197 = arith.constant 6 : index
    %c0_198 = arith.constant 0 : index
    %543 = vector.load %arg17[%c6_197, %c0_198] : memref<16x32xf32, #tpu.memory_space<vmem>>, vector<2x32xf32>
    tpu.vector_store %arg17[%c6_197, %c0_198], %542 {strides = array<i32>} : memref<16x32xf32, #tpu.memory_space<vmem>>, vector<2x32xf32>,
    %c8_199 = arith.constant 8 : index
    %c0_200 = arith.constant 0 : index
    %544 = vector.load %arg16[%c8_199, %c0_200] : memref<16x128xf32, #tpu.memory_space<vmem>>, vector<2x128xf32>
    %cst_201 = arith.constant dense<0.000000e+00> : vector<2x128xf32>
    %545 = tpu.matmul %542, %472, %cst_201 {dimension_numbers = #tpu.dot_dimension_numbers<[1], [0], [0], [1], [0, 0, 1, 1], [], []>} : vector<2x32xf32>, vector<32x128xf32>, vector<2x128xf32> -> vector<2x128xf32>
    %546 = arith.addf %544, %545 : vector<2x128xf32>
    %547 = arith.negf %546 : vector<2x128xf32>
    %548 = math.exp %547 : vector<2x128xf32>
    %cst_202 = arith.constant 1.000000e+00 : f32
    %549 = vector.broadcast %cst_202 : f32 to vector<2x128xf32>
    %550 = arith.addf %549, %548 : vector<2x128xf32>
    %551 = arith.divf %549, %550 : vector<2x128xf32>
    %552 = math.tanh %546 : vector<2x128xf32>
    %553 = vector.extract_strided_slice %551 {offsets = [0, 0], sizes = [2, 32], strides = [1, 1]} : vector<2x128xf32> to vector<2x32xf32>
    %554 = vector.extract_strided_slice %551 {offsets = [0, 32], sizes = [2, 32], strides = [1, 1]} : vector<2x128xf32> to vector<2x32xf32>
    %555 = vector.extract_strided_slice %552 {offsets = [0, 64], sizes = [2, 32], strides = [1, 1]} : vector<2x128xf32> to vector<2x32xf32>
    %556 = vector.extract_strided_slice %551 {offsets = [0, 96], sizes = [2, 32], strides = [1, 1]} : vector<2x128xf32> to vector<2x32xf32>
    %557 = arith.mulf %554, %540 : vector<2x32xf32>
    %558 = arith.mulf %553, %555 : vector<2x32xf32>
    %559 = arith.addf %557, %558 : vector<2x32xf32>
    %560 = math.tanh %559 : vector<2x32xf32>
    %561 = arith.mulf %556, %560 : vector<2x32xf32>
    %c8_203 = arith.constant 8 : index
    %c0_204 = arith.constant 0 : index
    %562 = vector.load %arg17[%c8_203, %c0_204] : memref<16x32xf32, #tpu.memory_space<vmem>>, vector<2x32xf32>
    tpu.vector_store %arg17[%c8_203, %c0_204], %561 {strides = array<i32>} : memref<16x32xf32, #tpu.memory_space<vmem>>, vector<2x32xf32>,
    %c10_205 = arith.constant 10 : index
    %c0_206 = arith.constant 0 : index
    %563 = vector.load %arg16[%c10_205, %c0_206] : memref<16x128xf32, #tpu.memory_space<vmem>>, vector<2x128xf32>
    %cst_207 = arith.constant dense<0.000000e+00> : vector<2x128xf32>
    %564 = tpu.matmul %561, %472, %cst_207 {dimension_numbers = #tpu.dot_dimension_numbers<[1], [0], [0], [1], [0, 0, 1, 1], [], []>} : vector<2x32xf32>, vector<32x128xf32>, vector<2x128xf32> -> vector<2x128xf32>
    %565 = arith.addf %563, %564 : vector<2x128xf32>
    %566 = arith.negf %565 : vector<2x128xf32>
    %567 = math.exp %566 : vector<2x128xf32>
    %cst_208 = arith.constant 1.000000e+00 : f32
    %568 = vector.broadcast %cst_208 : f32 to vector<2x128xf32>
    %569 = arith.addf %568, %567 : vector<2x128xf32>
    %570 = arith.divf %568, %569 : vector<2x128xf32>
    %571 = math.tanh %565 : vector<2x128xf32>
    %572 = vector.extract_strided_slice %570 {offsets = [0, 0], sizes = [2, 32], strides = [1, 1]} : vector<2x128xf32> to vector<2x32xf32>
    %573 = vector.extract_strided_slice %570 {offsets = [0, 32], sizes = [2, 32], strides = [1, 1]} : vector<2x128xf32> to vector<2x32xf32>
    %574 = vector.extract_strided_slice %571 {offsets = [0, 64], sizes = [2, 32], strides = [1, 1]} : vector<2x128xf32> to vector<2x32xf32>
    %575 = vector.extract_strided_slice %570 {offsets = [0, 96], sizes = [2, 32], strides = [1, 1]} : vector<2x128xf32> to vector<2x32xf32>
    %576 = arith.mulf %573, %559 : vector<2x32xf32>
    %577 = arith.mulf %572, %574 : vector<2x32xf32>
    %578 = arith.addf %576, %577 : vector<2x32xf32>
    %579 = math.tanh %578 : vector<2x32xf32>
    %580 = arith.mulf %575, %579 : vector<2x32xf32>
    %c10_209 = arith.constant 10 : index
    %c0_210 = arith.constant 0 : index
    %581 = vector.load %arg17[%c10_209, %c0_210] : memref<16x32xf32, #tpu.memory_space<vmem>>, vector<2x32xf32>
    tpu.vector_store %arg17[%c10_209, %c0_210], %580 {strides = array<i32>} : memref<16x32xf32, #tpu.memory_space<vmem>>, vector<2x32xf32>,
    %c12_211 = arith.constant 12 : index
    %c0_212 = arith.constant 0 : index
    %582 = vector.load %arg16[%c12_211, %c0_212] : memref<16x128xf32, #tpu.memory_space<vmem>>, vector<2x128xf32>
    %cst_213 = arith.constant dense<0.000000e+00> : vector<2x128xf32>
    %583 = tpu.matmul %580, %472, %cst_213 {dimension_numbers = #tpu.dot_dimension_numbers<[1], [0], [0], [1], [0, 0, 1, 1], [], []>} : vector<2x32xf32>, vector<32x128xf32>, vector<2x128xf32> -> vector<2x128xf32>
    %584 = arith.addf %582, %583 : vector<2x128xf32>
    %585 = arith.negf %584 : vector<2x128xf32>
    %586 = math.exp %585 : vector<2x128xf32>
    %cst_214 = arith.constant 1.000000e+00 : f32
    %587 = vector.broadcast %cst_214 : f32 to vector<2x128xf32>
    %588 = arith.addf %587, %586 : vector<2x128xf32>
    %589 = arith.divf %587, %588 : vector<2x128xf32>
    %590 = math.tanh %584 : vector<2x128xf32>
    %591 = vector.extract_strided_slice %589 {offsets = [0, 0], sizes = [2, 32], strides = [1, 1]} : vector<2x128xf32> to vector<2x32xf32>
    %592 = vector.extract_strided_slice %589 {offsets = [0, 32], sizes = [2, 32], strides = [1, 1]} : vector<2x128xf32> to vector<2x32xf32>
    %593 = vector.extract_strided_slice %590 {offsets = [0, 64], sizes = [2, 32], strides = [1, 1]} : vector<2x128xf32> to vector<2x32xf32>
    %594 = vector.extract_strided_slice %589 {offsets = [0, 96], sizes = [2, 32], strides = [1, 1]} : vector<2x128xf32> to vector<2x32xf32>
    %595 = arith.mulf %592, %578 : vector<2x32xf32>
    %596 = arith.mulf %591, %593 : vector<2x32xf32>
    %597 = arith.addf %595, %596 : vector<2x32xf32>
    %598 = math.tanh %597 : vector<2x32xf32>
    %599 = arith.mulf %594, %598 : vector<2x32xf32>
    %c12_215 = arith.constant 12 : index
    %c0_216 = arith.constant 0 : index
    %600 = vector.load %arg17[%c12_215, %c0_216] : memref<16x32xf32, #tpu.memory_space<vmem>>, vector<2x32xf32>
    tpu.vector_store %arg17[%c12_215, %c0_216], %599 {strides = array<i32>} : memref<16x32xf32, #tpu.memory_space<vmem>>, vector<2x32xf32>,
    %c14_217 = arith.constant 14 : index
    %c0_218 = arith.constant 0 : index
    %601 = vector.load %arg16[%c14_217, %c0_218] : memref<16x128xf32, #tpu.memory_space<vmem>>, vector<2x128xf32>
    %cst_219 = arith.constant dense<0.000000e+00> : vector<2x128xf32>
    %602 = tpu.matmul %599, %472, %cst_219 {dimension_numbers = #tpu.dot_dimension_numbers<[1], [0], [0], [1], [0, 0, 1, 1], [], []>} : vector<2x32xf32>, vector<32x128xf32>, vector<2x128xf32> -> vector<2x128xf32>
    %603 = arith.addf %601, %602 : vector<2x128xf32>
    %604 = arith.negf %603 : vector<2x128xf32>
    %605 = math.exp %604 : vector<2x128xf32>
    %cst_220 = arith.constant 1.000000e+00 : f32
    %606 = vector.broadcast %cst_220 : f32 to vector<2x128xf32>
    %607 = arith.addf %606, %605 : vector<2x128xf32>
    %608 = arith.divf %606, %607 : vector<2x128xf32>
    %609 = math.tanh %603 : vector<2x128xf32>
    %610 = vector.extract_strided_slice %608 {offsets = [0, 0], sizes = [2, 32], strides = [1, 1]} : vector<2x128xf32> to vector<2x32xf32>
    %611 = vector.extract_strided_slice %608 {offsets = [0, 32], sizes = [2, 32], strides = [1, 1]} : vector<2x128xf32> to vector<2x32xf32>
    %612 = vector.extract_strided_slice %609 {offsets = [0, 64], sizes = [2, 32], strides = [1, 1]} : vector<2x128xf32> to vector<2x32xf32>
    %613 = vector.extract_strided_slice %608 {offsets = [0, 96], sizes = [2, 32], strides = [1, 1]} : vector<2x128xf32> to vector<2x32xf32>
    %614 = arith.mulf %611, %597 : vector<2x32xf32>
    %615 = arith.mulf %610, %612 : vector<2x32xf32>
    %616 = arith.addf %614, %615 : vector<2x32xf32>
    %617 = math.tanh %616 : vector<2x32xf32>
    %618 = arith.mulf %613, %617 : vector<2x32xf32>
    %c14_221 = arith.constant 14 : index
    %c0_222 = arith.constant 0 : index
    %619 = vector.load %arg17[%c14_221, %c0_222] : memref<16x32xf32, #tpu.memory_space<vmem>>, vector<2x32xf32>
    tpu.vector_store %arg17[%c14_221, %c0_222], %618 {strides = array<i32>} : memref<16x32xf32, #tpu.memory_space<vmem>>, vector<2x32xf32>,
    %c0_223 = arith.constant 0 : index
    %c0_224 = arith.constant 0 : index
    %620 = vector.load %arg17[%c0_223, %c0_224] : memref<16x32xf32, #tpu.memory_space<vmem>>, vector<16x32xf32>
    %c0_225 = arith.constant 0 : index
    %c0_226 = arith.constant 0 : index
    %621 = vector.load %arg13[%c0_225, %c0_226] : memref<32x1xf32, #tpu.memory_space<vmem>>, vector<32x1xf32>
    %cst_227 = arith.constant dense<0.000000e+00> : vector<16x1xf32>
    %622 = tpu.matmul %620, %621, %cst_227 {dimension_numbers = #tpu.dot_dimension_numbers<[1], [0], [0], [1], [0, 0, 1, 1], [], []>} : vector<16x32xf32>, vector<32x1xf32>, vector<16x1xf32> -> vector<16x1xf32>
    %c0_228 = arith.constant 0 : index
    %c0_229 = arith.constant 0 : index
    %623 = vector.load %arg14[%c0_228, %c0_229] : memref<1x1xf32, #tpu.memory_space<vmem>>, vector<1x1xf32>
    %624 = vector.broadcast %623 : vector<1x1xf32> to vector<16x1xf32>
    %625 = arith.addf %622, %624 : vector<16x1xf32>
    %c0_230 = arith.constant 0 : index
    %c0_231 = arith.constant 0 : index
    %626 = vector.load %arg15[%c0_230, %c0_231] : memref<16x1xf32, #tpu.memory_space<vmem>>, vector<16x1xf32>
    tpu.vector_store %arg15[%c0_230, %c0_231], %625 {strides = array<i32>} : memref<16x1xf32, #tpu.memory_space<vmem>>, vector<16x1xf32>,
    return
  }
}

</mosaic_0001>

<llo_original>
// kernel: tpu_custom_call.1
$region0: #{tpu_custom_call.1}
  #allocation0 [shape = 'u32[]', space=smem, size = 0x4, offset = 0x4, fixed_abs, tag = 'smem constant byte address 0x4 - core index']
  #allocation1 [shape = 'u32[144,128]{1,0:T(1,128)}', space=vmem, size = 0x12000, scoped, tag = 'internal scratch']
  #allocation2 [shape = 'f32[16,128]{1,0:T(8,128)}', space=vmem, size = 0x2000, scoped, tag = 'scratch operand']
  #allocation3 [shape = 'f32[16,32]{1,0:T(8,128)}', space=vmem, size = 0x2000, scoped, tag = 'scratch operand']
  #allocation4 [shape = 'f32[1,1]{1,0:T(1,128)S(1)}', space=vmem, size = 0x200, scoped, tag = 'scoped memory for tpu_custom_call.1']
  %s0 = inlined_call_operand.vmem [shape: f32[16,8], index: 0, kind: input, shape index: {}]
  %s1 = inlined_call_operand.hbm [shape: f32[8,128], index: 1, kind: input, shape index: {}]
  %s2 = inlined_call_operand.vmem [shape: f32[32,128], index: 2, kind: input, shape index: {}]
  %s3 = inlined_call_operand.hbm [shape: f32[1,128], index: 3, kind: input, shape index: {}]
  %s4 = inlined_call_operand.vmem [shape: f32[32,128], index: 4, kind: input, shape index: {}]
  %s5 = inlined_call_operand.hbm [shape: f32[32,128], index: 5, kind: input, shape index: {}]
  %s6 = inlined_call_operand.vmem [shape: f32[1,128], index: 6, kind: input, shape index: {}]
  %s7 = inlined_call_operand.hbm [shape: f32[32,128], index: 7, kind: input, shape index: {}]
  %s8 = inlined_call_operand.hbm [shape: f32[32,128], index: 8, kind: input, shape index: {}]
  %s9 = inlined_call_operand.vmem [shape: f32[1,128], index: 9, kind: input, shape index: {}]
  %s10 = inlined_call_operand.hbm [shape: f32[32,128], index: 10, kind: input, shape index: {}]
  %s11 = inlined_call_operand.hbm [shape: f32[32,128], index: 11, kind: input, shape index: {}]
  %s12 = inlined_call_operand.vmem [shape: f32[1,128], index: 12, kind: input, shape index: {}]
  %s13 = inlined_call_operand.vmem [shape: f32[32,1], index: 13, kind: input, shape index: {}]
  %s14 = inlined_call_operand.<no memory space> [shape: f32[1,1], index: 14, kind: input, shape index: {}]
  %s15 = inlined_call_operand.vmem [shape: f32[16,1], index: 15, kind: output, shape index: {}]
  %s16 = sld [smem:[#allocation0]]
  $region98: #{tpu_custom_call.1} parent=0
    _
  %s18 = ssub.s32 1, %s16
  %s19 = scalar_select 0, %s18, %s16
  %v20 = vstv %s14
  %21 = vst [vmem:[#allocation4] sm:$0x1] %v20
  $region1: #{tpu_custom_call.1} parent=0
    #allocation5 [shape = 'u8[4096]{0}', space=vmem, size = 0x1000, scoped, tag = 'input window, operand 1, single buffered']
    #allocation6 [shape = 's32[1]{0}', space=sflag, size = 0x4, scoped, tag = 'scoped memory for tpu_custom_call.1']
    #allocation7 [shape = 'u8[512]{0}', space=vmem, size = 0x400, scoped, tag = 'input window, operand 3, single buffered']
    #allocation8 [shape = 's32[1]{0}', space=sflag, size = 0x4, scoped, tag = 'scoped memory for tpu_custom_call.1']
    #allocation9 [shape = 'u8[16384]{0}', space=vmem, size = 0x4000, scoped, tag = 'input window, operand 5, single buffered']
    #allocation10 [shape = 'u8[16384]{0}', space=vmem, size = 0x4000, scoped, tag = 'input window, operand 7, single buffered']
    #allocation11 [shape = 's32[1]{0}', space=sflag, size = 0x4, scoped, tag = 'scoped memory for tpu_custom_call.1']
    #allocation12 [shape = 'u8[16384]{0}', space=vmem, size = 0x4000, scoped, tag = 'input window, operand 8, single buffered']
    #allocation13 [shape = 'u8[16384]{0}', space=vmem, size = 0x4000, scoped, tag = 'input window, operand 10, single buffered']
    #allocation14 [shape = 's32[1]{0}', space=sflag, size = 0x4, scoped, tag = 'scoped memory for tpu_custom_call.1']
    #allocation15 [shape = 'u8[16384]{0}', space=vmem, size = 0x4000, scoped, tag = 'input window, operand 11, single buffered']
    %22 = vsyncpa [#allocation6], 0
    %23 = vsyncpa [#allocation8], 0
    %24 = vsyncpa [#allocation11], 0
    %25 = vsyncpa [#allocation14], 0
    // Predicated region
    $region2: #{tpu_custom_call.1} parent=1 // pred_check
      _
    $region3: #{tpu_custom_call.1} parent=1 // pred_check_branch
      %27 = sbr.rel (0) target = $region5
    $region4: #{tpu_custom_call.1} parent=1 // pred_region
      _
    $region5: #{tpu_custom_call.1} parent=1 // pred_fallthru
      _
    // Predicated region
    $region6: #{tpu_custom_call.1} parent=1 // pred_check
      _
    $region7: #{tpu_custom_call.1} parent=1 // pred_check_branch
      %29 = sbr.rel (0) target = $region9
    $region8: #{tpu_custom_call.1} parent=1 // pred_region
      %s31 = ssub.s32 128, 128
      %32 = vsyncadd [#allocation6], %s31
      %s34 = sshll.u32 [#allocation5], 4
      %s35 = int_to_ptr.vmem [resolvable:$true] %s34
      %37 = dma.hbm_to_vmem [thread:$0]  %s1, 128, %s35, [#allocation6]
    $region9: #{tpu_custom_call.1} parent=1 // pred_fallthru
      _
    // Predicated region
    $region10: #{tpu_custom_call.1} parent=1 // pred_check
      _
    $region11: #{tpu_custom_call.1} parent=1 // pred_check_branch
      %39 = sbr.rel (0) target = $region13
    $region12: #{tpu_custom_call.1} parent=1 // pred_region
      _
    $region13: #{tpu_custom_call.1} parent=1 // pred_fallthru
      _
    // Predicated region
    $region14: #{tpu_custom_call.1} parent=1 // pred_check
      _
    $region15: #{tpu_custom_call.1} parent=1 // pred_check_branch
      %41 = sbr.rel (0) target = $region17
    $region16: #{tpu_custom_call.1} parent=1 // pred_region
      %s43 = ssub.s32 16, 16
      %44 = vsyncadd [#allocation8], %s43
      %s46 = sshll.u32 [#allocation7], 4
      %s47 = int_to_ptr.vmem [resolvable:$true] %s46
      %49 = dma.hbm_to_vmem [thread:$0]  %s3, 16, %s47, [#allocation8]
    $region17: #{tpu_custom_call.1} parent=1 // pred_fallthru
      _
    // Predicated region
    $region18: #{tpu_custom_call.1} parent=1 // pred_check
      _
    $region19: #{tpu_custom_call.1} parent=1 // pred_check_branch
      %51 = sbr.rel (0) target = $region21
    $region20: #{tpu_custom_call.1} parent=1 // pred_region
      _
    $region21: #{tpu_custom_call.1} parent=1 // pred_fallthru
      _
    // Predicated region
    $region22: #{tpu_custom_call.1} parent=1 // pred_check
      _
    $region23: #{tpu_custom_call.1} parent=1 // pred_check_branch
      %53 = sbr.rel (0) target = $region25
    $region24: #{tpu_custom_call.1} parent=1 // pred_region
      %s55 = ssub.s32 512, 512
      %56 = vsyncadd [#allocation8], %s55
      %s57 = sshll.u32 [#allocation9], 4
      %s58 = int_to_ptr.vmem [resolvable:$true] %s57
      %63 = dma.hbm_to_vmem [thread:$0]  %s5, 512, %s58, [#allocation8], 128, 128, 8
    $region25: #{tpu_custom_call.1} parent=1 // pred_fallthru
      _
    // Predicated region
    $region26: #{tpu_custom_call.1} parent=1 // pred_check
      _
    $region27: #{tpu_custom_call.1} parent=1 // pred_check_branch
      %65 = sbr.rel (0) target = $region29
    $region28: #{tpu_custom_call.1} parent=1 // pred_region
      _
    $region29: #{tpu_custom_call.1} parent=1 // pred_fallthru
      _
    // Predicated region
    $region30: #{tpu_custom_call.1} parent=1 // pred_check
      _
    $region31: #{tpu_custom_call.1} parent=1 // pred_check_branch
      %67 = sbr.rel (0) target = $region33
    $region32: #{tpu_custom_call.1} parent=1 // pred_region
      %s69 = ssub.s32 512, 512
      %70 = vsyncadd [#allocation11], %s69
      %s71 = sshll.u32 [#allocation10], 4
      %s72 = int_to_ptr.vmem [resolvable:$true] %s71
      %77 = dma.hbm_to_vmem [thread:$0]  %s7, 512, %s72, [#allocation11], 128, 128, 8
    $region33: #{tpu_custom_call.1} parent=1 // pred_fallthru
      _
    // Predicated region
    $region34: #{tpu_custom_call.1} parent=1 // pred_check
      _
    $region35: #{tpu_custom_call.1} parent=1 // pred_check_branch
      %79 = sbr.rel (0) target = $region37
    $region36: #{tpu_custom_call.1} parent=1 // pred_region
      %s81 = ssub.s32 512, 512
      %82 = vsyncadd [#allocation11], %s81
      %s83 = sshll.u32 [#allocation12], 4
      %s84 = int_to_ptr.vmem [resolvable:$true] %s83
      %89 = dma.hbm_to_vmem [thread:$0]  %s8, 512, %s84, [#allocation11], 128, 128, 8
    $region37: #{tpu_custom_call.1} parent=1 // pred_fallthru
      _
    // Predicated region
    $region38: #{tpu_custom_call.1} parent=1 // pred_check
      _
    $region39: #{tpu_custom_call.1} parent=1 // pred_check_branch
      %91 = sbr.rel (0) target = $region41
    $region40: #{tpu_custom_call.1} parent=1 // pred_region
      _
    $region41: #{tpu_custom_call.1} parent=1 // pred_fallthru
      _
    // Predicated region
    $region42: #{tpu_custom_call.1} parent=1 // pred_check
      _
    $region43: #{tpu_custom_call.1} parent=1 // pred_check_branch
      %93 = sbr.rel (0) target = $region45
    $region44: #{tpu_custom_call.1} parent=1 // pred_region
      %s95 = ssub.s32 512, 512
      %96 = vsyncadd [#allocation14], %s95
      %s97 = sshll.u32 [#allocation13], 4
      %s98 = int_to_ptr.vmem [resolvable:$true] %s97
      %103 = dma.hbm_to_vmem [thread:$0]  %s10, 512, %s98, [#allocation14], 128, 128, 8
    $region45: #{tpu_custom_call.1} parent=1 // pred_fallthru
      _
    // Predicated region
    $region46: #{tpu_custom_call.1} parent=1 // pred_check
      _
    $region47: #{tpu_custom_call.1} parent=1 // pred_check_branch
      %105 = sbr.rel (0) target = $region49
    $region48: #{tpu_custom_call.1} parent=1 // pred_region
      %s107 = ssub.s32 512, 512
      %108 = vsyncadd [#allocation14], %s107
      %s109 = sshll.u32 [#allocation15], 4
      %s110 = int_to_ptr.vmem [resolvable:$true] %s109
      %115 = dma.hbm_to_vmem [thread:$0]  %s11, 512, %s110, [#allocation14], 128, 128, 8
    $region49: #{tpu_custom_call.1} parent=1 // pred_fallthru
      _
    // Predicated region
    $region50: #{tpu_custom_call.1} parent=1 // pred_check
      _
    $region51: #{tpu_custom_call.1} parent=1 // pred_check_branch
      %117 = sbr.rel (0) target = $region53
    $region52: #{tpu_custom_call.1} parent=1 // pred_region
      _
    $region53: #{tpu_custom_call.1} parent=1 // pred_fallthru
      _
    // Predicated region
    $region54: #{tpu_custom_call.1} parent=1 // pred_check
      _
    $region55: #{tpu_custom_call.1} parent=1 // pred_check_branch
      %119 = sbr.rel (0) target = $region57
    $region56: #{tpu_custom_call.1} parent=1 // pred_region
      _
    $region57: #{tpu_custom_call.1} parent=1 // pred_fallthru
      _
    // Predicated region
    $region58: #{tpu_custom_call.1} parent=1 // pred_check
      _
    $region59: #{tpu_custom_call.1} parent=1 // pred_check_branch
      %121 = sbr.rel (0) target = $region61
    $region60: #{tpu_custom_call.1} parent=1 // pred_region
      _
    $region61: #{tpu_custom_call.1} parent=1 // pred_fallthru
      _
    // Predicated region
    $region62: #{tpu_custom_call.1} parent=1 // pred_check
      _
    $region63: #{tpu_custom_call.1} parent=1 // pred_check_branch
      %123 = sbr.rel (0) target = $region65
    $region64: #{tpu_custom_call.1} parent=1 // pred_region
      %124 = dma.done [#allocation6], 128
    $region65: #{tpu_custom_call.1} parent=1 // pred_fallthru
      _
    // Predicated region
    $region66: #{tpu_custom_call.1} parent=1 // pred_check
      _
    $region67: #{tpu_custom_call.1} parent=1 // pred_check_branch
      %126 = sbr.rel (0) target = $region69
    $region68: #{tpu_custom_call.1} parent=1 // pred_region
      %127 = dma.done [#allocation8], 16
    $region69: #{tpu_custom_call.1} parent=1 // pred_fallthru
      _
    // Predicated region
    $region70: #{tpu_custom_call.1} parent=1 // pred_check
      _
    $region71: #{tpu_custom_call.1} parent=1 // pred_check_branch
      %129 = sbr.rel (0) target = $region73
    $region72: #{tpu_custom_call.1} parent=1 // pred_region
      %130 = dma.done [#allocation8], 512
    $region73: #{tpu_custom_call.1} parent=1 // pred_fallthru
      _
    // Predicated region
    $region74: #{tpu_custom_call.1} parent=1 // pred_check
      _
    $region75: #{tpu_custom_call.1} parent=1 // pred_check_branch
      %132 = sbr.rel (0) target = $region77
    $region76: #{tpu_custom_call.1} parent=1 // pred_region
      %133 = dma.done [#allocation11], 512
    $region77: #{tpu_custom_call.1} parent=1 // pred_fallthru
      _
    // Predicated region
    $region78: #{tpu_custom_call.1} parent=1 // pred_check
      _
    $region79: #{tpu_custom_call.1} parent=1 // pred_check_branch
      %135 = sbr.rel (0) target = $region81
    $region80: #{tpu_custom_call.1} parent=1 // pred_region
      %136 = dma.done [#allocation11], 512
    $region81: #{tpu_custom_call.1} parent=1 // pred_fallthru
      _
    // Predicated region
    $region82: #{tpu_custom_call.1} parent=1 // pred_check
      _
    $region83: #{tpu_custom_call.1} parent=1 // pred_check_branch
      %138 = sbr.rel (0) target = $region85
    $region84: #{tpu_custom_call.1} parent=1 // pred_region
      %139 = dma.done [#allocation14], 512
    $region85: #{tpu_custom_call.1} parent=1 // pred_fallthru
      _
    // Predicated region
    $region86: #{tpu_custom_call.1} parent=1 // pred_check
      _
    $region87: #{tpu_custom_call.1} parent=1 // pred_check_branch
      %141 = sbr.rel (0) target = $region89
    $region88: #{tpu_custom_call.1} parent=1 // pred_region
      %142 = dma.done [#allocation14], 512
    $region89: #{tpu_custom_call.1} parent=1 // pred_fallthru
      _
    %v143 = vld [vmem:[%s0] sm:$0xff]
    %v144 = vld [vmem:[%s0 + $0x8] sm:$0xff]
    %v145 = vld [vmem:[#allocation5] sm:$0xff]
    %v146 = vld [vmem:[#allocation7] sm:$0x1]
    %v148 = vlaneseq
    %v149 = vshrl.u32 %v148, 7
    %v150 = vsub.s32 0, %v149
    %v151 = vrot.slane %v146, %v150
    %vm153 = vcmask 64512
    %v155 = vsel %vm153, %v143, 0
    %v158 = vsel %vm153, %v144, 0
    %160 = vmatprep.subr.mxu0 0.0
    %161 = vmatpush1.msra.mxu0 0.0
    %162 = vmatprep.subr.mxu0 0.0
    %163 = vmatpush1.msra.mxu0 0.0
    %164 = vmatprep.subr.mxu0 0.0
    %165 = vmatpush1.msra.mxu0 0.0
    %166 = vmatprep.subr.mxu0 0.0
    %167 = vmatpush1.msra.mxu0 0.0
    %168 = vmatprep.subr.mxu0 0.0
    %169 = vmatpush1.msra.mxu0 0.0
    %170 = vmatprep.subr.mxu0 0.0
    %171 = vmatpush1.msra.mxu0 0.0
    %172 = vmatprep.subr.mxu0 0.0
    %173 = vmatpush1.msra.mxu0 0.0
    %174 = vmatprep.subr.mxu0 0.0
    %175 = vmatpush1.msra.mxu0 0.0
    %176 = vmatprep.subr.mxu0 0.0
    %177 = vmatpush1.msra.mxu0 0.0
    %178 = vmatprep.subr.mxu0 0.0
    %179 = vmatpush1.msra.mxu0 0.0
    %180 = vmatprep.subr.mxu0 0.0
    %181 = vmatpush1.msra.mxu0 0.0
    %182 = vmatprep.subr.mxu0 0.0
    %183 = vmatpush1.msra.mxu0 0.0
    %184 = vmatprep.subr.mxu0 0.0
    %185 = vmatpush1.msra.mxu0 0.0
    %186 = vmatprep.subr.mxu0 0.0
    %187 = vmatpush1.msra.mxu0 0.0
    %188 = vmatprep.subr.mxu0 0.0
    %189 = vmatpush1.msra.mxu0 0.0
    %190 = vmatprep.subr.mxu0 0.0
    %191 = vmatpush1.msra.mxu0 %v145
    %192 = vmatprep.subr.mxu0 0.0
    %193 = vmatpush2.msra.mxu0 0.0
    %194 = vmatprep.subr.mxu0 0.0
    %195 = vmatpush2.msra.mxu0 0.0
    %196 = vmatprep.subr.mxu0 0.0
    %197 = vmatpush2.msra.mxu0 0.0
    %198 = vmatprep.subr.mxu0 0.0
    %199 = vmatpush2.msra.mxu0 0.0
    %200 = vmatprep.subr.mxu0 0.0
    %201 = vmatpush2.msra.mxu0 0.0
    %202 = vmatprep.subr.mxu0 0.0
    %203 = vmatpush2.msra.mxu0 0.0
    %204 = vmatprep.subr.mxu0 0.0
    %205 = vmatpush2.msra.mxu0 0.0
    %206 = vmatprep.subr.mxu0 0.0
    %207 = vmatpush2.msra.mxu0 0.0
    %208 = vmatprep.subr.mxu0 0.0
    %209 = vmatpush2.msra.mxu0 0.0
    %210 = vmatprep.subr.mxu0 0.0
    %211 = vmatpush2.msra.mxu0 0.0
    %212 = vmatprep.subr.mxu0 0.0
    %213 = vmatpush2.msra.mxu0 0.0
    %214 = vmatprep.subr.mxu0 0.0
    %215 = vmatpush2.msra.mxu0 0.0
    %216 = vmatprep.subr.mxu0 0.0
    %217 = vmatpush2.msra.mxu0 0.0
    %218 = vmatprep.subr.mxu0 0.0
    %219 = vmatpush2.msra.mxu0 0.0
    %220 = vmatprep.subr.mxu0 0.0
    %221 = vmatpush2.msra.mxu0 0.0
    %222 = vmatprep.subr.mxu0 0.0
    %223 = vmatpush2.msra.mxu0 0.0
    %224 = vmatprep.mubr.f32.mxu0 0.0
    %225 = vmatmul.mubr.f32.gmra.mxu0 %v155
    %v226 = vpop.f32.mrf.mxu0
    %v227 = vadd.f32 %v151, %v226
    %v228 = vpop.f32.mrf.mxu0
    %229 = vmatprep.mubr.f32.mxu0 0.0
    %230 = vmatmul.mubr.f32.gmra.mxu0 %v158
    %v231 = vpop.f32.mrf.mxu0
    %v232 = vadd.f32 %v151, %v231
    %v233 = vpop.f32.mrf.mxu0
    %234 = vdwg.mxu0
    %235 = vst [vmem:[#allocation2] sm:$0xff] %v227
    %236 = vst [vmem:[#allocation2 + $0x8] sm:$0xff] %v232
    %v237 = vld [vmem:[%s2] sm:$0xff]
    %v238 = vld [vmem:[%s2 + $0x8] sm:$0xff]
    %v239 = vld [vmem:[%s2 + $0x10] sm:$0xff]
    %v240 = vld [vmem:[%s2 + $0x18] sm:$0xff]
    %v241 = vld [vmem:[#allocation2] sm:$0x3]
    %v242 = vxor.u32 %v241, 2147483648
    %v243 = vmul.f32 %v242, 1.442695
    %v244 = vpow.pop %v243
    %v245 = vadd.f32 %v244, 1.0
    %v246 = vrcp.pop %v245
    %v247 = vmul.f32 1.0, %v246
    %v248 = vtanh.pop %v241
    %250 = vrot.lane.b32.xlu0 %v248, 64
    %v251 = vpop.permute.xlu0 %250
    %v253 = vmul.f32 %v247, %v251
    %v254 = vtanh.pop %v253
    %256 = vrot.lane.b32.xlu0 %v254, 96
    %v257 = vpop.permute.xlu0 %256
    %v259 = vmul.f32 %v247, %v257
    %261 = vrot.lane.b32.xlu0 %v259, 32
    %v262 = vpop.permute.xlu0 %261
    %vm264 = vcmask 254976
    %265 = vst.msk [vmem:[#allocation3] sm:$0x3] %vm264, %v262
    %v266 = vld [vmem:[#allocation2 + $0x2] sm:$0x3]
    %vm267 = vcmask 261120
    %v268 = vsel %vm267, %v262, 0
    %270 = vmatprep.subr.mxu0 0.0
    %271 = vmatpush1.msra.mxu0 0.0
    %272 = vmatprep.subr.mxu0 0.0
    %273 = vmatpush1.msra.mxu0 0.0
    %274 = vmatprep.subr.mxu0 0.0
    %275 = vmatpush1.msra.mxu0 0.0
    %276 = vmatprep.subr.mxu0 0.0
    %277 = vmatpush1.msra.mxu0 0.0
    %278 = vmatprep.subr.mxu0 0.0
    %279 = vmatpush1.msra.mxu0 0.0
    %280 = vmatprep.subr.mxu0 0.0
    %281 = vmatpush1.msra.mxu0 0.0
    %282 = vmatprep.subr.mxu0 0.0
    %283 = vmatpush1.msra.mxu0 0.0
    %284 = vmatprep.subr.mxu0 0.0
    %285 = vmatpush1.msra.mxu0 0.0
    %286 = vmatprep.subr.mxu0 0.0
    %287 = vmatpush1.msra.mxu0 0.0
    %288 = vmatprep.subr.mxu0 0.0
    %289 = vmatpush1.msra.mxu0 0.0
    %290 = vmatprep.subr.mxu0 0.0
    %291 = vmatpush1.msra.mxu0 0.0
    %292 = vmatprep.subr.mxu0 0.0
    %293 = vmatpush1.msra.mxu0 0.0
    %294 = vmatprep.subr.mxu0 0.0
    %295 = vmatpush1.msra.mxu0 %v240
    %296 = vmatprep.subr.mxu0 0.0
    %297 = vmatpush1.msra.mxu0 %v239
    %298 = vmatprep.subr.mxu0 0.0
    %299 = vmatpush1.msra.mxu0 %v238
    %300 = vmatprep.subr.mxu0 0.0
    %301 = vmatpush1.msra.mxu0 %v237
    %302 = vmatprep.subr.mxu0 0.0
    %303 = vmatpush2.msra.mxu0 0.0
    %304 = vmatprep.subr.mxu0 0.0
    %305 = vmatpush2.msra.mxu0 0.0
    %306 = vmatprep.subr.mxu0 0.0
    %307 = vmatpush2.msra.mxu0 0.0
    %308 = vmatprep.subr.mxu0 0.0
    %309 = vmatpush2.msra.mxu0 0.0
    %310 = vmatprep.subr.mxu0 0.0
    %311 = vmatpush2.msra.mxu0 0.0
    %312 = vmatprep.subr.mxu0 0.0
    %313 = vmatpush2.msra.mxu0 0.0
    %314 = vmatprep.subr.mxu0 0.0
    %315 = vmatpush2.msra.mxu0 0.0
    %316 = vmatprep.subr.mxu0 0.0
    %317 = vmatpush2.msra.mxu0 0.0
    %318 = vmatprep.subr.mxu0 0.0
    %319 = vmatpush2.msra.mxu0 0.0
    %320 = vmatprep.subr.mxu0 0.0
    %321 = vmatpush2.msra.mxu0 0.0
    %322 = vmatprep.subr.mxu0 0.0
    %323 = vmatpush2.msra.mxu0 0.0
    %324 = vmatprep.subr.mxu0 0.0
    %325 = vmatpush2.msra.mxu0 0.0
    %326 = vmatprep.subr.mxu0 0.0
    %327 = vmatpush2.msra.mxu0 0.0
    %328 = vmatprep.subr.mxu0 0.0
    %329 = vmatpush2.msra.mxu0 0.0
    %330 = vmatprep.subr.mxu0 0.0
    %331 = vmatpush2.msra.mxu0 0.0
    %332 = vmatprep.subr.mxu0 0.0
    %333 = vmatpush2.msra.mxu0 0.0
    %334 = vmatprep.mubr.f32.mxu0 0.0
    %335 = vmatmul.mubr.f32.gmra.mxu0 %v268
    %v336 = vpop.f32.mrf.mxu0
    %v337 = vadd.f32 0.0, %v336
    %v338 = vpop.f32.mrf.mxu0
    %339 = vdwg.mxu0
    %v340 = vadd.f32 %v266, %v337
    %v341 = vxor.u32 %v340, 2147483648
    %v342 = vmul.f32 %v341, 1.442695
    %v343 = vpow.pop %v342
    %v344 = vadd.f32 %v343, 1.0
    %v345 = vrcp.pop %v344
    %v346 = vmul.f32 1.0, %v345
    %v347 = vtanh.pop %v340
    %349 = vrot.lane.b32.xlu0 %v253, 32
    %v350 = vpop.permute.xlu0 %349
    %v352 = vmul.f32 %v346, %v350
    %354 = vrot.lane.b32.xlu0 %v347, 64
    %v355 = vpop.permute.xlu0 %354
    %v357 = vmul.f32 %v346, %v355
    %359 = vrot.lane.b32.xlu0 %v357, 32
    %v360 = vpop.permute.xlu0 %359
    %v362 = vadd.f32 %v352, %v360
    %v363 = vtanh.pop %v362
    %365 = vrot.lane.b32.xlu0 %v363, 64
    %v366 = vpop.permute.xlu0 %365
    %v368 = vmul.f32 %v346, %v366
    %370 = vrot.lane.b32.xlu0 %v368, 32
    %v371 = vpop.permute.xlu0 %370
    %373 = vst.msk [vmem:[#allocation3 + $0x2] sm:$0x3] %vm264, %v371
    %v374 = vld [vmem:[#allocation2 + $0x4] sm:$0x3]
    %v375 = vsel %vm267, %v371, 0
    %377 = vmatprep.subr.mxu0 0.0
    %378 = vmatpush1.msra.mxu0 0.0
    %379 = vmatprep.subr.mxu0 0.0
    %380 = vmatpush1.msra.mxu0 0.0
    %381 = vmatprep.subr.mxu0 0.0
    %382 = vmatpush1.msra.mxu0 0.0
    %383 = vmatprep.subr.mxu0 0.0
    %384 = vmatpush1.msra.mxu0 0.0
    %385 = vmatprep.subr.mxu0 0.0
    %386 = vmatpush1.msra.mxu0 0.0
    %387 = vmatprep.subr.mxu0 0.0
    %388 = vmatpush1.msra.mxu0 0.0
    %389 = vmatprep.subr.mxu0 0.0
    %390 = vmatpush1.msra.mxu0 0.0
    %391 = vmatprep.subr.mxu0 0.0
    %392 = vmatpush1.msra.mxu0 0.0
    %393 = vmatprep.subr.mxu0 0.0
    %394 = vmatpush1.msra.mxu0 0.0
    %395 = vmatprep.subr.mxu0 0.0
    %396 = vmatpush1.msra.mxu0 0.0
    %397 = vmatprep.subr.mxu0 0.0
    %398 = vmatpush1.msra.mxu0 0.0
    %399 = vmatprep.subr.mxu0 0.0
    %400 = vmatpush1.msra.mxu0 0.0
    %401 = vmatprep.subr.mxu0 0.0
    %402 = vmatpush1.msra.mxu0 %v240
    %403 = vmatprep.subr.mxu0 0.0
    %404 = vmatpush1.msra.mxu0 %v239
    %405 = vmatprep.subr.mxu0 0.0
    %406 = vmatpush1.msra.mxu0 %v238
    %407 = vmatprep.subr.mxu0 0.0
    %408 = vmatpush1.msra.mxu0 %v237
    %409 = vmatprep.subr.mxu0 0.0
    %410 = vmatpush2.msra.mxu0 0.0
    %411 = vmatprep.subr.mxu0 0.0
    %412 = vmatpush2.msra.mxu0 0.0
    %413 = vmatprep.subr.mxu0 0.0
    %414 = vmatpush2.msra.mxu0 0.0
    %415 = vmatprep.subr.mxu0 0.0
    %416 = vmatpush2.msra.mxu0 0.0
    %417 = vmatprep.subr.mxu0 0.0
    %418 = vmatpush2.msra.mxu0 0.0
    %419 = vmatprep.subr.mxu0 0.0
    %420 = vmatpush2.msra.mxu0 0.0
    %421 = vmatprep.subr.mxu0 0.0
    %422 = vmatpush2.msra.mxu0 0.0
    %423 = vmatprep.subr.mxu0 0.0
    %424 = vmatpush2.msra.mxu0 0.0
    %425 = vmatprep.subr.mxu0 0.0
    %426 = vmatpush2.msra.mxu0 0.0
    %427 = vmatprep.subr.mxu0 0.0
    %428 = vmatpush2.msra.mxu0 0.0
    %429 = vmatprep.subr.mxu0 0.0
    %430 = vmatpush2.msra.mxu0 0.0
    %431 = vmatprep.subr.mxu0 0.0
    %432 = vmatpush2.msra.mxu0 0.0
    %433 = vmatprep.subr.mxu0 0.0
    %434 = vmatpush2.msra.mxu0 0.0
    %435 = vmatprep.subr.mxu0 0.0
    %436 = vmatpush2.msra.mxu0 0.0
    %437 = vmatprep.subr.mxu0 0.0
    %438 = vmatpush2.msra.mxu0 0.0
    %439 = vmatprep.subr.mxu0 0.0
    %440 = vmatpush2.msra.mxu0 0.0
    %441 = vmatprep.mubr.f32.mxu0 0.0
    %442 = vmatmul.mubr.f32.gmra.mxu0 %v375
    %v443 = vpop.f32.mrf.mxu0
    %v444 = vadd.f32 0.0, %v443
    %v445 = vpop.f32.mrf.mxu0
    %446 = vdwg.mxu0
    %v447 = vadd.f32 %v374, %v444
    %v448 = vxor.u32 %v447, 2147483648
    %v449 = vmul.f32 %v448, 1.442695
    %v450 = vpow.pop %v449
    %v451 = vadd.f32 %v450, 1.0
    %v452 = vrcp.pop %v451
    %v453 = vmul.f32 1.0, %v452
    %v454 = vtanh.pop %v447
    %v455 = vmul.f32 %v453, %v362
    %457 = vrot.lane.b32.xlu0 %v454, 64
    %v458 = vpop.permute.xlu0 %457
    %v460 = vmul.f32 %v453, %v458
    %462 = vrot.lane.b32.xlu0 %v460, 32
    %v463 = vpop.permute.xlu0 %462
    %v465 = vadd.f32 %v455, %v463
    %v466 = vtanh.pop %v465
    %468 = vrot.lane.b32.xlu0 %v466, 64
    %v469 = vpop.permute.xlu0 %468
    %v471 = vmul.f32 %v453, %v469
    %473 = vrot.lane.b32.xlu0 %v471, 32
    %v474 = vpop.permute.xlu0 %473
    %476 = vst.msk [vmem:[#allocation3 + $0x4] sm:$0x3] %vm264, %v474
    %v477 = vld [vmem:[#allocation2 + $0x6] sm:$0x3]
    %v478 = vsel %vm267, %v474, 0
    %480 = vmatprep.subr.mxu0 0.0
    %481 = vmatpush1.msra.mxu0 0.0
    %482 = vmatprep.subr.mxu0 0.0
    %483 = vmatpush1.msra.mxu0 0.0
    %484 = vmatprep.subr.mxu0 0.0
    %485 = vmatpush1.msra.mxu0 0.0
    %486 = vmatprep.subr.mxu0 0.0
    %487 = vmatpush1.msra.mxu0 0.0
    %488 = vmatprep.subr.mxu0 0.0
    %489 = vmatpush1.msra.mxu0 0.0
    %490 = vmatprep.subr.mxu0 0.0
    %491 = vmatpush1.msra.mxu0 0.0
    %492 = vmatprep.subr.mxu0 0.0
    %493 = vmatpush1.msra.mxu0 0.0
    %494 = vmatprep.subr.mxu0 0.0
    %495 = vmatpush1.msra.mxu0 0.0
    %496 = vmatprep.subr.mxu0 0.0
    %497 = vmatpush1.msra.mxu0 0.0
    %498 = vmatprep.subr.mxu0 0.0
    %499 = vmatpush1.msra.mxu0 0.0
    %500 = vmatprep.subr.mxu0 0.0
    %501 = vmatpush1.msra.mxu0 0.0
    %502 = vmatprep.subr.mxu0 0.0
    %503 = vmatpush1.msra.mxu0 0.0
    %504 = vmatprep.subr.mxu0 0.0
    %505 = vmatpush1.msra.mxu0 %v240
    %506 = vmatprep.subr.mxu0 0.0
    %507 = vmatpush1.msra.mxu0 %v239
    %508 = vmatprep.subr.mxu0 0.0
    %509 = vmatpush1.msra.mxu0 %v238
    %510 = vmatprep.subr.mxu0 0.0
    %511 = vmatpush1.msra.mxu0 %v237
    %512 = vmatprep.subr.mxu0 0.0
    %513 = vmatpush2.msra.mxu0 0.0
    %514 = vmatprep.subr.mxu0 0.0
    %515 = vmatpush2.msra.mxu0 0.0
    %516 = vmatprep.subr.mxu0 0.0
    %517 = vmatpush2.msra.mxu0 0.0
    %518 = vmatprep.subr.mxu0 0.0
    %519 = vmatpush2.msra.mxu0 0.0
    %520 = vmatprep.subr.mxu0 0.0
    %521 = vmatpush2.msra.mxu0 0.0
    %522 = vmatprep.subr.mxu0 0.0
    %523 = vmatpush2.msra.mxu0 0.0
    %524 = vmatprep.subr.mxu0 0.0
    %525 = vmatpush2.msra.mxu0 0.0
    %526 = vmatprep.subr.mxu0 0.0
    %527 = vmatpush2.msra.mxu0 0.0
    %528 = vmatprep.subr.mxu0 0.0
    %529 = vmatpush2.msra.mxu0 0.0
    %530 = vmatprep.subr.mxu0 0.0
    %531 = vmatpush2.msra.mxu0 0.0
    %532 = vmatprep.subr.mxu0 0.0
    %533 = vmatpush2.msra.mxu0 0.0
    %534 = vmatprep.subr.mxu0 0.0
    %535 = vmatpush2.msra.mxu0 0.0
    %536 = vmatprep.subr.mxu0 0.0
    %537 = vmatpush2.msra.mxu0 0.0
    %538 = vmatprep.subr.mxu0 0.0
    %539 = vmatpush2.msra.mxu0 0.0
    %540 = vmatprep.subr.mxu0 0.0
    %541 = vmatpush2.msra.mxu0 0.0
    %542 = vmatprep.subr.mxu0 0.0
    %543 = vmatpush2.msra.mxu0 0.0
    %544 = vmatprep.mubr.f32.mxu0 0.0
    %545 = vmatmul.mubr.f32.gmra.mxu0 %v478
    %v546 = vpop.f32.mrf.mxu0
    %v547 = vadd.f32 0.0, %v546
    %v548 = vpop.f32.mrf.mxu0
    %549 = vdwg.mxu0
    %v550 = vadd.f32 %v477, %v547
    %v551 = vxor.u32 %v550, 2147483648
    %v552 = vmul.f32 %v551, 1.442695
    %v553 = vpow.pop %v552
    %v554 = vadd.f32 %v553, 1.0
    %v555 = vrcp.pop %v554
    %v556 = vmul.f32 1.0, %v555
    %v557 = vtanh.pop %v550
    %v558 = vmul.f32 %v556, %v465
    %560 = vrot.lane.b32.xlu0 %v557, 64
    %v561 = vpop.permute.xlu0 %560
    %v563 = vmul.f32 %v556, %v561
    %565 = vrot.lane.b32.xlu0 %v563, 32
    %v566 = vpop.permute.xlu0 %565
    %v568 = vadd.f32 %v558, %v566
    %v569 = vtanh.pop %v568
    %571 = vrot.lane.b32.xlu0 %v569, 64
    %v572 = vpop.permute.xlu0 %571
    %v574 = vmul.f32 %v556, %v572
    %576 = vrot.lane.b32.xlu0 %v574, 32
    %v577 = vpop.permute.xlu0 %576
    %579 = vst.msk [vmem:[#allocation3 + $0x6] sm:$0x3] %vm264, %v577
    %v580 = vld [vmem:[#allocation2 + $0x8] sm:$0x3]
    %v581 = vsel %vm267, %v577, 0
    %583 = vmatprep.subr.mxu0 0.0
    %584 = vmatpush1.msra.mxu0 0.0
    %585 = vmatprep.subr.mxu0 0.0
    %586 = vmatpush1.msra.mxu0 0.0
    %587 = vmatprep.subr.mxu0 0.0
    %588 = vmatpush1.msra.mxu0 0.0
    %589 = vmatprep.subr.mxu0 0.0
    %590 = vmatpush1.msra.mxu0 0.0
    %591 = vmatprep.subr.mxu0 0.0
    %592 = vmatpush1.msra.mxu0 0.0
    %593 = vmatprep.subr.mxu0 0.0
    %594 = vmatpush1.msra.mxu0 0.0
    %595 = vmatprep.subr.mxu0 0.0
    %596 = vmatpush1.msra.mxu0 0.0
    %597 = vmatprep.subr.mxu0 0.0
    %598 = vmatpush1.msra.mxu0 0.0
    %599 = vmatprep.subr.mxu0 0.0
    %600 = vmatpush1.msra.mxu0 0.0
    %601 = vmatprep.subr.mxu0 0.0
    %602 = vmatpush1.msra.mxu0 0.0
    %603 = vmatprep.subr.mxu0 0.0
    %604 = vmatpush1.msra.mxu0 0.0
    %605 = vmatprep.subr.mxu0 0.0
    %606 = vmatpush1.msra.mxu0 0.0
    %607 = vmatprep.subr.mxu0 0.0
    %608 = vmatpush1.msra.mxu0 %v240
    %609 = vmatprep.subr.mxu0 0.0
    %610 = vmatpush1.msra.mxu0 %v239
    %611 = vmatprep.subr.mxu0 0.0
    %612 = vmatpush1.msra.mxu0 %v238
    %613 = vmatprep.subr.mxu0 0.0
    %614 = vmatpush1.msra.mxu0 %v237
    %615 = vmatprep.subr.mxu0 0.0
    %616 = vmatpush2.msra.mxu0 0.0
    %617 = vmatprep.subr.mxu0 0.0
    %618 = vmatpush2.msra.mxu0 0.0
    %619 = vmatprep.subr.mxu0 0.0
    %620 = vmatpush2.msra.mxu0 0.0
    %621 = vmatprep.subr.mxu0 0.0
    %622 = vmatpush2.msra.mxu0 0.0
    %623 = vmatprep.subr.mxu0 0.0
    %624 = vmatpush2.msra.mxu0 0.0
    %625 = vmatprep.subr.mxu0 0.0
    %626 = vmatpush2.msra.mxu0 0.0
    %627 = vmatprep.subr.mxu0 0.0
    %628 = vmatpush2.msra.mxu0 0.0
    %629 = vmatprep.subr.mxu0 0.0
    %630 = vmatpush2.msra.mxu0 0.0
    %631 = vmatprep.subr.mxu0 0.0
    %632 = vmatpush2.msra.mxu0 0.0
    %633 = vmatprep.subr.mxu0 0.0
    %634 = vmatpush2.msra.mxu0 0.0
    %635 = vmatprep.subr.mxu0 0.0
    %636 = vmatpush2.msra.mxu0 0.0
    %637 = vmatprep.subr.mxu0 0.0
    %638 = vmatpush2.msra.mxu0 0.0
    %639 = vmatprep.subr.mxu0 0.0
    %640 = vmatpush2.msra.mxu0 0.0
    %641 = vmatprep.subr.mxu0 0.0
    %642 = vmatpush2.msra.mxu0 0.0
    %643 = vmatprep.subr.mxu0 0.0
    %644 = vmatpush2.msra.mxu0 0.0
    %645 = vmatprep.subr.mxu0 0.0
    %646 = vmatpush2.msra.mxu0 0.0
    %647 = vmatprep.mubr.f32.mxu0 0.0
    %648 = vmatmul.mubr.f32.gmra.mxu0 %v581
    %v649 = vpop.f32.mrf.mxu0
    %v650 = vadd.f32 0.0, %v649
    %v651 = vpop.f32.mrf.mxu0
    %652 = vdwg.mxu0
    %v653 = vadd.f32 %v580, %v650
    %v654 = vxor.u32 %v653, 2147483648
    %v655 = vmul.f32 %v654, 1.442695
    %v656 = vpow.pop %v655
    %v657 = vadd.f32 %v656, 1.0
    %v658 = vrcp.pop %v657
    %v659 = vmul.f32 1.0, %v658
    %v660 = vtanh.pop %v653
    %v661 = vmul.f32 %v659, %v568
    %663 = vrot.lane.b32.xlu0 %v660, 64
    %v664 = vpop.permute.xlu0 %663
    %v666 = vmul.f32 %v659, %v664
    %668 = vrot.lane.b32.xlu0 %v666, 32
    %v669 = vpop.permute.xlu0 %668
    %v671 = vadd.f32 %v661, %v669
    %v672 = vtanh.pop %v671
    %674 = vrot.lane.b32.xlu0 %v672, 64
    %v675 = vpop.permute.xlu0 %674
    %v677 = vmul.f32 %v659, %v675
    %679 = vrot.lane.b32.xlu0 %v677, 32
    %v680 = vpop.permute.xlu0 %679
    %682 = vst.msk [vmem:[#allocation3 + $0x8] sm:$0x3] %vm264, %v680
    %v683 = vld [vmem:[#allocation2 + $0xa] sm:$0x3]
    %v684 = vsel %vm267, %v680, 0
    %686 = vmatprep.subr.mxu0 0.0
    %687 = vmatpush1.msra.mxu0 0.0
    %688 = vmatprep.subr.mxu0 0.0
    %689 = vmatpush1.msra.mxu0 0.0
    %690 = vmatprep.subr.mxu0 0.0
    %691 = vmatpush1.msra.mxu0 0.0
    %692 = vmatprep.subr.mxu0 0.0
    %693 = vmatpush1.msra.mxu0 0.0
    %694 = vmatprep.subr.mxu0 0.0
    %695 = vmatpush1.msra.mxu0 0.0
    %696 = vmatprep.subr.mxu0 0.0
    %697 = vmatpush1.msra.mxu0 0.0
    %698 = vmatprep.subr.mxu0 0.0
    %699 = vmatpush1.msra.mxu0 0.0
    %700 = vmatprep.subr.mxu0 0.0
    %701 = vmatpush1.msra.mxu0 0.0
    %702 = vmatprep.subr.mxu0 0.0
    %703 = vmatpush1.msra.mxu0 0.0
    %704 = vmatprep.subr.mxu0 0.0
    %705 = vmatpush1.msra.mxu0 0.0
    %706 = vmatprep.subr.mxu0 0.0
    %707 = vmatpush1.msra.mxu0 0.0
    %708 = vmatprep.subr.mxu0 0.0
    %709 = vmatpush1.msra.mxu0 0.0
    %710 = vmatprep.subr.mxu0 0.0
    %711 = vmatpush1.msra.mxu0 %v240
    %712 = vmatprep.subr.mxu0 0.0
    %713 = vmatpush1.msra.mxu0 %v239
    %714 = vmatprep.subr.mxu0 0.0
    %715 = vmatpush1.msra.mxu0 %v238
    %716 = vmatprep.subr.mxu0 0.0
    %717 = vmatpush1.msra.mxu0 %v237
    %718 = vmatprep.subr.mxu0 0.0
    %719 = vmatpush2.msra.mxu0 0.0
    %720 = vmatprep.subr.mxu0 0.0
    %721 = vmatpush2.msra.mxu0 0.0
    %722 = vmatprep.subr.mxu0 0.0
    %723 = vmatpush2.msra.mxu0 0.0
    %724 = vmatprep.subr.mxu0 0.0
    %725 = vmatpush2.msra.mxu0 0.0
    %726 = vmatprep.subr.mxu0 0.0
    %727 = vmatpush2.msra.mxu0 0.0
    %728 = vmatprep.subr.mxu0 0.0
    %729 = vmatpush2.msra.mxu0 0.0
    %730 = vmatprep.subr.mxu0 0.0
    %731 = vmatpush2.msra.mxu0 0.0
    %732 = vmatprep.subr.mxu0 0.0
    %733 = vmatpush2.msra.mxu0 0.0
    %734 = vmatprep.subr.mxu0 0.0
    %735 = vmatpush2.msra.mxu0 0.0
    %736 = vmatprep.subr.mxu0 0.0
    %737 = vmatpush2.msra.mxu0 0.0
    %738 = vmatprep.subr.mxu0 0.0
    %739 = vmatpush2.msra.mxu0 0.0
    %740 = vmatprep.subr.mxu0 0.0
    %741 = vmatpush2.msra.mxu0 0.0
    %742 = vmatprep.subr.mxu0 0.0
    %743 = vmatpush2.msra.mxu0 0.0
    %744 = vmatprep.subr.mxu0 0.0
    %745 = vmatpush2.msra.mxu0 0.0
    %746 = vmatprep.subr.mxu0 0.0
    %747 = vmatpush2.msra.mxu0 0.0
    %748 = vmatprep.subr.mxu0 0.0
    %749 = vmatpush2.msra.mxu0 0.0
    %750 = vmatprep.mubr.f32.mxu0 0.0
    %751 = vmatmul.mubr.f32.gmra.mxu0 %v684
    %v752 = vpop.f32.mrf.mxu0
    %v753 = vadd.f32 0.0, %v752
    %v754 = vpop.f32.mrf.mxu0
    %755 = vdwg.mxu0
    %v756 = vadd.f32 %v683, %v753
    %v757 = vxor.u32 %v756, 2147483648
    %v758 = vmul.f32 %v757, 1.442695
    %v759 = vpow.pop %v758
    %v760 = vadd.f32 %v759, 1.0
    %v761 = vrcp.pop %v760
    %v762 = vmul.f32 1.0, %v761
    %v763 = vtanh.pop %v756
    %v764 = vmul.f32 %v762, %v671
    %766 = vrot.lane.b32.xlu0 %v763, 64
    %v767 = vpop.permute.xlu0 %766
    %v769 = vmul.f32 %v762, %v767
    %771 = vrot.lane.b32.xlu0 %v769, 32
    %v772 = vpop.permute.xlu0 %771
    %v774 = vadd.f32 %v764, %v772
    %v775 = vtanh.pop %v774
    %777 = vrot.lane.b32.xlu0 %v775, 64
    %v778 = vpop.permute.xlu0 %777
    %v780 = vmul.f32 %v762, %v778
    %782 = vrot.lane.b32.xlu0 %v780, 32
    %v783 = vpop.permute.xlu0 %782
    %785 = vst.msk [vmem:[#allocation3 + $0xa] sm:$0x3] %vm264, %v783
    %v786 = vld [vmem:[#allocation2 + $0xc] sm:$0x3]
    %v787 = vsel %vm267, %v783, 0
    %789 = vmatprep.subr.mxu0 0.0
    %790 = vmatpush1.msra.mxu0 0.0
    %791 = vmatprep.subr.mxu0 0.0
    %792 = vmatpush1.msra.mxu0 0.0
    %793 = vmatprep.subr.mxu0 0.0
    %794 = vmatpush1.msra.mxu0 0.0
    %795 = vmatprep.subr.mxu0 0.0
    %796 = vmatpush1.msra.mxu0 0.0
    %797 = vmatprep.subr.mxu0 0.0
    %798 = vmatpush1.msra.mxu0 0.0
    %799 = vmatprep.subr.mxu0 0.0
    %800 = vmatpush1.msra.mxu0 0.0
    %801 = vmatprep.subr.mxu0 0.0
    %802 = vmatpush1.msra.mxu0 0.0
    %803 = vmatprep.subr.mxu0 0.0
    %804 = vmatpush1.msra.mxu0 0.0
    %805 = vmatprep.subr.mxu0 0.0
    %806 = vmatpush1.msra.mxu0 0.0
    %807 = vmatprep.subr.mxu0 0.0
    %808 = vmatpush1.msra.mxu0 0.0
    %809 = vmatprep.subr.mxu0 0.0
    %810 = vmatpush1.msra.mxu0 0.0
    %811 = vmatprep.subr.mxu0 0.0
    %812 = vmatpush1.msra.mxu0 0.0
    %813 = vmatprep.subr.mxu0 0.0
    %814 = vmatpush1.msra.mxu0 %v240
    %815 = vmatprep.subr.mxu0 0.0
    %816 = vmatpush1.msra.mxu0 %v239
    %817 = vmatprep.subr.mxu0 0.0
    %818 = vmatpush1.msra.mxu0 %v238
    %819 = vmatprep.subr.mxu0 0.0
    %820 = vmatpush1.msra.mxu0 %v237
    %821 = vmatprep.subr.mxu0 0.0
    %822 = vmatpush2.msra.mxu0 0.0
    %823 = vmatprep.subr.mxu0 0.0
    %824 = vmatpush2.msra.mxu0 0.0
    %825 = vmatprep.subr.mxu0 0.0
    %826 = vmatpush2.msra.mxu0 0.0
    %827 = vmatprep.subr.mxu0 0.0
    %828 = vmatpush2.msra.mxu0 0.0
    %829 = vmatprep.subr.mxu0 0.0
    %830 = vmatpush2.msra.mxu0 0.0
    %831 = vmatprep.subr.mxu0 0.0
    %832 = vmatpush2.msra.mxu0 0.0
    %833 = vmatprep.subr.mxu0 0.0
    %834 = vmatpush2.msra.mxu0 0.0
    %835 = vmatprep.subr.mxu0 0.0
    %836 = vmatpush2.msra.mxu0 0.0
    %837 = vmatprep.subr.mxu0 0.0
    %838 = vmatpush2.msra.mxu0 0.0
    %839 = vmatprep.subr.mxu0 0.0
    %840 = vmatpush2.msra.mxu0 0.0
    %841 = vmatprep.subr.mxu0 0.0
    %842 = vmatpush2.msra.mxu0 0.0
    %843 = vmatprep.subr.mxu0 0.0
    %844 = vmatpush2.msra.mxu0 0.0
    %845 = vmatprep.subr.mxu0 0.0
    %846 = vmatpush2.msra.mxu0 0.0
    %847 = vmatprep.subr.mxu0 0.0
    %848 = vmatpush2.msra.mxu0 0.0
    %849 = vmatprep.subr.mxu0 0.0
    %850 = vmatpush2.msra.mxu0 0.0
    %851 = vmatprep.subr.mxu0 0.0
    %852 = vmatpush2.msra.mxu0 0.0
    %853 = vmatprep.mubr.f32.mxu0 0.0
    %854 = vmatmul.mubr.f32.gmra.mxu0 %v787
    %v855 = vpop.f32.mrf.mxu0
    %v856 = vadd.f32 0.0, %v855
    %v857 = vpop.f32.mrf.mxu0
    %858 = vdwg.mxu0
    %v859 = vadd.f32 %v786, %v856
    %v860 = vxor.u32 %v859, 2147483648
    %v861 = vmul.f32 %v860, 1.442695
    %v862 = vpow.pop %v861
    %v863 = vadd.f32 %v862, 1.0
    %v864 = vrcp.pop %v863
    %v865 = vmul.f32 1.0, %v864
    %v866 = vtanh.pop %v859
    %v867 = vmul.f32 %v865, %v774
    %869 = vrot.lane.b32.xlu0 %v866, 64
    %v870 = vpop.permute.xlu0 %869
    %v872 = vmul.f32 %v865, %v870
    %874 = vrot.lane.b32.xlu0 %v872, 32
    %v875 = vpop.permute.xlu0 %874
    %v877 = vadd.f32 %v867, %v875
    %v878 = vtanh.pop %v877
    %880 = vrot.lane.b32.xlu0 %v878, 64
    %v881 = vpop.permute.xlu0 %880
    %v883 = vmul.f32 %v865, %v881
    %885 = vrot.lane.b32.xlu0 %v883, 32
    %v886 = vpop.permute.xlu0 %885
    %888 = vst.msk [vmem:[#allocation3 + $0xc] sm:$0x3] %vm264, %v886
    %v889 = vld [vmem:[#allocation2 + $0xe] sm:$0x3]
    %v890 = vsel %vm267, %v886, 0
    %892 = vmatprep.subr.mxu0 0.0
    %893 = vmatpush1.msra.mxu0 0.0
    %894 = vmatprep.subr.mxu0 0.0
    %895 = vmatpush1.msra.mxu0 0.0
    %896 = vmatprep.subr.mxu0 0.0
    %897 = vmatpush1.msra.mxu0 0.0
    %898 = vmatprep.subr.mxu0 0.0
    %899 = vmatpush1.msra.mxu0 0.0
    %900 = vmatprep.subr.mxu0 0.0
    %901 = vmatpush1.msra.mxu0 0.0
    %902 = vmatprep.subr.mxu0 0.0
    %903 = vmatpush1.msra.mxu0 0.0
    %904 = vmatprep.subr.mxu0 0.0
    %905 = vmatpush1.msra.mxu0 0.0
    %906 = vmatprep.subr.mxu0 0.0
    %907 = vmatpush1.msra.mxu0 0.0
    %908 = vmatprep.subr.mxu0 0.0
    %909 = vmatpush1.msra.mxu0 0.0
    %910 = vmatprep.subr.mxu0 0.0
    %911 = vmatpush1.msra.mxu0 0.0
    %912 = vmatprep.subr.mxu0 0.0
    %913 = vmatpush1.msra.mxu0 0.0
    %914 = vmatprep.subr.mxu0 0.0
    %915 = vmatpush1.msra.mxu0 0.0
    %916 = vmatprep.subr.mxu0 0.0
    %917 = vmatpush1.msra.mxu0 %v240
    %918 = vmatprep.subr.mxu0 0.0
    %919 = vmatpush1.msra.mxu0 %v239
    %920 = vmatprep.subr.mxu0 0.0
    %921 = vmatpush1.msra.mxu0 %v238
    %922 = vmatprep.subr.mxu0 0.0
    %923 = vmatpush1.msra.mxu0 %v237
    %924 = vmatprep.subr.mxu0 0.0
    %925 = vmatpush2.msra.mxu0 0.0
    %926 = vmatprep.subr.mxu0 0.0
    %927 = vmatpush2.msra.mxu0 0.0
    %928 = vmatprep.subr.mxu0 0.0
    %929 = vmatpush2.msra.mxu0 0.0
    %930 = vmatprep.subr.mxu0 0.0
    %931 = vmatpush2.msra.mxu0 0.0
    %932 = vmatprep.subr.mxu0 0.0
    %933 = vmatpush2.msra.mxu0 0.0
    %934 = vmatprep.subr.mxu0 0.0
    %935 = vmatpush2.msra.mxu0 0.0
    %936 = vmatprep.subr.mxu0 0.0
    %937 = vmatpush2.msra.mxu0 0.0
    %938 = vmatprep.subr.mxu0 0.0
    %939 = vmatpush2.msra.mxu0 0.0
    %940 = vmatprep.subr.mxu0 0.0
    %941 = vmatpush2.msra.mxu0 0.0
    %942 = vmatprep.subr.mxu0 0.0
    %943 = vmatpush2.msra.mxu0 0.0
    %944 = vmatprep.subr.mxu0 0.0
    %945 = vmatpush2.msra.mxu0 0.0
    %946 = vmatprep.subr.mxu0 0.0
    %947 = vmatpush2.msra.mxu0 0.0
    %948 = vmatprep.subr.mxu0 0.0
    %949 = vmatpush2.msra.mxu0 0.0
    %950 = vmatprep.subr.mxu0 0.0
    %951 = vmatpush2.msra.mxu0 0.0
    %952 = vmatprep.subr.mxu0 0.0
    %953 = vmatpush2.msra.mxu0 0.0
    %954 = vmatprep.subr.mxu0 0.0
    %955 = vmatpush2.msra.mxu0 0.0
    %956 = vmatprep.mubr.f32.mxu0 0.0
    %957 = vmatmul.mubr.f32.gmra.mxu0 %v890
    %v958 = vpop.f32.mrf.mxu0
    %v959 = vadd.f32 0.0, %v958
    %v960 = vpop.f32.mrf.mxu0
    %961 = vdwg.mxu0
    %v962 = vadd.f32 %v889, %v959
    %v963 = vxor.u32 %v962, 2147483648
    %v964 = vmul.f32 %v963, 1.442695
    %v965 = vpow.pop %v964
    %v966 = vadd.f32 %v965, 1.0
    %v967 = vrcp.pop %v966
    %v968 = vmul.f32 1.0, %v967
    %v969 = vtanh.pop %v962
    %v970 = vmul.f32 %v968, %v877
    %972 = vrot.lane.b32.xlu0 %v969, 64
    %v973 = vpop.permute.xlu0 %972
    %v975 = vmul.f32 %v968, %v973
    %977 = vrot.lane.b32.xlu0 %v975, 32
    %v978 = vpop.permute.xlu0 %977
    %v980 = vadd.f32 %v970, %v978
    %v981 = vtanh.pop %v980
    %983 = vrot.lane.b32.xlu0 %v981, 64
    %v984 = vpop.permute.xlu0 %983
    %v986 = vmul.f32 %v968, %v984
    %988 = vrot.lane.b32.xlu0 %v986, 32
    %v989 = vpop.permute.xlu0 %988
    %991 = vst.msk [vmem:[#allocation3 + $0xe] sm:$0x3] %vm264, %v989
    %v992 = vld [vmem:[#allocation3] sm:$0xff]
    %v993 = vld [vmem:[#allocation3 + $0x8] sm:$0xff]
    %v994 = vld [vmem:[%s4] sm:$0xff]
    %v995 = vld [vmem:[%s4 + $0x8] sm:$0xff]
    %v996 = vld [vmem:[%s4 + $0x10] sm:$0xff]
    %v997 = vld [vmem:[%s4 + $0x18] sm:$0xff]
    %v998 = vld [vmem:[%s6] sm:$0x1]
    %v1000 = vlaneseq
    %v1001 = vshrl.u32 %v1000, 7
    %v1002 = vsub.s32 0, %v1001
    %v1003 = vrot.slane %v998, %v1002
    %v1006 = vsel %vm267, %v992, 0
    %v1009 = vsel %vm267, %v993, 0
    %1011 = vmatprep.subr.mxu0 0.0
    %1012 = vmatpush1.msra.mxu0 0.0
    %1013 = vmatprep.subr.mxu0 0.0
    %1014 = vmatpush1.msra.mxu0 0.0
    %1015 = vmatprep.subr.mxu0 0.0
    %1016 = vmatpush1.msra.mxu0 0.0
    %1017 = vmatprep.subr.mxu0 0.0
    %1018 = vmatpush1.msra.mxu0 0.0
    %1019 = vmatprep.subr.mxu0 0.0
    %1020 = vmatpush1.msra.mxu0 0.0
    %1021 = vmatprep.subr.mxu0 0.0
    %1022 = vmatpush1.msra.mxu0 0.0
    %1023 = vmatprep.subr.mxu0 0.0
    %1024 = vmatpush1.msra.mxu0 0.0
    %1025 = vmatprep.subr.mxu0 0.0
    %1026 = vmatpush1.msra.mxu0 0.0
    %1027 = vmatprep.subr.mxu0 0.0
    %1028 = vmatpush1.msra.mxu0 0.0
    %1029 = vmatprep.subr.mxu0 0.0
    %1030 = vmatpush1.msra.mxu0 0.0
    %1031 = vmatprep.subr.mxu0 0.0
    %1032 = vmatpush1.msra.mxu0 0.0
    %1033 = vmatprep.subr.mxu0 0.0
    %1034 = vmatpush1.msra.mxu0 0.0
    %1035 = vmatprep.subr.mxu0 0.0
    %1036 = vmatpush1.msra.mxu0 %v997
    %1037 = vmatprep.subr.mxu0 0.0
    %1038 = vmatpush1.msra.mxu0 %v996
    %1039 = vmatprep.subr.mxu0 0.0
    %1040 = vmatpush1.msra.mxu0 %v995
    %1041 = vmatprep.subr.mxu0 0.0
    %1042 = vmatpush1.msra.mxu0 %v994
    %1043 = vmatprep.subr.mxu0 0.0
    %1044 = vmatpush2.msra.mxu0 0.0
    %1045 = vmatprep.subr.mxu0 0.0
    %1046 = vmatpush2.msra.mxu0 0.0
    %1047 = vmatprep.subr.mxu0 0.0
    %1048 = vmatpush2.msra.mxu0 0.0
    %1049 = vmatprep.subr.mxu0 0.0
    %1050 = vmatpush2.msra.mxu0 0.0
    %1051 = vmatprep.subr.mxu0 0.0
    %1052 = vmatpush2.msra.mxu0 0.0
    %1053 = vmatprep.subr.mxu0 0.0
    %1054 = vmatpush2.msra.mxu0 0.0
    %1055 = vmatprep.subr.mxu0 0.0
    %1056 = vmatpush2.msra.mxu0 0.0
    %1057 = vmatprep.subr.mxu0 0.0
    %1058 = vmatpush2.msra.mxu0 0.0
    %1059 = vmatprep.subr.mxu0 0.0
    %1060 = vmatpush2.msra.mxu0 0.0
    %1061 = vmatprep.subr.mxu0 0.0
    %1062 = vmatpush2.msra.mxu0 0.0
    %1063 = vmatprep.subr.mxu0 0.0
    %1064 = vmatpush2.msra.mxu0 0.0
    %1065 = vmatprep.subr.mxu0 0.0
    %1066 = vmatpush2.msra.mxu0 0.0
    %1067 = vmatprep.subr.mxu0 0.0
    %1068 = vmatpush2.msra.mxu0 0.0
    %1069 = vmatprep.subr.mxu0 0.0
    %1070 = vmatpush2.msra.mxu0 0.0
    %1071 = vmatprep.subr.mxu0 0.0
    %1072 = vmatpush2.msra.mxu0 0.0
    %1073 = vmatprep.subr.mxu0 0.0
    %1074 = vmatpush2.msra.mxu0 0.0
    %1075 = vmatprep.mubr.f32.mxu0 0.0
    %1076 = vmatmul.mubr.f32.gmra.mxu0 %v1006
    %v1077 = vpop.f32.mrf.mxu0
    %v1078 = vadd.f32 %v1003, %v1077
    %v1079 = vpop.f32.mrf.mxu0
    %1080 = vmatprep.mubr.f32.mxu0 0.0
    %1081 = vmatmul.mubr.f32.gmra.mxu0 %v1009
    %v1082 = vpop.f32.mrf.mxu0
    %v1083 = vadd.f32 %v1003, %v1082
    %v1084 = vpop.f32.mrf.mxu0
    %1085 = vdwg.mxu0
    %1086 = vst [vmem:[#allocation2] sm:$0xff] %v1078
    %1087 = vst [vmem:[#allocation2 + $0x8] sm:$0xff] %v1083
    %v1088 = vld [vmem:[#allocation9] sm:$0xff]
    %v1089 = vld [vmem:[#allocation9 + $0x8] sm:$0xff]
    %v1090 = vld [vmem:[#allocation9 + $0x10] sm:$0xff]
    %v1091 = vld [vmem:[#allocation9 + $0x18] sm:$0xff]
    %v1092 = vld [vmem:[#allocation2] sm:$0x3]
    %v1093 = vxor.u32 %v1092, 2147483648
    %v1094 = vmul.f32 %v1093, 1.442695
    %v1095 = vpow.pop %v1094
    %v1096 = vadd.f32 %v1095, 1.0
    %v1097 = vrcp.pop %v1096
    %v1098 = vmul.f32 1.0, %v1097
    %v1099 = vtanh.pop %v1092
    %1101 = vrot.lane.b32.xlu0 %v1099, 64
    %v1102 = vpop.permute.xlu0 %1101
    %v1104 = vmul.f32 %v1098, %v1102
    %v1105 = vtanh.pop %v1104
    %1107 = vrot.lane.b32.xlu0 %v1105, 96
    %v1108 = vpop.permute.xlu0 %1107
    %v1110 = vmul.f32 %v1098, %v1108
    %1112 = vrot.lane.b32.xlu0 %v1110, 32
    %v1113 = vpop.permute.xlu0 %1112
    %1115 = vst.msk [vmem:[#allocation3] sm:$0x3] %vm264, %v1113
    %v1116 = vld [vmem:[#allocation2 + $0x2] sm:$0x3]
    %v1117 = vsel %vm267, %v1113, 0
    %1119 = vmatprep.subr.mxu0 0.0
    %1120 = vmatpush1.msra.mxu0 0.0
    %1121 = vmatprep.subr.mxu0 0.0
    %1122 = vmatpush1.msra.mxu0 0.0
    %1123 = vmatprep.subr.mxu0 0.0
    %1124 = vmatpush1.msra.mxu0 0.0
    %1125 = vmatprep.subr.mxu0 0.0
    %1126 = vmatpush1.msra.mxu0 0.0
    %1127 = vmatprep.subr.mxu0 0.0
    %1128 = vmatpush1.msra.mxu0 0.0
    %1129 = vmatprep.subr.mxu0 0.0
    %1130 = vmatpush1.msra.mxu0 0.0
    %1131 = vmatprep.subr.mxu0 0.0
    %1132 = vmatpush1.msra.mxu0 0.0
    %1133 = vmatprep.subr.mxu0 0.0
    %1134 = vmatpush1.msra.mxu0 0.0
    %1135 = vmatprep.subr.mxu0 0.0
    %1136 = vmatpush1.msra.mxu0 0.0
    %1137 = vmatprep.subr.mxu0 0.0
    %1138 = vmatpush1.msra.mxu0 0.0
    %1139 = vmatprep.subr.mxu0 0.0
    %1140 = vmatpush1.msra.mxu0 0.0
    %1141 = vmatprep.subr.mxu0 0.0
    %1142 = vmatpush1.msra.mxu0 0.0
    %1143 = vmatprep.subr.mxu0 0.0
    %1144 = vmatpush1.msra.mxu0 %v1091
    %1145 = vmatprep.subr.mxu0 0.0
    %1146 = vmatpush1.msra.mxu0 %v1090
    %1147 = vmatprep.subr.mxu0 0.0
    %1148 = vmatpush1.msra.mxu0 %v1089
    %1149 = vmatprep.subr.mxu0 0.0
    %1150 = vmatpush1.msra.mxu0 %v1088
    %1151 = vmatprep.subr.mxu0 0.0
    %1152 = vmatpush2.msra.mxu0 0.0
    %1153 = vmatprep.subr.mxu0 0.0
    %1154 = vmatpush2.msra.mxu0 0.0
    %1155 = vmatprep.subr.mxu0 0.0
    %1156 = vmatpush2.msra.mxu0 0.0
    %1157 = vmatprep.subr.mxu0 0.0
    %1158 = vmatpush2.msra.mxu0 0.0
    %1159 = vmatprep.subr.mxu0 0.0
    %1160 = vmatpush2.msra.mxu0 0.0
    %1161 = vmatprep.subr.mxu0 0.0
    %1162 = vmatpush2.msra.mxu0 0.0
    %1163 = vmatprep.subr.mxu0 0.0
    %1164 = vmatpush2.msra.mxu0 0.0
    %1165 = vmatprep.subr.mxu0 0.0
    %1166 = vmatpush2.msra.mxu0 0.0
    %1167 = vmatprep.subr.mxu0 0.0
    %1168 = vmatpush2.msra.mxu0 0.0
    %1169 = vmatprep.subr.mxu0 0.0
    %1170 = vmatpush2.msra.mxu0 0.0
    %1171 = vmatprep.subr.mxu0 0.0
    %1172 = vmatpush2.msra.mxu0 0.0
    %1173 = vmatprep.subr.mxu0 0.0
    %1174 = vmatpush2.msra.mxu0 0.0
    %1175 = vmatprep.subr.mxu0 0.0
    %1176 = vmatpush2.msra.mxu0 0.0
    %1177 = vmatprep.subr.mxu0 0.0
    %1178 = vmatpush2.msra.mxu0 0.0
    %1179 = vmatprep.subr.mxu0 0.0
    %1180 = vmatpush2.msra.mxu0 0.0
    %1181 = vmatprep.subr.mxu0 0.0
    %1182 = vmatpush2.msra.mxu0 0.0
    %1183 = vmatprep.mubr.f32.mxu0 0.0
    %1184 = vmatmul.mubr.f32.gmra.mxu0 %v1117
    %v1185 = vpop.f32.mrf.mxu0
    %v1186 = vadd.f32 0.0, %v1185
    %v1187 = vpop.f32.mrf.mxu0
    %1188 = vdwg.mxu0
    %v1189 = vadd.f32 %v1116, %v1186
    %v1190 = vxor.u32 %v1189, 2147483648
    %v1191 = vmul.f32 %v1190, 1.442695
    %v1192 = vpow.pop %v1191
    %v1193 = vadd.f32 %v1192, 1.0
    %v1194 = vrcp.pop %v1193
    %v1195 = vmul.f32 1.0, %v1194
    %v1196 = vtanh.pop %v1189
    %1198 = vrot.lane.b32.xlu0 %v1104, 32
    %v1199 = vpop.permute.xlu0 %1198
    %v1201 = vmul.f32 %v1195, %v1199
    %1203 = vrot.lane.b32.xlu0 %v1196, 64
    %v1204 = vpop.permute.xlu0 %1203
    %v1206 = vmul.f32 %v1195, %v1204
    %1208 = vrot.lane.b32.xlu0 %v1206, 32
    %v1209 = vpop.permute.xlu0 %1208
    %v1211 = vadd.f32 %v1201, %v1209
    %v1212 = vtanh.pop %v1211
    %1214 = vrot.lane.b32.xlu0 %v1212, 64
    %v1215 = vpop.permute.xlu0 %1214
    %v1217 = vmul.f32 %v1195, %v1215
    %1219 = vrot.lane.b32.xlu0 %v1217, 32
    %v1220 = vpop.permute.xlu0 %1219
    %1222 = vst.msk [vmem:[#allocation3 + $0x2] sm:$0x3] %vm264, %v1220
    %v1223 = vld [vmem:[#allocation2 + $0x4] sm:$0x3]
    %v1224 = vsel %vm267, %v1220, 0
    %1226 = vmatprep.subr.mxu0 0.0
    %1227 = vmatpush1.msra.mxu0 0.0
    %1228 = vmatprep.subr.mxu0 0.0
    %1229 = vmatpush1.msra.mxu0 0.0
    %1230 = vmatprep.subr.mxu0 0.0
    %1231 = vmatpush1.msra.mxu0 0.0
    %1232 = vmatprep.subr.mxu0 0.0
    %1233 = vmatpush1.msra.mxu0 0.0
    %1234 = vmatprep.subr.mxu0 0.0
    %1235 = vmatpush1.msra.mxu0 0.0
    %1236 = vmatprep.subr.mxu0 0.0
    %1237 = vmatpush1.msra.mxu0 0.0
    %1238 = vmatprep.subr.mxu0 0.0
    %1239 = vmatpush1.msra.mxu0 0.0
    %1240 = vmatprep.subr.mxu0 0.0
    %1241 = vmatpush1.msra.mxu0 0.0
    %1242 = vmatprep.subr.mxu0 0.0
    %1243 = vmatpush1.msra.mxu0 0.0
    %1244 = vmatprep.subr.mxu0 0.0
    %1245 = vmatpush1.msra.mxu0 0.0
    %1246 = vmatprep.subr.mxu0 0.0
    %1247 = vmatpush1.msra.mxu0 0.0
    %1248 = vmatprep.subr.mxu0 0.0
    %1249 = vmatpush1.msra.mxu0 0.0
    %1250 = vmatprep.subr.mxu0 0.0
    %1251 = vmatpush1.msra.mxu0 %v1091
    %1252 = vmatprep.subr.mxu0 0.0
    %1253 = vmatpush1.msra.mxu0 %v1090
    %1254 = vmatprep.subr.mxu0 0.0
    %1255 = vmatpush1.msra.mxu0 %v1089
    %1256 = vmatprep.subr.mxu0 0.0
    %1257 = vmatpush1.msra.mxu0 %v1088
    %1258 = vmatprep.subr.mxu0 0.0
    %1259 = vmatpush2.msra.mxu0 0.0
    %1260 = vmatprep.subr.mxu0 0.0
    %1261 = vmatpush2.msra.mxu0 0.0
    %1262 = vmatprep.subr.mxu0 0.0
    %1263 = vmatpush2.msra.mxu0 0.0
    %1264 = vmatprep.subr.mxu0 0.0
    %1265 = vmatpush2.msra.mxu0 0.0
    %1266 = vmatprep.subr.mxu0 0.0
    %1267 = vmatpush2.msra.mxu0 0.0
    %1268 = vmatprep.subr.mxu0 0.0
    %1269 = vmatpush2.msra.mxu0 0.0
    %1270 = vmatprep.subr.mxu0 0.0
    %1271 = vmatpush2.msra.mxu0 0.0
    %1272 = vmatprep.subr.mxu0 0.0
    %1273 = vmatpush2.msra.mxu0 0.0
    %1274 = vmatprep.subr.mxu0 0.0
    %1275 = vmatpush2.msra.mxu0 0.0
    %1276 = vmatprep.subr.mxu0 0.0
    %1277 = vmatpush2.msra.mxu0 0.0
    %1278 = vmatprep.subr.mxu0 0.0
    %1279 = vmatpush2.msra.mxu0 0.0
    %1280 = vmatprep.subr.mxu0 0.0
    %1281 = vmatpush2.msra.mxu0 0.0
    %1282 = vmatprep.subr.mxu0 0.0
    %1283 = vmatpush2.msra.mxu0 0.0
    %1284 = vmatprep.subr.mxu0 0.0
    %1285 = vmatpush2.msra.mxu0 0.0
    %1286 = vmatprep.subr.mxu0 0.0
    %1287 = vmatpush2.msra.mxu0 0.0
    %1288 = vmatprep.subr.mxu0 0.0
    %1289 = vmatpush2.msra.mxu0 0.0
    %1290 = vmatprep.mubr.f32.mxu0 0.0
    %1291 = vmatmul.mubr.f32.gmra.mxu0 %v1224
    %v1292 = vpop.f32.mrf.mxu0
    %v1293 = vadd.f32 0.0, %v1292
    %v1294 = vpop.f32.mrf.mxu0
    %1295 = vdwg.mxu0
    %v1296 = vadd.f32 %v1223, %v1293
    %v1297 = vxor.u32 %v1296, 2147483648
    %v1298 = vmul.f32 %v1297, 1.442695
    %v1299 = vpow.pop %v1298
    %v1300 = vadd.f32 %v1299, 1.0
    %v1301 = vrcp.pop %v1300
    %v1302 = vmul.f32 1.0, %v1301
    %v1303 = vtanh.pop %v1296
    %v1304 = vmul.f32 %v1302, %v1211
    %1306 = vrot.lane.b32.xlu0 %v1303, 64
    %v1307 = vpop.permute.xlu0 %1306
    %v1309 = vmul.f32 %v1302, %v1307
    %1311 = vrot.lane.b32.xlu0 %v1309, 32
    %v1312 = vpop.permute.xlu0 %1311
    %v1314 = vadd.f32 %v1304, %v1312
    %v1315 = vtanh.pop %v1314
    %1317 = vrot.lane.b32.xlu0 %v1315, 64
    %v1318 = vpop.permute.xlu0 %1317
    %v1320 = vmul.f32 %v1302, %v1318
    %1322 = vrot.lane.b32.xlu0 %v1320, 32
    %v1323 = vpop.permute.xlu0 %1322
    %1325 = vst.msk [vmem:[#allocation3 + $0x4] sm:$0x3] %vm264, %v1323
    %v1326 = vld [vmem:[#allocation2 + $0x6] sm:$0x3]
    %v1327 = vsel %vm267, %v1323, 0
    %1329 = vmatprep.subr.mxu0 0.0
    %1330 = vmatpush1.msra.mxu0 0.0
    %1331 = vmatprep.subr.mxu0 0.0
    %1332 = vmatpush1.msra.mxu0 0.0
    %1333 = vmatprep.subr.mxu0 0.0
    %1334 = vmatpush1.msra.mxu0 0.0
    %1335 = vmatprep.subr.mxu0 0.0
    %1336 = vmatpush1.msra.mxu0 0.0
    %1337 = vmatprep.subr.mxu0 0.0
    %1338 = vmatpush1.msra.mxu0 0.0
    %1339 = vmatprep.subr.mxu0 0.0
    %1340 = vmatpush1.msra.mxu0 0.0
    %1341 = vmatprep.subr.mxu0 0.0
    %1342 = vmatpush1.msra.mxu0 0.0
    %1343 = vmatprep.subr.mxu0 0.0
    %1344 = vmatpush1.msra.mxu0 0.0
    %1345 = vmatprep.subr.mxu0 0.0
    %1346 = vmatpush1.msra.mxu0 0.0
    %1347 = vmatprep.subr.mxu0 0.0
    %1348 = vmatpush1.msra.mxu0 0.0
    %1349 = vmatprep.subr.mxu0 0.0
    %1350 = vmatpush1.msra.mxu0 0.0
    %1351 = vmatprep.subr.mxu0 0.0
    %1352 = vmatpush1.msra.mxu0 0.0
    %1353 = vmatprep.subr.mxu0 0.0
    %1354 = vmatpush1.msra.mxu0 %v1091
    %1355 = vmatprep.subr.mxu0 0.0
    %1356 = vmatpush1.msra.mxu0 %v1090
    %1357 = vmatprep.subr.mxu0 0.0
    %1358 = vmatpush1.msra.mxu0 %v1089
    %1359 = vmatprep.subr.mxu0 0.0
    %1360 = vmatpush1.msra.mxu0 %v1088
    %1361 = vmatprep.subr.mxu0 0.0
    %1362 = vmatpush2.msra.mxu0 0.0
    %1363 = vmatprep.subr.mxu0 0.0
    %1364 = vmatpush2.msra.mxu0 0.0
    %1365 = vmatprep.subr.mxu0 0.0
    %1366 = vmatpush2.msra.mxu0 0.0
    %1367 = vmatprep.subr.mxu0 0.0
    %1368 = vmatpush2.msra.mxu0 0.0
    %1369 = vmatprep.subr.mxu0 0.0
    %1370 = vmatpush2.msra.mxu0 0.0
    %1371 = vmatprep.subr.mxu0 0.0
    %1372 = vmatpush2.msra.mxu0 0.0
    %1373 = vmatprep.subr.mxu0 0.0
    %1374 = vmatpush2.msra.mxu0 0.0
    %1375 = vmatprep.subr.mxu0 0.0
    %1376 = vmatpush2.msra.mxu0 0.0
    %1377 = vmatprep.subr.mxu0 0.0
    %1378 = vmatpush2.msra.mxu0 0.0
    %1379 = vmatprep.subr.mxu0 0.0
    %1380 = vmatpush2.msra.mxu0 0.0
    %1381 = vmatprep.subr.mxu0 0.0
    %1382 = vmatpush2.msra.mxu0 0.0
    %1383 = vmatprep.subr.mxu0 0.0
    %1384 = vmatpush2.msra.mxu0 0.0
    %1385 = vmatprep.subr.mxu0 0.0
    %1386 = vmatpush2.msra.mxu0 0.0
    %1387 = vmatprep.subr.mxu0 0.0
    %1388 = vmatpush2.msra.mxu0 0.0
    %1389 = vmatprep.subr.mxu0 0.0
    %1390 = vmatpush2.msra.mxu0 0.0
    %1391 = vmatprep.subr.mxu0 0.0
    %1392 = vmatpush2.msra.mxu0 0.0
    %1393 = vmatprep.mubr.f32.mxu0 0.0
    %1394 = vmatmul.mubr.f32.gmra.mxu0 %v1327
    %v1395 = vpop.f32.mrf.mxu0
    %v1396 = vadd.f32 0.0, %v1395
    %v1397 = vpop.f32.mrf.mxu0
    %1398 = vdwg.mxu0
    %v1399 = vadd.f32 %v1326, %v1396
    %v1400 = vxor.u32 %v1399, 2147483648
    %v1401 = vmul.f32 %v1400, 1.442695
    %v1402 = vpow.pop %v1401
    %v1403 = vadd.f32 %v1402, 1.0
    %v1404 = vrcp.pop %v1403
    %v1405 = vmul.f32 1.0, %v1404
    %v1406 = vtanh.pop %v1399
    %v1407 = vmul.f32 %v1405, %v1314
    %1409 = vrot.lane.b32.xlu0 %v1406, 64
    %v1410 = vpop.permute.xlu0 %1409
    %v1412 = vmul.f32 %v1405, %v1410
    %1414 = vrot.lane.b32.xlu0 %v1412, 32
    %v1415 = vpop.permute.xlu0 %1414
    %v1417 = vadd.f32 %v1407, %v1415
    %v1418 = vtanh.pop %v1417
    %1420 = vrot.lane.b32.xlu0 %v1418, 64
    %v1421 = vpop.permute.xlu0 %1420
    %v1423 = vmul.f32 %v1405, %v1421
    %1425 = vrot.lane.b32.xlu0 %v1423, 32
    %v1426 = vpop.permute.xlu0 %1425
    %1428 = vst.msk [vmem:[#allocation3 + $0x6] sm:$0x3] %vm264, %v1426
    %v1429 = vld [vmem:[#allocation2 + $0x8] sm:$0x3]
    %v1430 = vsel %vm267, %v1426, 0
    %1432 = vmatprep.subr.mxu0 0.0
    %1433 = vmatpush1.msra.mxu0 0.0
    %1434 = vmatprep.subr.mxu0 0.0
    %1435 = vmatpush1.msra.mxu0 0.0
    %1436 = vmatprep.subr.mxu0 0.0
    %1437 = vmatpush1.msra.mxu0 0.0
    %1438 = vmatprep.subr.mxu0 0.0
    %1439 = vmatpush1.msra.mxu0 0.0
    %1440 = vmatprep.subr.mxu0 0.0
    %1441 = vmatpush1.msra.mxu0 0.0
    %1442 = vmatprep.subr.mxu0 0.0
    %1443 = vmatpush1.msra.mxu0 0.0
    %1444 = vmatprep.subr.mxu0 0.0
    %1445 = vmatpush1.msra.mxu0 0.0
    %1446 = vmatprep.subr.mxu0 0.0
    %1447 = vmatpush1.msra.mxu0 0.0
    %1448 = vmatprep.subr.mxu0 0.0
    %1449 = vmatpush1.msra.mxu0 0.0
    %1450 = vmatprep.subr.mxu0 0.0
    %1451 = vmatpush1.msra.mxu0 0.0
    %1452 = vmatprep.subr.mxu0 0.0
    %1453 = vmatpush1.msra.mxu0 0.0
    %1454 = vmatprep.subr.mxu0 0.0
    %1455 = vmatpush1.msra.mxu0 0.0
    %1456 = vmatprep.subr.mxu0 0.0
    %1457 = vmatpush1.msra.mxu0 %v1091
    %1458 = vmatprep.subr.mxu0 0.0
    %1459 = vmatpush1.msra.mxu0 %v1090
    %1460 = vmatprep.subr.mxu0 0.0
    %1461 = vmatpush1.msra.mxu0 %v1089
    %1462 = vmatprep.subr.mxu0 0.0
    %1463 = vmatpush1.msra.mxu0 %v1088
    %1464 = vmatprep.subr.mxu0 0.0
    %1465 = vmatpush2.msra.mxu0 0.0
    %1466 = vmatprep.subr.mxu0 0.0
    %1467 = vmatpush2.msra.mxu0 0.0
    %1468 = vmatprep.subr.mxu0 0.0
    %1469 = vmatpush2.msra.mxu0 0.0
    %1470 = vmatprep.subr.mxu0 0.0
    %1471 = vmatpush2.msra.mxu0 0.0
    %1472 = vmatprep.subr.mxu0 0.0
    %1473 = vmatpush2.msra.mxu0 0.0
    %1474 = vmatprep.subr.mxu0 0.0
    %1475 = vmatpush2.msra.mxu0 0.0
    %1476 = vmatprep.subr.mxu0 0.0
    %1477 = vmatpush2.msra.mxu0 0.0
    %1478 = vmatprep.subr.mxu0 0.0
    %1479 = vmatpush2.msra.mxu0 0.0
    %1480 = vmatprep.subr.mxu0 0.0
    %1481 = vmatpush2.msra.mxu0 0.0
    %1482 = vmatprep.subr.mxu0 0.0
    %1483 = vmatpush2.msra.mxu0 0.0
    %1484 = vmatprep.subr.mxu0 0.0
    %1485 = vmatpush2.msra.mxu0 0.0
    %1486 = vmatprep.subr.mxu0 0.0
    %1487 = vmatpush2.msra.mxu0 0.0
    %1488 = vmatprep.subr.mxu0 0.0
    %1489 = vmatpush2.msra.mxu0 0.0
    %1490 = vmatprep.subr.mxu0 0.0
    %1491 = vmatpush2.msra.mxu0 0.0
    %1492 = vmatprep.subr.mxu0 0.0
    %1493 = vmatpush2.msra.mxu0 0.0
    %1494 = vmatprep.subr.mxu0 0.0
    %1495 = vmatpush2.msra.mxu0 0.0
    %1496 = vmatprep.mubr.f32.mxu0 0.0
    %1497 = vmatmul.mubr.f32.gmra.mxu0 %v1430
    %v1498 = vpop.f32.mrf.mxu0
    %v1499 = vadd.f32 0.0, %v1498
    %v1500 = vpop.f32.mrf.mxu0
    %1501 = vdwg.mxu0
    %v1502 = vadd.f32 %v1429, %v1499
    %v1503 = vxor.u32 %v1502, 2147483648
    %v1504 = vmul.f32 %v1503, 1.442695
    %v1505 = vpow.pop %v1504
    %v1506 = vadd.f32 %v1505, 1.0
    %v1507 = vrcp.pop %v1506
    %v1508 = vmul.f32 1.0, %v1507
    %v1509 = vtanh.pop %v1502
    %v1510 = vmul.f32 %v1508, %v1417
    %1512 = vrot.lane.b32.xlu0 %v1509, 64
    %v1513 = vpop.permute.xlu0 %1512
    %v1515 = vmul.f32 %v1508, %v1513
    %1517 = vrot.lane.b32.xlu0 %v1515, 32
    %v1518 = vpop.permute.xlu0 %1517
    %v1520 = vadd.f32 %v1510, %v1518
    %v1521 = vtanh.pop %v1520
    %1523 = vrot.lane.b32.xlu0 %v1521, 64
    %v1524 = vpop.permute.xlu0 %1523
    %v1526 = vmul.f32 %v1508, %v1524
    %1528 = vrot.lane.b32.xlu0 %v1526, 32
    %v1529 = vpop.permute.xlu0 %1528
    %1531 = vst.msk [vmem:[#allocation3 + $0x8] sm:$0x3] %vm264, %v1529
    %v1532 = vld [vmem:[#allocation2 + $0xa] sm:$0x3]
    %v1533 = vsel %vm267, %v1529, 0
    %1535 = vmatprep.subr.mxu0 0.0
    %1536 = vmatpush1.msra.mxu0 0.0
    %1537 = vmatprep.subr.mxu0 0.0
    %1538 = vmatpush1.msra.mxu0 0.0
    %1539 = vmatprep.subr.mxu0 0.0
    %1540 = vmatpush1.msra.mxu0 0.0
    %1541 = vmatprep.subr.mxu0 0.0
    %1542 = vmatpush1.msra.mxu0 0.0
    %1543 = vmatprep.subr.mxu0 0.0
    %1544 = vmatpush1.msra.mxu0 0.0
    %1545 = vmatprep.subr.mxu0 0.0
    %1546 = vmatpush1.msra.mxu0 0.0
    %1547 = vmatprep.subr.mxu0 0.0
    %1548 = vmatpush1.msra.mxu0 0.0
    %1549 = vmatprep.subr.mxu0 0.0
    %1550 = vmatpush1.msra.mxu0 0.0
    %1551 = vmatprep.subr.mxu0 0.0
    %1552 = vmatpush1.msra.mxu0 0.0
    %1553 = vmatprep.subr.mxu0 0.0
    %1554 = vmatpush1.msra.mxu0 0.0
    %1555 = vmatprep.subr.mxu0 0.0
    %1556 = vmatpush1.msra.mxu0 0.0
    %1557 = vmatprep.subr.mxu0 0.0
    %1558 = vmatpush1.msra.mxu0 0.0
    %1559 = vmatprep.subr.mxu0 0.0
    %1560 = vmatpush1.msra.mxu0 %v1091
    %1561 = vmatprep.subr.mxu0 0.0
    %1562 = vmatpush1.msra.mxu0 %v1090
    %1563 = vmatprep.subr.mxu0 0.0
    %1564 = vmatpush1.msra.mxu0 %v1089
    %1565 = vmatprep.subr.mxu0 0.0
    %1566 = vmatpush1.msra.mxu0 %v1088
    %1567 = vmatprep.subr.mxu0 0.0
    %1568 = vmatpush2.msra.mxu0 0.0
    %1569 = vmatprep.subr.mxu0 0.0
    %1570 = vmatpush2.msra.mxu0 0.0
    %1571 = vmatprep.subr.mxu0 0.0
    %1572 = vmatpush2.msra.mxu0 0.0
    %1573 = vmatprep.subr.mxu0 0.0
    %1574 = vmatpush2.msra.mxu0 0.0
    %1575 = vmatprep.subr.mxu0 0.0
    %1576 = vmatpush2.msra.mxu0 0.0
    %1577 = vmatprep.subr.mxu0 0.0
    %1578 = vmatpush2.msra.mxu0 0.0
    %1579 = vmatprep.subr.mxu0 0.0
    %1580 = vmatpush2.msra.mxu0 0.0
    %1581 = vmatprep.subr.mxu0 0.0
    %1582 = vmatpush2.msra.mxu0 0.0
    %1583 = vmatprep.subr.mxu0 0.0
    %1584 = vmatpush2.msra.mxu0 0.0
    %1585 = vmatprep.subr.mxu0 0.0
    %1586 = vmatpush2.msra.mxu0 0.0
    %1587 = vmatprep.subr.mxu0 0.0
    %1588 = vmatpush2.msra.mxu0 0.0
    %1589 = vmatprep.subr.mxu0 0.0
    %1590 = vmatpush2.msra.mxu0 0.0
    %1591 = vmatprep.subr.mxu0 0.0
    %1592 = vmatpush2.msra.mxu0 0.0
    %1593 = vmatprep.subr.mxu0 0.0
    %1594 = vmatpush2.msra.mxu0 0.0
    %1595 = vmatprep.subr.mxu0 0.0
    %1596 = vmatpush2.msra.mxu0 0.0
    %1597 = vmatprep.subr.mxu0 0.0
    %1598 = vmatpush2.msra.mxu0 0.0
    %1599 = vmatprep.mubr.f32.mxu0 0.0
    %1600 = vmatmul.mubr.f32.gmra.mxu0 %v1533
    %v1601 = vpop.f32.mrf.mxu0
    %v1602 = vadd.f32 0.0, %v1601
    %v1603 = vpop.f32.mrf.mxu0
    %1604 = vdwg.mxu0
    %v1605 = vadd.f32 %v1532, %v1602
    %v1606 = vxor.u32 %v1605, 2147483648
    %v1607 = vmul.f32 %v1606, 1.442695
    %v1608 = vpow.pop %v1607
    %v1609 = vadd.f32 %v1608, 1.0
    %v1610 = vrcp.pop %v1609
    %v1611 = vmul.f32 1.0, %v1610
    %v1612 = vtanh.pop %v1605
    %v1613 = vmul.f32 %v1611, %v1520
    %1615 = vrot.lane.b32.xlu0 %v1612, 64
    %v1616 = vpop.permute.xlu0 %1615
    %v1618 = vmul.f32 %v1611, %v1616
    %1620 = vrot.lane.b32.xlu0 %v1618, 32
    %v1621 = vpop.permute.xlu0 %1620
    %v1623 = vadd.f32 %v1613, %v1621
    %v1624 = vtanh.pop %v1623
    %1626 = vrot.lane.b32.xlu0 %v1624, 64
    %v1627 = vpop.permute.xlu0 %1626
    %v1629 = vmul.f32 %v1611, %v1627
    %1631 = vrot.lane.b32.xlu0 %v1629, 32
    %v1632 = vpop.permute.xlu0 %1631
    %1634 = vst.msk [vmem:[#allocation3 + $0xa] sm:$0x3] %vm264, %v1632
    %v1635 = vld [vmem:[#allocation2 + $0xc] sm:$0x3]
    %v1636 = vsel %vm267, %v1632, 0
    %1638 = vmatprep.subr.mxu0 0.0
    %1639 = vmatpush1.msra.mxu0 0.0
    %1640 = vmatprep.subr.mxu0 0.0
    %1641 = vmatpush1.msra.mxu0 0.0
    %1642 = vmatprep.subr.mxu0 0.0
    %1643 = vmatpush1.msra.mxu0 0.0
    %1644 = vmatprep.subr.mxu0 0.0
    %1645 = vmatpush1.msra.mxu0 0.0
    %1646 = vmatprep.subr.mxu0 0.0
    %1647 = vmatpush1.msra.mxu0 0.0
    %1648 = vmatprep.subr.mxu0 0.0
    %1649 = vmatpush1.msra.mxu0 0.0
    %1650 = vmatprep.subr.mxu0 0.0
    %1651 = vmatpush1.msra.mxu0 0.0
    %1652 = vmatprep.subr.mxu0 0.0
    %1653 = vmatpush1.msra.mxu0 0.0
    %1654 = vmatprep.subr.mxu0 0.0
    %1655 = vmatpush1.msra.mxu0 0.0
    %1656 = vmatprep.subr.mxu0 0.0
    %1657 = vmatpush1.msra.mxu0 0.0
    %1658 = vmatprep.subr.mxu0 0.0
    %1659 = vmatpush1.msra.mxu0 0.0
    %1660 = vmatprep.subr.mxu0 0.0
    %1661 = vmatpush1.msra.mxu0 0.0
    %1662 = vmatprep.subr.mxu0 0.0
    %1663 = vmatpush1.msra.mxu0 %v1091
    %1664 = vmatprep.subr.mxu0 0.0
    %1665 = vmatpush1.msra.mxu0 %v1090
    %1666 = vmatprep.subr.mxu0 0.0
    %1667 = vmatpush1.msra.mxu0 %v1089
    %1668 = vmatprep.subr.mxu0 0.0
    %1669 = vmatpush1.msra.mxu0 %v1088
    %1670 = vmatprep.subr.mxu0 0.0
    %1671 = vmatpush2.msra.mxu0 0.0
    %1672 = vmatprep.subr.mxu0 0.0
    %1673 = vmatpush2.msra.mxu0 0.0
    %1674 = vmatprep.subr.mxu0 0.0
    %1675 = vmatpush2.msra.mxu0 0.0
    %1676 = vmatprep.subr.mxu0 0.0
    %1677 = vmatpush2.msra.mxu0 0.0
    %1678 = vmatprep.subr.mxu0 0.0
    %1679 = vmatpush2.msra.mxu0 0.0
    %1680 = vmatprep.subr.mxu0 0.0
    %1681 = vmatpush2.msra.mxu0 0.0
    %1682 = vmatprep.subr.mxu0 0.0
    %1683 = vmatpush2.msra.mxu0 0.0
    %1684 = vmatprep.subr.mxu0 0.0
    %1685 = vmatpush2.msra.mxu0 0.0
    %1686 = vmatprep.subr.mxu0 0.0
    %1687 = vmatpush2.msra.mxu0 0.0
    %1688 = vmatprep.subr.mxu0 0.0
    %1689 = vmatpush2.msra.mxu0 0.0
    %1690 = vmatprep.subr.mxu0 0.0
    %1691 = vmatpush2.msra.mxu0 0.0
    %1692 = vmatprep.subr.mxu0 0.0
    %1693 = vmatpush2.msra.mxu0 0.0
    %1694 = vmatprep.subr.mxu0 0.0
    %1695 = vmatpush2.msra.mxu0 0.0
    %1696 = vmatprep.subr.mxu0 0.0
    %1697 = vmatpush2.msra.mxu0 0.0
    %1698 = vmatprep.subr.mxu0 0.0
    %1699 = vmatpush2.msra.mxu0 0.0
    %1700 = vmatprep.subr.mxu0 0.0
    %1701 = vmatpush2.msra.mxu0 0.0
    %1702 = vmatprep.mubr.f32.mxu0 0.0
    %1703 = vmatmul.mubr.f32.gmra.mxu0 %v1636
    %v1704 = vpop.f32.mrf.mxu0
    %v1705 = vadd.f32 0.0, %v1704
    %v1706 = vpop.f32.mrf.mxu0
    %1707 = vdwg.mxu0
    %v1708 = vadd.f32 %v1635, %v1705
    %v1709 = vxor.u32 %v1708, 2147483648
    %v1710 = vmul.f32 %v1709, 1.442695
    %v1711 = vpow.pop %v1710
    %v1712 = vadd.f32 %v1711, 1.0
    %v1713 = vrcp.pop %v1712
    %v1714 = vmul.f32 1.0, %v1713
    %v1715 = vtanh.pop %v1708
    %v1716 = vmul.f32 %v1714, %v1623
    %1718 = vrot.lane.b32.xlu0 %v1715, 64
    %v1719 = vpop.permute.xlu0 %1718
    %v1721 = vmul.f32 %v1714, %v1719
    %1723 = vrot.lane.b32.xlu0 %v1721, 32
    %v1724 = vpop.permute.xlu0 %1723
    %v1726 = vadd.f32 %v1716, %v1724
    %v1727 = vtanh.pop %v1726
    %1729 = vrot.lane.b32.xlu0 %v1727, 64
    %v1730 = vpop.permute.xlu0 %1729
    %v1732 = vmul.f32 %v1714, %v1730
    %1734 = vrot.lane.b32.xlu0 %v1732, 32
    %v1735 = vpop.permute.xlu0 %1734
    %1737 = vst.msk [vmem:[#allocation3 + $0xc] sm:$0x3] %vm264, %v1735
    %v1738 = vld [vmem:[#allocation2 + $0xe] sm:$0x3]
    %v1739 = vsel %vm267, %v1735, 0
    %1741 = vmatprep.subr.mxu0 0.0
    %1742 = vmatpush1.msra.mxu0 0.0
    %1743 = vmatprep.subr.mxu0 0.0
    %1744 = vmatpush1.msra.mxu0 0.0
    %1745 = vmatprep.subr.mxu0 0.0
    %1746 = vmatpush1.msra.mxu0 0.0
    %1747 = vmatprep.subr.mxu0 0.0
    %1748 = vmatpush1.msra.mxu0 0.0
    %1749 = vmatprep.subr.mxu0 0.0
    %1750 = vmatpush1.msra.mxu0 0.0
    %1751 = vmatprep.subr.mxu0 0.0
    %1752 = vmatpush1.msra.mxu0 0.0
    %1753 = vmatprep.subr.mxu0 0.0
    %1754 = vmatpush1.msra.mxu0 0.0
    %1755 = vmatprep.subr.mxu0 0.0
    %1756 = vmatpush1.msra.mxu0 0.0
    %1757 = vmatprep.subr.mxu0 0.0
    %1758 = vmatpush1.msra.mxu0 0.0
    %1759 = vmatprep.subr.mxu0 0.0
    %1760 = vmatpush1.msra.mxu0 0.0
    %1761 = vmatprep.subr.mxu0 0.0
    %1762 = vmatpush1.msra.mxu0 0.0
    %1763 = vmatprep.subr.mxu0 0.0
    %1764 = vmatpush1.msra.mxu0 0.0
    %1765 = vmatprep.subr.mxu0 0.0
    %1766 = vmatpush1.msra.mxu0 %v1091
    %1767 = vmatprep.subr.mxu0 0.0
    %1768 = vmatpush1.msra.mxu0 %v1090
    %1769 = vmatprep.subr.mxu0 0.0
    %1770 = vmatpush1.msra.mxu0 %v1089
    %1771 = vmatprep.subr.mxu0 0.0
    %1772 = vmatpush1.msra.mxu0 %v1088
    %1773 = vmatprep.subr.mxu0 0.0
    %1774 = vmatpush2.msra.mxu0 0.0
    %1775 = vmatprep.subr.mxu0 0.0
    %1776 = vmatpush2.msra.mxu0 0.0
    %1777 = vmatprep.subr.mxu0 0.0
    %1778 = vmatpush2.msra.mxu0 0.0
    %1779 = vmatprep.subr.mxu0 0.0
    %1780 = vmatpush2.msra.mxu0 0.0
    %1781 = vmatprep.subr.mxu0 0.0
    %1782 = vmatpush2.msra.mxu0 0.0
    %1783 = vmatprep.subr.mxu0 0.0
    %1784 = vmatpush2.msra.mxu0 0.0
    %1785 = vmatprep.subr.mxu0 0.0
    %1786 = vmatpush2.msra.mxu0 0.0
    %1787 = vmatprep.subr.mxu0 0.0
    %1788 = vmatpush2.msra.mxu0 0.0
    %1789 = vmatprep.subr.mxu0 0.0
    %1790 = vmatpush2.msra.mxu0 0.0
    %1791 = vmatprep.subr.mxu0 0.0
    %1792 = vmatpush2.msra.mxu0 0.0
    %1793 = vmatprep.subr.mxu0 0.0
    %1794 = vmatpush2.msra.mxu0 0.0
    %1795 = vmatprep.subr.mxu0 0.0
    %1796 = vmatpush2.msra.mxu0 0.0
    %1797 = vmatprep.subr.mxu0 0.0
    %1798 = vmatpush2.msra.mxu0 0.0
    %1799 = vmatprep.subr.mxu0 0.0
    %1800 = vmatpush2.msra.mxu0 0.0
    %1801 = vmatprep.subr.mxu0 0.0
    %1802 = vmatpush2.msra.mxu0 0.0
    %1803 = vmatprep.subr.mxu0 0.0
    %1804 = vmatpush2.msra.mxu0 0.0
    %1805 = vmatprep.mubr.f32.mxu0 0.0
    %1806 = vmatmul.mubr.f32.gmra.mxu0 %v1739
    %v1807 = vpop.f32.mrf.mxu0
    %v1808 = vadd.f32 0.0, %v1807
    %v1809 = vpop.f32.mrf.mxu0
    %1810 = vdwg.mxu0
    %v1811 = vadd.f32 %v1738, %v1808
    %v1812 = vxor.u32 %v1811, 2147483648
    %v1813 = vmul.f32 %v1812, 1.442695
    %v1814 = vpow.pop %v1813
    %v1815 = vadd.f32 %v1814, 1.0
    %v1816 = vrcp.pop %v1815
    %v1817 = vmul.f32 1.0, %v1816
    %v1818 = vtanh.pop %v1811
    %v1819 = vmul.f32 %v1817, %v1726
    %1821 = vrot.lane.b32.xlu0 %v1818, 64
    %v1822 = vpop.permute.xlu0 %1821
    %v1824 = vmul.f32 %v1817, %v1822
    %1826 = vrot.lane.b32.xlu0 %v1824, 32
    %v1827 = vpop.permute.xlu0 %1826
    %v1829 = vadd.f32 %v1819, %v1827
    %v1830 = vtanh.pop %v1829
    %1832 = vrot.lane.b32.xlu0 %v1830, 64
    %v1833 = vpop.permute.xlu0 %1832
    %v1835 = vmul.f32 %v1817, %v1833
    %1837 = vrot.lane.b32.xlu0 %v1835, 32
    %v1838 = vpop.permute.xlu0 %1837
    %1840 = vst.msk [vmem:[#allocation3 + $0xe] sm:$0x3] %vm264, %v1838
    %v1841 = vld [vmem:[#allocation3] sm:$0xff]
    %v1842 = vld [vmem:[#allocation3 + $0x8] sm:$0xff]
    %v1843 = vld [vmem:[#allocation10] sm:$0xff]
    %v1844 = vld [vmem:[#allocation10 + $0x8] sm:$0xff]
    %v1845 = vld [vmem:[#allocation10 + $0x10] sm:$0xff]
    %v1846 = vld [vmem:[#allocation10 + $0x18] sm:$0xff]
    %v1847 = vld [vmem:[%s9] sm:$0x1]
    %v1849 = vlaneseq
    %v1850 = vshrl.u32 %v1849, 7
    %v1851 = vsub.s32 0, %v1850
    %v1852 = vrot.slane %v1847, %v1851
    %v1855 = vsel %vm267, %v1841, 0
    %v1858 = vsel %vm267, %v1842, 0
    %1860 = vmatprep.subr.mxu0 0.0
    %1861 = vmatpush1.msra.mxu0 0.0
    %1862 = vmatprep.subr.mxu0 0.0
    %1863 = vmatpush1.msra.mxu0 0.0
    %1864 = vmatprep.subr.mxu0 0.0
    %1865 = vmatpush1.msra.mxu0 0.0
    %1866 = vmatprep.subr.mxu0 0.0
    %1867 = vmatpush1.msra.mxu0 0.0
    %1868 = vmatprep.subr.mxu0 0.0
    %1869 = vmatpush1.msra.mxu0 0.0
    %1870 = vmatprep.subr.mxu0 0.0
    %1871 = vmatpush1.msra.mxu0 0.0
    %1872 = vmatprep.subr.mxu0 0.0
    %1873 = vmatpush1.msra.mxu0 0.0
    %1874 = vmatprep.subr.mxu0 0.0
    %1875 = vmatpush1.msra.mxu0 0.0
    %1876 = vmatprep.subr.mxu0 0.0
    %1877 = vmatpush1.msra.mxu0 0.0
    %1878 = vmatprep.subr.mxu0 0.0
    %1879 = vmatpush1.msra.mxu0 0.0
    %1880 = vmatprep.subr.mxu0 0.0
    %1881 = vmatpush1.msra.mxu0 0.0
    %1882 = vmatprep.subr.mxu0 0.0
    %1883 = vmatpush1.msra.mxu0 0.0
    %1884 = vmatprep.subr.mxu0 0.0
    %1885 = vmatpush1.msra.mxu0 %v1846
    %1886 = vmatprep.subr.mxu0 0.0
    %1887 = vmatpush1.msra.mxu0 %v1845
    %1888 = vmatprep.subr.mxu0 0.0
    %1889 = vmatpush1.msra.mxu0 %v1844
    %1890 = vmatprep.subr.mxu0 0.0
    %1891 = vmatpush1.msra.mxu0 %v1843
    %1892 = vmatprep.subr.mxu0 0.0
    %1893 = vmatpush2.msra.mxu0 0.0
    %1894 = vmatprep.subr.mxu0 0.0
    %1895 = vmatpush2.msra.mxu0 0.0
    %1896 = vmatprep.subr.mxu0 0.0
    %1897 = vmatpush2.msra.mxu0 0.0
    %1898 = vmatprep.subr.mxu0 0.0
    %1899 = vmatpush2.msra.mxu0 0.0
    %1900 = vmatprep.subr.mxu0 0.0
    %1901 = vmatpush2.msra.mxu0 0.0
    %1902 = vmatprep.subr.mxu0 0.0
    %1903 = vmatpush2.msra.mxu0 0.0
    %1904 = vmatprep.subr.mxu0 0.0
    %1905 = vmatpush2.msra.mxu0 0.0
    %1906 = vmatprep.subr.mxu0 0.0
    %1907 = vmatpush2.msra.mxu0 0.0
    %1908 = vmatprep.subr.mxu0 0.0
    %1909 = vmatpush2.msra.mxu0 0.0
    %1910 = vmatprep.subr.mxu0 0.0
    %1911 = vmatpush2.msra.mxu0 0.0
    %1912 = vmatprep.subr.mxu0 0.0
    %1913 = vmatpush2.msra.mxu0 0.0
    %1914 = vmatprep.subr.mxu0 0.0
    %1915 = vmatpush2.msra.mxu0 0.0
    %1916 = vmatprep.subr.mxu0 0.0
    %1917 = vmatpush2.msra.mxu0 0.0
    %1918 = vmatprep.subr.mxu0 0.0
    %1919 = vmatpush2.msra.mxu0 0.0
    %1920 = vmatprep.subr.mxu0 0.0
    %1921 = vmatpush2.msra.mxu0 0.0
    %1922 = vmatprep.subr.mxu0 0.0
    %1923 = vmatpush2.msra.mxu0 0.0
    %1924 = vmatprep.mubr.f32.mxu0 0.0
    %1925 = vmatmul.mubr.f32.gmra.mxu0 %v1855
    %v1926 = vpop.f32.mrf.mxu0
    %v1927 = vadd.f32 %v1852, %v1926
    %v1928 = vpop.f32.mrf.mxu0
    %1929 = vmatprep.mubr.f32.mxu0 0.0
    %1930 = vmatmul.mubr.f32.gmra.mxu0 %v1858
    %v1931 = vpop.f32.mrf.mxu0
    %v1932 = vadd.f32 %v1852, %v1931
    %v1933 = vpop.f32.mrf.mxu0
    %1934 = vdwg.mxu0
    %1935 = vst [vmem:[#allocation2] sm:$0xff] %v1927
    %1936 = vst [vmem:[#allocation2 + $0x8] sm:$0xff] %v1932
    %v1937 = vld [vmem:[#allocation12] sm:$0xff]
    %v1938 = vld [vmem:[#allocation12 + $0x8] sm:$0xff]
    %v1939 = vld [vmem:[#allocation12 + $0x10] sm:$0xff]
    %v1940 = vld [vmem:[#allocation12 + $0x18] sm:$0xff]
    %v1941 = vld [vmem:[#allocation2] sm:$0x3]
    %v1942 = vxor.u32 %v1941, 2147483648
    %v1943 = vmul.f32 %v1942, 1.442695
    %v1944 = vpow.pop %v1943
    %v1945 = vadd.f32 %v1944, 1.0
    %v1946 = vrcp.pop %v1945
    %v1947 = vmul.f32 1.0, %v1946
    %v1948 = vtanh.pop %v1941
    %1950 = vrot.lane.b32.xlu0 %v1948, 64
    %v1951 = vpop.permute.xlu0 %1950
    %v1953 = vmul.f32 %v1947, %v1951
    %v1954 = vtanh.pop %v1953
    %1956 = vrot.lane.b32.xlu0 %v1954, 96
    %v1957 = vpop.permute.xlu0 %1956
    %v1959 = vmul.f32 %v1947, %v1957
    %1961 = vrot.lane.b32.xlu0 %v1959, 32
    %v1962 = vpop.permute.xlu0 %1961
    %1964 = vst.msk [vmem:[#allocation3] sm:$0x3] %vm264, %v1962
    %v1965 = vld [vmem:[#allocation2 + $0x2] sm:$0x3]
    %v1966 = vsel %vm267, %v1962, 0
    %1968 = vmatprep.subr.mxu0 0.0
    %1969 = vmatpush1.msra.mxu0 0.0
    %1970 = vmatprep.subr.mxu0 0.0
    %1971 = vmatpush1.msra.mxu0 0.0
    %1972 = vmatprep.subr.mxu0 0.0
    %1973 = vmatpush1.msra.mxu0 0.0
    %1974 = vmatprep.subr.mxu0 0.0
    %1975 = vmatpush1.msra.mxu0 0.0
    %1976 = vmatprep.subr.mxu0 0.0
    %1977 = vmatpush1.msra.mxu0 0.0
    %1978 = vmatprep.subr.mxu0 0.0
    %1979 = vmatpush1.msra.mxu0 0.0
    %1980 = vmatprep.subr.mxu0 0.0
    %1981 = vmatpush1.msra.mxu0 0.0
    %1982 = vmatprep.subr.mxu0 0.0
    %1983 = vmatpush1.msra.mxu0 0.0
    %1984 = vmatprep.subr.mxu0 0.0
    %1985 = vmatpush1.msra.mxu0 0.0
    %1986 = vmatprep.subr.mxu0 0.0
    %1987 = vmatpush1.msra.mxu0 0.0
    %1988 = vmatprep.subr.mxu0 0.0
    %1989 = vmatpush1.msra.mxu0 0.0
    %1990 = vmatprep.subr.mxu0 0.0
    %1991 = vmatpush1.msra.mxu0 0.0
    %1992 = vmatprep.subr.mxu0 0.0
    %1993 = vmatpush1.msra.mxu0 %v1940
    %1994 = vmatprep.subr.mxu0 0.0
    %1995 = vmatpush1.msra.mxu0 %v1939
    %1996 = vmatprep.subr.mxu0 0.0
    %1997 = vmatpush1.msra.mxu0 %v1938
    %1998 = vmatprep.subr.mxu0 0.0
    %1999 = vmatpush1.msra.mxu0 %v1937
    %2000 = vmatprep.subr.mxu0 0.0
    %2001 = vmatpush2.msra.mxu0 0.0
    %2002 = vmatprep.subr.mxu0 0.0
    %2003 = vmatpush2.msra.mxu0 0.0
    %2004 = vmatprep.subr.mxu0 0.0
    %2005 = vmatpush2.msra.mxu0 0.0
    %2006 = vmatprep.subr.mxu0 0.0
    %2007 = vmatpush2.msra.mxu0 0.0
    %2008 = vmatprep.subr.mxu0 0.0
    %2009 = vmatpush2.msra.mxu0 0.0
    %2010 = vmatprep.subr.mxu0 0.0
    %2011 = vmatpush2.msra.mxu0 0.0
    %2012 = vmatprep.subr.mxu0 0.0
    %2013 = vmatpush2.msra.mxu0 0.0
    %2014 = vmatprep.subr.mxu0 0.0
    %2015 = vmatpush2.msra.mxu0 0.0
    %2016 = vmatprep.subr.mxu0 0.0
    %2017 = vmatpush2.msra.mxu0 0.0
    %2018 = vmatprep.subr.mxu0 0.0
    %2019 = vmatpush2.msra.mxu0 0.0
    %2020 = vmatprep.subr.mxu0 0.0
    %2021 = vmatpush2.msra.mxu0 0.0
    %2022 = vmatprep.subr.mxu0 0.0
    %2023 = vmatpush2.msra.mxu0 0.0
    %2024 = vmatprep.subr.mxu0 0.0
    %2025 = vmatpush2.msra.mxu0 0.0
    %2026 = vmatprep.subr.mxu0 0.0
    %2027 = vmatpush2.msra.mxu0 0.0
    %2028 = vmatprep.subr.mxu0 0.0
    %2029 = vmatpush2.msra.mxu0 0.0
    %2030 = vmatprep.subr.mxu0 0.0
    %2031 = vmatpush2.msra.mxu0 0.0
    %2032 = vmatprep.mubr.f32.mxu0 0.0
    %2033 = vmatmul.mubr.f32.gmra.mxu0 %v1966
    %v2034 = vpop.f32.mrf.mxu0
    %v2035 = vadd.f32 0.0, %v2034
    %v2036 = vpop.f32.mrf.mxu0
    %2037 = vdwg.mxu0
    %v2038 = vadd.f32 %v1965, %v2035
    %v2039 = vxor.u32 %v2038, 2147483648
    %v2040 = vmul.f32 %v2039, 1.442695
    %v2041 = vpow.pop %v2040
    %v2042 = vadd.f32 %v2041, 1.0
    %v2043 = vrcp.pop %v2042
    %v2044 = vmul.f32 1.0, %v2043
    %v2045 = vtanh.pop %v2038
    %2047 = vrot.lane.b32.xlu0 %v1953, 32
    %v2048 = vpop.permute.xlu0 %2047
    %v2050 = vmul.f32 %v2044, %v2048
    %2052 = vrot.lane.b32.xlu0 %v2045, 64
    %v2053 = vpop.permute.xlu0 %2052
    %v2055 = vmul.f32 %v2044, %v2053
    %2057 = vrot.lane.b32.xlu0 %v2055, 32
    %v2058 = vpop.permute.xlu0 %2057
    %v2060 = vadd.f32 %v2050, %v2058
    %v2061 = vtanh.pop %v2060
    %2063 = vrot.lane.b32.xlu0 %v2061, 64
    %v2064 = vpop.permute.xlu0 %2063
    %v2066 = vmul.f32 %v2044, %v2064
    %2068 = vrot.lane.b32.xlu0 %v2066, 32
    %v2069 = vpop.permute.xlu0 %2068
    %2071 = vst.msk [vmem:[#allocation3 + $0x2] sm:$0x3] %vm264, %v2069
    %v2072 = vld [vmem:[#allocation2 + $0x4] sm:$0x3]
    %v2073 = vsel %vm267, %v2069, 0
    %2075 = vmatprep.subr.mxu0 0.0
    %2076 = vmatpush1.msra.mxu0 0.0
    %2077 = vmatprep.subr.mxu0 0.0
    %2078 = vmatpush1.msra.mxu0 0.0
    %2079 = vmatprep.subr.mxu0 0.0
    %2080 = vmatpush1.msra.mxu0 0.0
    %2081 = vmatprep.subr.mxu0 0.0
    %2082 = vmatpush1.msra.mxu0 0.0
    %2083 = vmatprep.subr.mxu0 0.0
    %2084 = vmatpush1.msra.mxu0 0.0
    %2085 = vmatprep.subr.mxu0 0.0
    %2086 = vmatpush1.msra.mxu0 0.0
    %2087 = vmatprep.subr.mxu0 0.0
    %2088 = vmatpush1.msra.mxu0 0.0
    %2089 = vmatprep.subr.mxu0 0.0
    %2090 = vmatpush1.msra.mxu0 0.0
    %2091 = vmatprep.subr.mxu0 0.0
    %2092 = vmatpush1.msra.mxu0 0.0
    %2093 = vmatprep.subr.mxu0 0.0
    %2094 = vmatpush1.msra.mxu0 0.0
    %2095 = vmatprep.subr.mxu0 0.0
    %2096 = vmatpush1.msra.mxu0 0.0
    %2097 = vmatprep.subr.mxu0 0.0
    %2098 = vmatpush1.msra.mxu0 0.0
    %2099 = vmatprep.subr.mxu0 0.0
    %2100 = vmatpush1.msra.mxu0 %v1940
    %2101 = vmatprep.subr.mxu0 0.0
    %2102 = vmatpush1.msra.mxu0 %v1939
    %2103 = vmatprep.subr.mxu0 0.0
    %2104 = vmatpush1.msra.mxu0 %v1938
    %2105 = vmatprep.subr.mxu0 0.0
    %2106 = vmatpush1.msra.mxu0 %v1937
    %2107 = vmatprep.subr.mxu0 0.0
    %2108 = vmatpush2.msra.mxu0 0.0
    %2109 = vmatprep.subr.mxu0 0.0
    %2110 = vmatpush2.msra.mxu0 0.0
    %2111 = vmatprep.subr.mxu0 0.0
    %2112 = vmatpush2.msra.mxu0 0.0
    %2113 = vmatprep.subr.mxu0 0.0
    %2114 = vmatpush2.msra.mxu0 0.0
    %2115 = vmatprep.subr.mxu0 0.0
    %2116 = vmatpush2.msra.mxu0 0.0
    %2117 = vmatprep.subr.mxu0 0.0
    %2118 = vmatpush2.msra.mxu0 0.0
    %2119 = vmatprep.subr.mxu0 0.0
    %2120 = vmatpush2.msra.mxu0 0.0
    %2121 = vmatprep.subr.mxu0 0.0
    %2122 = vmatpush2.msra.mxu0 0.0
    %2123 = vmatprep.subr.mxu0 0.0
    %2124 = vmatpush2.msra.mxu0 0.0
    %2125 = vmatprep.subr.mxu0 0.0
    %2126 = vmatpush2.msra.mxu0 0.0
    %2127 = vmatprep.subr.mxu0 0.0
    %2128 = vmatpush2.msra.mxu0 0.0
    %2129 = vmatprep.subr.mxu0 0.0
    %2130 = vmatpush2.msra.mxu0 0.0
    %2131 = vmatprep.subr.mxu0 0.0
    %2132 = vmatpush2.msra.mxu0 0.0
    %2133 = vmatprep.subr.mxu0 0.0
    %2134 = vmatpush2.msra.mxu0 0.0
    %2135 = vmatprep.subr.mxu0 0.0
    %2136 = vmatpush2.msra.mxu0 0.0
    %2137 = vmatprep.subr.mxu0 0.0
    %2138 = vmatpush2.msra.mxu0 0.0
    %2139 = vmatprep.mubr.f32.mxu0 0.0
    %2140 = vmatmul.mubr.f32.gmra.mxu0 %v2073
    %v2141 = vpop.f32.mrf.mxu0
    %v2142 = vadd.f32 0.0, %v2141
    %v2143 = vpop.f32.mrf.mxu0
    %2144 = vdwg.mxu0
    %v2145 = vadd.f32 %v2072, %v2142
    %v2146 = vxor.u32 %v2145, 2147483648
    %v2147 = vmul.f32 %v2146, 1.442695
    %v2148 = vpow.pop %v2147
    %v2149 = vadd.f32 %v2148, 1.0
    %v2150 = vrcp.pop %v2149
    %v2151 = vmul.f32 1.0, %v2150
    %v2152 = vtanh.pop %v2145
    %v2153 = vmul.f32 %v2151, %v2060
    %2155 = vrot.lane.b32.xlu0 %v2152, 64
    %v2156 = vpop.permute.xlu0 %2155
    %v2158 = vmul.f32 %v2151, %v2156
    %2160 = vrot.lane.b32.xlu0 %v2158, 32
    %v2161 = vpop.permute.xlu0 %2160
    %v2163 = vadd.f32 %v2153, %v2161
    %v2164 = vtanh.pop %v2163
    %2166 = vrot.lane.b32.xlu0 %v2164, 64
    %v2167 = vpop.permute.xlu0 %2166
    %v2169 = vmul.f32 %v2151, %v2167
    %2171 = vrot.lane.b32.xlu0 %v2169, 32
    %v2172 = vpop.permute.xlu0 %2171
    %2174 = vst.msk [vmem:[#allocation3 + $0x4] sm:$0x3] %vm264, %v2172
    %v2175 = vld [vmem:[#allocation2 + $0x6] sm:$0x3]
    %v2176 = vsel %vm267, %v2172, 0
    %2178 = vmatprep.subr.mxu0 0.0
    %2179 = vmatpush1.msra.mxu0 0.0
    %2180 = vmatprep.subr.mxu0 0.0
    %2181 = vmatpush1.msra.mxu0 0.0
    %2182 = vmatprep.subr.mxu0 0.0
    %2183 = vmatpush1.msra.mxu0 0.0
    %2184 = vmatprep.subr.mxu0 0.0
    %2185 = vmatpush1.msra.mxu0 0.0
    %2186 = vmatprep.subr.mxu0 0.0
    %2187 = vmatpush1.msra.mxu0 0.0
    %2188 = vmatprep.subr.mxu0 0.0
    %2189 = vmatpush1.msra.mxu0 0.0
    %2190 = vmatprep.subr.mxu0 0.0
    %2191 = vmatpush1.msra.mxu0 0.0
    %2192 = vmatprep.subr.mxu0 0.0
    %2193 = vmatpush1.msra.mxu0 0.0
    %2194 = vmatprep.subr.mxu0 0.0
    %2195 = vmatpush1.msra.mxu0 0.0
    %2196 = vmatprep.subr.mxu0 0.0
    %2197 = vmatpush1.msra.mxu0 0.0
    %2198 = vmatprep.subr.mxu0 0.0
    %2199 = vmatpush1.msra.mxu0 0.0
    %2200 = vmatprep.subr.mxu0 0.0
    %2201 = vmatpush1.msra.mxu0 0.0
    %2202 = vmatprep.subr.mxu0 0.0
    %2203 = vmatpush1.msra.mxu0 %v1940
    %2204 = vmatprep.subr.mxu0 0.0
    %2205 = vmatpush1.msra.mxu0 %v1939
    %2206 = vmatprep.subr.mxu0 0.0
    %2207 = vmatpush1.msra.mxu0 %v1938
    %2208 = vmatprep.subr.mxu0 0.0
    %2209 = vmatpush1.msra.mxu0 %v1937
    %2210 = vmatprep.subr.mxu0 0.0
    %2211 = vmatpush2.msra.mxu0 0.0
    %2212 = vmatprep.subr.mxu0 0.0
    %2213 = vmatpush2.msra.mxu0 0.0
    %2214 = vmatprep.subr.mxu0 0.0
    %2215 = vmatpush2.msra.mxu0 0.0
    %2216 = vmatprep.subr.mxu0 0.0
    %2217 = vmatpush2.msra.mxu0 0.0
    %2218 = vmatprep.subr.mxu0 0.0
    %2219 = vmatpush2.msra.mxu0 0.0
    %2220 = vmatprep.subr.mxu0 0.0
    %2221 = vmatpush2.msra.mxu0 0.0
    %2222 = vmatprep.subr.mxu0 0.0
    %2223 = vmatpush2.msra.mxu0 0.0
    %2224 = vmatprep.subr.mxu0 0.0
    %2225 = vmatpush2.msra.mxu0 0.0
    %2226 = vmatprep.subr.mxu0 0.0
    %2227 = vmatpush2.msra.mxu0 0.0
    %2228 = vmatprep.subr.mxu0 0.0
    %2229 = vmatpush2.msra.mxu0 0.0
    %2230 = vmatprep.subr.mxu0 0.0
    %2231 = vmatpush2.msra.mxu0 0.0
    %2232 = vmatprep.subr.mxu0 0.0
    %2233 = vmatpush2.msra.mxu0 0.0
    %2234 = vmatprep.subr.mxu0 0.0
    %2235 = vmatpush2.msra.mxu0 0.0
    %2236 = vmatprep.subr.mxu0 0.0
    %2237 = vmatpush2.msra.mxu0 0.0
    %2238 = vmatprep.subr.mxu0 0.0
    %2239 = vmatpush2.msra.mxu0 0.0
    %2240 = vmatprep.subr.mxu0 0.0
    %2241 = vmatpush2.msra.mxu0 0.0
    %2242 = vmatprep.mubr.f32.mxu0 0.0
    %2243 = vmatmul.mubr.f32.gmra.mxu0 %v2176
    %v2244 = vpop.f32.mrf.mxu0
    %v2245 = vadd.f32 0.0, %v2244
    %v2246 = vpop.f32.mrf.mxu0
    %2247 = vdwg.mxu0
    %v2248 = vadd.f32 %v2175, %v2245
    %v2249 = vxor.u32 %v2248, 2147483648
    %v2250 = vmul.f32 %v2249, 1.442695
    %v2251 = vpow.pop %v2250
    %v2252 = vadd.f32 %v2251, 1.0
    %v2253 = vrcp.pop %v2252
    %v2254 = vmul.f32 1.0, %v2253
    %v2255 = vtanh.pop %v2248
    %v2256 = vmul.f32 %v2254, %v2163
    %2258 = vrot.lane.b32.xlu0 %v2255, 64
    %v2259 = vpop.permute.xlu0 %2258
    %v2261 = vmul.f32 %v2254, %v2259
    %2263 = vrot.lane.b32.xlu0 %v2261, 32
    %v2264 = vpop.permute.xlu0 %2263
    %v2266 = vadd.f32 %v2256, %v2264
    %v2267 = vtanh.pop %v2266
    %2269 = vrot.lane.b32.xlu0 %v2267, 64
    %v2270 = vpop.permute.xlu0 %2269
    %v2272 = vmul.f32 %v2254, %v2270
    %2274 = vrot.lane.b32.xlu0 %v2272, 32
    %v2275 = vpop.permute.xlu0 %2274
    %2277 = vst.msk [vmem:[#allocation3 + $0x6] sm:$0x3] %vm264, %v2275
    %v2278 = vld [vmem:[#allocation2 + $0x8] sm:$0x3]
    %v2279 = vsel %vm267, %v2275, 0
    %2281 = vmatprep.subr.mxu0 0.0
    %2282 = vmatpush1.msra.mxu0 0.0
    %2283 = vmatprep.subr.mxu0 0.0
    %2284 = vmatpush1.msra.mxu0 0.0
    %2285 = vmatprep.subr.mxu0 0.0
    %2286 = vmatpush1.msra.mxu0 0.0
    %2287 = vmatprep.subr.mxu0 0.0
    %2288 = vmatpush1.msra.mxu0 0.0
    %2289 = vmatprep.subr.mxu0 0.0
    %2290 = vmatpush1.msra.mxu0 0.0
    %2291 = vmatprep.subr.mxu0 0.0
    %2292 = vmatpush1.msra.mxu0 0.0
    %2293 = vmatprep.subr.mxu0 0.0
    %2294 = vmatpush1.msra.mxu0 0.0
    %2295 = vmatprep.subr.mxu0 0.0
    %2296 = vmatpush1.msra.mxu0 0.0
    %2297 = vmatprep.subr.mxu0 0.0
    %2298 = vmatpush1.msra.mxu0 0.0
    %2299 = vmatprep.subr.mxu0 0.0
    %2300 = vmatpush1.msra.mxu0 0.0
    %2301 = vmatprep.subr.mxu0 0.0
    %2302 = vmatpush1.msra.mxu0 0.0
    %2303 = vmatprep.subr.mxu0 0.0
    %2304 = vmatpush1.msra.mxu0 0.0
    %2305 = vmatprep.subr.mxu0 0.0
    %2306 = vmatpush1.msra.mxu0 %v1940
    %2307 = vmatprep.subr.mxu0 0.0
    %2308 = vmatpush1.msra.mxu0 %v1939
    %2309 = vmatprep.subr.mxu0 0.0
    %2310 = vmatpush1.msra.mxu0 %v1938
    %2311 = vmatprep.subr.mxu0 0.0
    %2312 = vmatpush1.msra.mxu0 %v1937
    %2313 = vmatprep.subr.mxu0 0.0
    %2314 = vmatpush2.msra.mxu0 0.0
    %2315 = vmatprep.subr.mxu0 0.0
    %2316 = vmatpush2.msra.mxu0 0.0
    %2317 = vmatprep.subr.mxu0 0.0
    %2318 = vmatpush2.msra.mxu0 0.0
    %2319 = vmatprep.subr.mxu0 0.0
    %2320 = vmatpush2.msra.mxu0 0.0
    %2321 = vmatprep.subr.mxu0 0.0
    %2322 = vmatpush2.msra.mxu0 0.0
    %2323 = vmatprep.subr.mxu0 0.0
    %2324 = vmatpush2.msra.mxu0 0.0
    %2325 = vmatprep.subr.mxu0 0.0
    %2326 = vmatpush2.msra.mxu0 0.0
    %2327 = vmatprep.subr.mxu0 0.0
    %2328 = vmatpush2.msra.mxu0 0.0
    %2329 = vmatprep.subr.mxu0 0.0
    %2330 = vmatpush2.msra.mxu0 0.0
    %2331 = vmatprep.subr.mxu0 0.0
    %2332 = vmatpush2.msra.mxu0 0.0
    %2333 = vmatprep.subr.mxu0 0.0
    %2334 = vmatpush2.msra.mxu0 0.0
    %2335 = vmatprep.subr.mxu0 0.0
    %2336 = vmatpush2.msra.mxu0 0.0
    %2337 = vmatprep.subr.mxu0 0.0
    %2338 = vmatpush2.msra.mxu0 0.0
    %2339 = vmatprep.subr.mxu0 0.0
    %2340 = vmatpush2.msra.mxu0 0.0
    %2341 = vmatprep.subr.mxu0 0.0
    %2342 = vmatpush2.msra.mxu0 0.0
    %2343 = vmatprep.subr.mxu0 0.0
    %2344 = vmatpush2.msra.mxu0 0.0
    %2345 = vmatprep.mubr.f32.mxu0 0.0
    %2346 = vmatmul.mubr.f32.gmra.mxu0 %v2279
    %v2347 = vpop.f32.mrf.mxu0
    %v2348 = vadd.f32 0.0, %v2347
    %v2349 = vpop.f32.mrf.mxu0
    %2350 = vdwg.mxu0
    %v2351 = vadd.f32 %v2278, %v2348
    %v2352 = vxor.u32 %v2351, 2147483648
    %v2353 = vmul.f32 %v2352, 1.442695
    %v2354 = vpow.pop %v2353
    %v2355 = vadd.f32 %v2354, 1.0
    %v2356 = vrcp.pop %v2355
    %v2357 = vmul.f32 1.0, %v2356
    %v2358 = vtanh.pop %v2351
    %v2359 = vmul.f32 %v2357, %v2266
    %2361 = vrot.lane.b32.xlu0 %v2358, 64
    %v2362 = vpop.permute.xlu0 %2361
    %v2364 = vmul.f32 %v2357, %v2362
    %2366 = vrot.lane.b32.xlu0 %v2364, 32
    %v2367 = vpop.permute.xlu0 %2366
    %v2369 = vadd.f32 %v2359, %v2367
    %v2370 = vtanh.pop %v2369
    %2372 = vrot.lane.b32.xlu0 %v2370, 64
    %v2373 = vpop.permute.xlu0 %2372
    %v2375 = vmul.f32 %v2357, %v2373
    %2377 = vrot.lane.b32.xlu0 %v2375, 32
    %v2378 = vpop.permute.xlu0 %2377
    %2380 = vst.msk [vmem:[#allocation3 + $0x8] sm:$0x3] %vm264, %v2378
    %v2381 = vld [vmem:[#allocation2 + $0xa] sm:$0x3]
    %v2382 = vsel %vm267, %v2378, 0
    %2384 = vmatprep.subr.mxu0 0.0
    %2385 = vmatpush1.msra.mxu0 0.0
    %2386 = vmatprep.subr.mxu0 0.0
    %2387 = vmatpush1.msra.mxu0 0.0
    %2388 = vmatprep.subr.mxu0 0.0
    %2389 = vmatpush1.msra.mxu0 0.0
    %2390 = vmatprep.subr.mxu0 0.0
    %2391 = vmatpush1.msra.mxu0 0.0
    %2392 = vmatprep.subr.mxu0 0.0
    %2393 = vmatpush1.msra.mxu0 0.0
    %2394 = vmatprep.subr.mxu0 0.0
    %2395 = vmatpush1.msra.mxu0 0.0
    %2396 = vmatprep.subr.mxu0 0.0
    %2397 = vmatpush1.msra.mxu0 0.0
    %2398 = vmatprep.subr.mxu0 0.0
    %2399 = vmatpush1.msra.mxu0 0.0
    %2400 = vmatprep.subr.mxu0 0.0
    %2401 = vmatpush1.msra.mxu0 0.0
    %2402 = vmatprep.subr.mxu0 0.0
    %2403 = vmatpush1.msra.mxu0 0.0
    %2404 = vmatprep.subr.mxu0 0.0
    %2405 = vmatpush1.msra.mxu0 0.0
    %2406 = vmatprep.subr.mxu0 0.0
    %2407 = vmatpush1.msra.mxu0 0.0
    %2408 = vmatprep.subr.mxu0 0.0
    %2409 = vmatpush1.msra.mxu0 %v1940
    %2410 = vmatprep.subr.mxu0 0.0
    %2411 = vmatpush1.msra.mxu0 %v1939
    %2412 = vmatprep.subr.mxu0 0.0
    %2413 = vmatpush1.msra.mxu0 %v1938
    %2414 = vmatprep.subr.mxu0 0.0
    %2415 = vmatpush1.msra.mxu0 %v1937
    %2416 = vmatprep.subr.mxu0 0.0
    %2417 = vmatpush2.msra.mxu0 0.0
    %2418 = vmatprep.subr.mxu0 0.0
    %2419 = vmatpush2.msra.mxu0 0.0
    %2420 = vmatprep.subr.mxu0 0.0
    %2421 = vmatpush2.msra.mxu0 0.0
    %2422 = vmatprep.subr.mxu0 0.0
    %2423 = vmatpush2.msra.mxu0 0.0
    %2424 = vmatprep.subr.mxu0 0.0
    %2425 = vmatpush2.msra.mxu0 0.0
    %2426 = vmatprep.subr.mxu0 0.0
    %2427 = vmatpush2.msra.mxu0 0.0
    %2428 = vmatprep.subr.mxu0 0.0
    %2429 = vmatpush2.msra.mxu0 0.0
    %2430 = vmatprep.subr.mxu0 0.0
    %2431 = vmatpush2.msra.mxu0 0.0
    %2432 = vmatprep.subr.mxu0 0.0
    %2433 = vmatpush2.msra.mxu0 0.0
    %2434 = vmatprep.subr.mxu0 0.0
    %2435 = vmatpush2.msra.mxu0 0.0
    %2436 = vmatprep.subr.mxu0 0.0
    %2437 = vmatpush2.msra.mxu0 0.0
    %2438 = vmatprep.subr.mxu0 0.0
    %2439 = vmatpush2.msra.mxu0 0.0
    %2440 = vmatprep.subr.mxu0 0.0
    %2441 = vmatpush2.msra.mxu0 0.0
    %2442 = vmatprep.subr.mxu0 0.0
    %2443 = vmatpush2.msra.mxu0 0.0
    %2444 = vmatprep.subr.mxu0 0.0
    %2445 = vmatpush2.msra.mxu0 0.0
    %2446 = vmatprep.subr.mxu0 0.0
    %2447 = vmatpush2.msra.mxu0 0.0
    %2448 = vmatprep.mubr.f32.mxu0 0.0
    %2449 = vmatmul.mubr.f32.gmra.mxu0 %v2382
    %v2450 = vpop.f32.mrf.mxu0
    %v2451 = vadd.f32 0.0, %v2450
    %v2452 = vpop.f32.mrf.mxu0
    %2453 = vdwg.mxu0
    %v2454 = vadd.f32 %v2381, %v2451
    %v2455 = vxor.u32 %v2454, 2147483648
    %v2456 = vmul.f32 %v2455, 1.442695
    %v2457 = vpow.pop %v2456
    %v2458 = vadd.f32 %v2457, 1.0
    %v2459 = vrcp.pop %v2458
    %v2460 = vmul.f32 1.0, %v2459
    %v2461 = vtanh.pop %v2454
    %v2462 = vmul.f32 %v2460, %v2369
    %2464 = vrot.lane.b32.xlu0 %v2461, 64
    %v2465 = vpop.permute.xlu0 %2464
    %v2467 = vmul.f32 %v2460, %v2465
    %2469 = vrot.lane.b32.xlu0 %v2467, 32
    %v2470 = vpop.permute.xlu0 %2469
    %v2472 = vadd.f32 %v2462, %v2470
    %v2473 = vtanh.pop %v2472
    %2475 = vrot.lane.b32.xlu0 %v2473, 64
    %v2476 = vpop.permute.xlu0 %2475
    %v2478 = vmul.f32 %v2460, %v2476
    %2480 = vrot.lane.b32.xlu0 %v2478, 32
    %v2481 = vpop.permute.xlu0 %2480
    %2483 = vst.msk [vmem:[#allocation3 + $0xa] sm:$0x3] %vm264, %v2481
    %v2484 = vld [vmem:[#allocation2 + $0xc] sm:$0x3]
    %v2485 = vsel %vm267, %v2481, 0
    %2487 = vmatprep.subr.mxu0 0.0
    %2488 = vmatpush1.msra.mxu0 0.0
    %2489 = vmatprep.subr.mxu0 0.0
    %2490 = vmatpush1.msra.mxu0 0.0
    %2491 = vmatprep.subr.mxu0 0.0
    %2492 = vmatpush1.msra.mxu0 0.0
    %2493 = vmatprep.subr.mxu0 0.0
    %2494 = vmatpush1.msra.mxu0 0.0
    %2495 = vmatprep.subr.mxu0 0.0
    %2496 = vmatpush1.msra.mxu0 0.0
    %2497 = vmatprep.subr.mxu0 0.0
    %2498 = vmatpush1.msra.mxu0 0.0
    %2499 = vmatprep.subr.mxu0 0.0
    %2500 = vmatpush1.msra.mxu0 0.0
    %2501 = vmatprep.subr.mxu0 0.0
    %2502 = vmatpush1.msra.mxu0 0.0
    %2503 = vmatprep.subr.mxu0 0.0
    %2504 = vmatpush1.msra.mxu0 0.0
    %2505 = vmatprep.subr.mxu0 0.0
    %2506 = vmatpush1.msra.mxu0 0.0
    %2507 = vmatprep.subr.mxu0 0.0
    %2508 = vmatpush1.msra.mxu0 0.0
    %2509 = vmatprep.subr.mxu0 0.0
    %2510 = vmatpush1.msra.mxu0 0.0
    %2511 = vmatprep.subr.mxu0 0.0
    %2512 = vmatpush1.msra.mxu0 %v1940
    %2513 = vmatprep.subr.mxu0 0.0
    %2514 = vmatpush1.msra.mxu0 %v1939
    %2515 = vmatprep.subr.mxu0 0.0
    %2516 = vmatpush1.msra.mxu0 %v1938
    %2517 = vmatprep.subr.mxu0 0.0
    %2518 = vmatpush1.msra.mxu0 %v1937
    %2519 = vmatprep.subr.mxu0 0.0
    %2520 = vmatpush2.msra.mxu0 0.0
    %2521 = vmatprep.subr.mxu0 0.0
    %2522 = vmatpush2.msra.mxu0 0.0
    %2523 = vmatprep.subr.mxu0 0.0
    %2524 = vmatpush2.msra.mxu0 0.0
    %2525 = vmatprep.subr.mxu0 0.0
    %2526 = vmatpush2.msra.mxu0 0.0
    %2527 = vmatprep.subr.mxu0 0.0
    %2528 = vmatpush2.msra.mxu0 0.0
    %2529 = vmatprep.subr.mxu0 0.0
    %2530 = vmatpush2.msra.mxu0 0.0
    %2531 = vmatprep.subr.mxu0 0.0
    %2532 = vmatpush2.msra.mxu0 0.0
    %2533 = vmatprep.subr.mxu0 0.0
    %2534 = vmatpush2.msra.mxu0 0.0
    %2535 = vmatprep.subr.mxu0 0.0
    %2536 = vmatpush2.msra.mxu0 0.0
    %2537 = vmatprep.subr.mxu0 0.0
    %2538 = vmatpush2.msra.mxu0 0.0
    %2539 = vmatprep.subr.mxu0 0.0
    %2540 = vmatpush2.msra.mxu0 0.0
    %2541 = vmatprep.subr.mxu0 0.0
    %2542 = vmatpush2.msra.mxu0 0.0
    %2543 = vmatprep.subr.mxu0 0.0
    %2544 = vmatpush2.msra.mxu0 0.0
    %2545 = vmatprep.subr.mxu0 0.0
    %2546 = vmatpush2.msra.mxu0 0.0
    %2547 = vmatprep.subr.mxu0 0.0
    %2548 = vmatpush2.msra.mxu0 0.0
    %2549 = vmatprep.subr.mxu0 0.0
    %2550 = vmatpush2.msra.mxu0 0.0
    %2551 = vmatprep.mubr.f32.mxu0 0.0
    %2552 = vmatmul.mubr.f32.gmra.mxu0 %v2485
    %v2553 = vpop.f32.mrf.mxu0
    %v2554 = vadd.f32 0.0, %v2553
    %v2555 = vpop.f32.mrf.mxu0
    %2556 = vdwg.mxu0
    %v2557 = vadd.f32 %v2484, %v2554
    %v2558 = vxor.u32 %v2557, 2147483648
    %v2559 = vmul.f32 %v2558, 1.442695
    %v2560 = vpow.pop %v2559
    %v2561 = vadd.f32 %v2560, 1.0
    %v2562 = vrcp.pop %v2561
    %v2563 = vmul.f32 1.0, %v2562
    %v2564 = vtanh.pop %v2557
    %v2565 = vmul.f32 %v2563, %v2472
    %2567 = vrot.lane.b32.xlu0 %v2564, 64
    %v2568 = vpop.permute.xlu0 %2567
    %v2570 = vmul.f32 %v2563, %v2568
    %2572 = vrot.lane.b32.xlu0 %v2570, 32
    %v2573 = vpop.permute.xlu0 %2572
    %v2575 = vadd.f32 %v2565, %v2573
    %v2576 = vtanh.pop %v2575
    %2578 = vrot.lane.b32.xlu0 %v2576, 64
    %v2579 = vpop.permute.xlu0 %2578
    %v2581 = vmul.f32 %v2563, %v2579
    %2583 = vrot.lane.b32.xlu0 %v2581, 32
    %v2584 = vpop.permute.xlu0 %2583
    %2586 = vst.msk [vmem:[#allocation3 + $0xc] sm:$0x3] %vm264, %v2584
    %v2587 = vld [vmem:[#allocation2 + $0xe] sm:$0x3]
    %v2588 = vsel %vm267, %v2584, 0
    %2590 = vmatprep.subr.mxu0 0.0
    %2591 = vmatpush1.msra.mxu0 0.0
    %2592 = vmatprep.subr.mxu0 0.0
    %2593 = vmatpush1.msra.mxu0 0.0
    %2594 = vmatprep.subr.mxu0 0.0
    %2595 = vmatpush1.msra.mxu0 0.0
    %2596 = vmatprep.subr.mxu0 0.0
    %2597 = vmatpush1.msra.mxu0 0.0
    %2598 = vmatprep.subr.mxu0 0.0
    %2599 = vmatpush1.msra.mxu0 0.0
    %2600 = vmatprep.subr.mxu0 0.0
    %2601 = vmatpush1.msra.mxu0 0.0
    %2602 = vmatprep.subr.mxu0 0.0
    %2603 = vmatpush1.msra.mxu0 0.0
    %2604 = vmatprep.subr.mxu0 0.0
    %2605 = vmatpush1.msra.mxu0 0.0
    %2606 = vmatprep.subr.mxu0 0.0
    %2607 = vmatpush1.msra.mxu0 0.0
    %2608 = vmatprep.subr.mxu0 0.0
    %2609 = vmatpush1.msra.mxu0 0.0
    %2610 = vmatprep.subr.mxu0 0.0
    %2611 = vmatpush1.msra.mxu0 0.0
    %2612 = vmatprep.subr.mxu0 0.0
    %2613 = vmatpush1.msra.mxu0 0.0
    %2614 = vmatprep.subr.mxu0 0.0
    %2615 = vmatpush1.msra.mxu0 %v1940
    %2616 = vmatprep.subr.mxu0 0.0
    %2617 = vmatpush1.msra.mxu0 %v1939
    %2618 = vmatprep.subr.mxu0 0.0
    %2619 = vmatpush1.msra.mxu0 %v1938
    %2620 = vmatprep.subr.mxu0 0.0
    %2621 = vmatpush1.msra.mxu0 %v1937
    %2622 = vmatprep.subr.mxu0 0.0
    %2623 = vmatpush2.msra.mxu0 0.0
    %2624 = vmatprep.subr.mxu0 0.0
    %2625 = vmatpush2.msra.mxu0 0.0
    %2626 = vmatprep.subr.mxu0 0.0
    %2627 = vmatpush2.msra.mxu0 0.0
    %2628 = vmatprep.subr.mxu0 0.0
    %2629 = vmatpush2.msra.mxu0 0.0
    %2630 = vmatprep.subr.mxu0 0.0
    %2631 = vmatpush2.msra.mxu0 0.0
    %2632 = vmatprep.subr.mxu0 0.0
    %2633 = vmatpush2.msra.mxu0 0.0
    %2634 = vmatprep.subr.mxu0 0.0
    %2635 = vmatpush2.msra.mxu0 0.0
    %2636 = vmatprep.subr.mxu0 0.0
    %2637 = vmatpush2.msra.mxu0 0.0
    %2638 = vmatprep.subr.mxu0 0.0
    %2639 = vmatpush2.msra.mxu0 0.0
    %2640 = vmatprep.subr.mxu0 0.0
    %2641 = vmatpush2.msra.mxu0 0.0
    %2642 = vmatprep.subr.mxu0 0.0
    %2643 = vmatpush2.msra.mxu0 0.0
    %2644 = vmatprep.subr.mxu0 0.0
    %2645 = vmatpush2.msra.mxu0 0.0
    %2646 = vmatprep.subr.mxu0 0.0
    %2647 = vmatpush2.msra.mxu0 0.0
    %2648 = vmatprep.subr.mxu0 0.0
    %2649 = vmatpush2.msra.mxu0 0.0
    %2650 = vmatprep.subr.mxu0 0.0
    %2651 = vmatpush2.msra.mxu0 0.0
    %2652 = vmatprep.subr.mxu0 0.0
    %2653 = vmatpush2.msra.mxu0 0.0
    %2654 = vmatprep.mubr.f32.mxu0 0.0
    %2655 = vmatmul.mubr.f32.gmra.mxu0 %v2588
    %v2656 = vpop.f32.mrf.mxu0
    %v2657 = vadd.f32 0.0, %v2656
    %v2658 = vpop.f32.mrf.mxu0
    %2659 = vdwg.mxu0
    %v2660 = vadd.f32 %v2587, %v2657
    %v2661 = vxor.u32 %v2660, 2147483648
    %v2662 = vmul.f32 %v2661, 1.442695
    %v2663 = vpow.pop %v2662
    %v2664 = vadd.f32 %v2663, 1.0
    %v2665 = vrcp.pop %v2664
    %v2666 = vmul.f32 1.0, %v2665
    %v2667 = vtanh.pop %v2660
    %v2668 = vmul.f32 %v2666, %v2575
    %2670 = vrot.lane.b32.xlu0 %v2667, 64
    %v2671 = vpop.permute.xlu0 %2670
    %v2673 = vmul.f32 %v2666, %v2671
    %2675 = vrot.lane.b32.xlu0 %v2673, 32
    %v2676 = vpop.permute.xlu0 %2675
    %v2678 = vadd.f32 %v2668, %v2676
    %v2679 = vtanh.pop %v2678
    %2681 = vrot.lane.b32.xlu0 %v2679, 64
    %v2682 = vpop.permute.xlu0 %2681
    %v2684 = vmul.f32 %v2666, %v2682
    %2686 = vrot.lane.b32.xlu0 %v2684, 32
    %v2687 = vpop.permute.xlu0 %2686
    %2689 = vst.msk [vmem:[#allocation3 + $0xe] sm:$0x3] %vm264, %v2687
    %v2690 = vld [vmem:[#allocation3] sm:$0xff]
    %v2691 = vld [vmem:[#allocation3 + $0x8] sm:$0xff]
    %v2692 = vld [vmem:[#allocation13] sm:$0xff]
    %v2693 = vld [vmem:[#allocation13 + $0x8] sm:$0xff]
    %v2694 = vld [vmem:[#allocation13 + $0x10] sm:$0xff]
    %v2695 = vld [vmem:[#allocation13 + $0x18] sm:$0xff]
    %v2696 = vld [vmem:[%s12] sm:$0x1]
    %v2698 = vlaneseq
    %v2699 = vshrl.u32 %v2698, 7
    %v2700 = vsub.s32 0, %v2699
    %v2701 = vrot.slane %v2696, %v2700
    %v2704 = vsel %vm267, %v2690, 0
    %v2707 = vsel %vm267, %v2691, 0
    %2709 = vmatprep.subr.mxu0 0.0
    %2710 = vmatpush1.msra.mxu0 0.0
    %2711 = vmatprep.subr.mxu0 0.0
    %2712 = vmatpush1.msra.mxu0 0.0
    %2713 = vmatprep.subr.mxu0 0.0
    %2714 = vmatpush1.msra.mxu0 0.0
    %2715 = vmatprep.subr.mxu0 0.0
    %2716 = vmatpush1.msra.mxu0 0.0
    %2717 = vmatprep.subr.mxu0 0.0
    %2718 = vmatpush1.msra.mxu0 0.0
    %2719 = vmatprep.subr.mxu0 0.0
    %2720 = vmatpush1.msra.mxu0 0.0
    %2721 = vmatprep.subr.mxu0 0.0
    %2722 = vmatpush1.msra.mxu0 0.0
    %2723 = vmatprep.subr.mxu0 0.0
    %2724 = vmatpush1.msra.mxu0 0.0
    %2725 = vmatprep.subr.mxu0 0.0
    %2726 = vmatpush1.msra.mxu0 0.0
    %2727 = vmatprep.subr.mxu0 0.0
    %2728 = vmatpush1.msra.mxu0 0.0
    %2729 = vmatprep.subr.mxu0 0.0
    %2730 = vmatpush1.msra.mxu0 0.0
    %2731 = vmatprep.subr.mxu0 0.0
    %2732 = vmatpush1.msra.mxu0 0.0
    %2733 = vmatprep.subr.mxu0 0.0
    %2734 = vmatpush1.msra.mxu0 %v2695
    %2735 = vmatprep.subr.mxu0 0.0
    %2736 = vmatpush1.msra.mxu0 %v2694
    %2737 = vmatprep.subr.mxu0 0.0
    %2738 = vmatpush1.msra.mxu0 %v2693
    %2739 = vmatprep.subr.mxu0 0.0
    %2740 = vmatpush1.msra.mxu0 %v2692
    %2741 = vmatprep.subr.mxu0 0.0
    %2742 = vmatpush2.msra.mxu0 0.0
    %2743 = vmatprep.subr.mxu0 0.0
    %2744 = vmatpush2.msra.mxu0 0.0
    %2745 = vmatprep.subr.mxu0 0.0
    %2746 = vmatpush2.msra.mxu0 0.0
    %2747 = vmatprep.subr.mxu0 0.0
    %2748 = vmatpush2.msra.mxu0 0.0
    %2749 = vmatprep.subr.mxu0 0.0
    %2750 = vmatpush2.msra.mxu0 0.0
    %2751 = vmatprep.subr.mxu0 0.0
    %2752 = vmatpush2.msra.mxu0 0.0
    %2753 = vmatprep.subr.mxu0 0.0
    %2754 = vmatpush2.msra.mxu0 0.0
    %2755 = vmatprep.subr.mxu0 0.0
    %2756 = vmatpush2.msra.mxu0 0.0
    %2757 = vmatprep.subr.mxu0 0.0
    %2758 = vmatpush2.msra.mxu0 0.0
    %2759 = vmatprep.subr.mxu0 0.0
    %2760 = vmatpush2.msra.mxu0 0.0
    %2761 = vmatprep.subr.mxu0 0.0
    %2762 = vmatpush2.msra.mxu0 0.0
    %2763 = vmatprep.subr.mxu0 0.0
    %2764 = vmatpush2.msra.mxu0 0.0
    %2765 = vmatprep.subr.mxu0 0.0
    %2766 = vmatpush2.msra.mxu0 0.0
    %2767 = vmatprep.subr.mxu0 0.0
    %2768 = vmatpush2.msra.mxu0 0.0
    %2769 = vmatprep.subr.mxu0 0.0
    %2770 = vmatpush2.msra.mxu0 0.0
    %2771 = vmatprep.subr.mxu0 0.0
    %2772 = vmatpush2.msra.mxu0 0.0
    %2773 = vmatprep.mubr.f32.mxu0 0.0
    %2774 = vmatmul.mubr.f32.gmra.mxu0 %v2704
    %v2775 = vpop.f32.mrf.mxu0
    %v2776 = vadd.f32 %v2701, %v2775
    %v2777 = vpop.f32.mrf.mxu0
    %2778 = vmatprep.mubr.f32.mxu0 0.0
    %2779 = vmatmul.mubr.f32.gmra.mxu0 %v2707
    %v2780 = vpop.f32.mrf.mxu0
    %v2781 = vadd.f32 %v2701, %v2780
    %v2782 = vpop.f32.mrf.mxu0
    %2783 = vdwg.mxu0
    %2784 = vst [vmem:[#allocation2] sm:$0xff] %v2776
    %2785 = vst [vmem:[#allocation2 + $0x8] sm:$0xff] %v2781
    %v2786 = vld [vmem:[#allocation15] sm:$0xff]
    %v2787 = vld [vmem:[#allocation15 + $0x8] sm:$0xff]
    %v2788 = vld [vmem:[#allocation15 + $0x10] sm:$0xff]
    %v2789 = vld [vmem:[#allocation15 + $0x18] sm:$0xff]
    %v2790 = vld [vmem:[#allocation2] sm:$0x3]
    %v2791 = vxor.u32 %v2790, 2147483648
    %v2792 = vmul.f32 %v2791, 1.442695
    %v2793 = vpow.pop %v2792
    %v2794 = vadd.f32 %v2793, 1.0
    %v2795 = vrcp.pop %v2794
    %v2796 = vmul.f32 1.0, %v2795
    %v2797 = vtanh.pop %v2790
    %2799 = vrot.lane.b32.xlu0 %v2797, 64
    %v2800 = vpop.permute.xlu0 %2799
    %v2802 = vmul.f32 %v2796, %v2800
    %v2803 = vtanh.pop %v2802
    %2805 = vrot.lane.b32.xlu0 %v2803, 96
    %v2806 = vpop.permute.xlu0 %2805
    %v2808 = vmul.f32 %v2796, %v2806
    %2810 = vrot.lane.b32.xlu0 %v2808, 32
    %v2811 = vpop.permute.xlu0 %2810
    %2813 = vst.msk [vmem:[#allocation3] sm:$0x3] %vm264, %v2811
    %v2814 = vld [vmem:[#allocation2 + $0x2] sm:$0x3]
    %v2815 = vsel %vm267, %v2811, 0
    %2817 = vmatprep.subr.mxu0 0.0
    %2818 = vmatpush1.msra.mxu0 0.0
    %2819 = vmatprep.subr.mxu0 0.0
    %2820 = vmatpush1.msra.mxu0 0.0
    %2821 = vmatprep.subr.mxu0 0.0
    %2822 = vmatpush1.msra.mxu0 0.0
    %2823 = vmatprep.subr.mxu0 0.0
    %2824 = vmatpush1.msra.mxu0 0.0
    %2825 = vmatprep.subr.mxu0 0.0
    %2826 = vmatpush1.msra.mxu0 0.0
    %2827 = vmatprep.subr.mxu0 0.0
    %2828 = vmatpush1.msra.mxu0 0.0
    %2829 = vmatprep.subr.mxu0 0.0
    %2830 = vmatpush1.msra.mxu0 0.0
    %2831 = vmatprep.subr.mxu0 0.0
    %2832 = vmatpush1.msra.mxu0 0.0
    %2833 = vmatprep.subr.mxu0 0.0
    %2834 = vmatpush1.msra.mxu0 0.0
    %2835 = vmatprep.subr.mxu0 0.0
    %2836 = vmatpush1.msra.mxu0 0.0
    %2837 = vmatprep.subr.mxu0 0.0
    %2838 = vmatpush1.msra.mxu0 0.0
    %2839 = vmatprep.subr.mxu0 0.0
    %2840 = vmatpush1.msra.mxu0 0.0
    %2841 = vmatprep.subr.mxu0 0.0
    %2842 = vmatpush1.msra.mxu0 %v2789
    %2843 = vmatprep.subr.mxu0 0.0
    %2844 = vmatpush1.msra.mxu0 %v2788
    %2845 = vmatprep.subr.mxu0 0.0
    %2846 = vmatpush1.msra.mxu0 %v2787
    %2847 = vmatprep.subr.mxu0 0.0
    %2848 = vmatpush1.msra.mxu0 %v2786
    %2849 = vmatprep.subr.mxu0 0.0
    %2850 = vmatpush2.msra.mxu0 0.0
    %2851 = vmatprep.subr.mxu0 0.0
    %2852 = vmatpush2.msra.mxu0 0.0
    %2853 = vmatprep.subr.mxu0 0.0
    %2854 = vmatpush2.msra.mxu0 0.0
    %2855 = vmatprep.subr.mxu0 0.0
    %2856 = vmatpush2.msra.mxu0 0.0
    %2857 = vmatprep.subr.mxu0 0.0
    %2858 = vmatpush2.msra.mxu0 0.0
    %2859 = vmatprep.subr.mxu0 0.0
    %2860 = vmatpush2.msra.mxu0 0.0
    %2861 = vmatprep.subr.mxu0 0.0
    %2862 = vmatpush2.msra.mxu0 0.0
    %2863 = vmatprep.subr.mxu0 0.0
    %2864 = vmatpush2.msra.mxu0 0.0
    %2865 = vmatprep.subr.mxu0 0.0
    %2866 = vmatpush2.msra.mxu0 0.0
    %2867 = vmatprep.subr.mxu0 0.0
    %2868 = vmatpush2.msra.mxu0 0.0
    %2869 = vmatprep.subr.mxu0 0.0
    %2870 = vmatpush2.msra.mxu0 0.0
    %2871 = vmatprep.subr.mxu0 0.0
    %2872 = vmatpush2.msra.mxu0 0.0
    %2873 = vmatprep.subr.mxu0 0.0
    %2874 = vmatpush2.msra.mxu0 0.0
    %2875 = vmatprep.subr.mxu0 0.0
    %2876 = vmatpush2.msra.mxu0 0.0
    %2877 = vmatprep.subr.mxu0 0.0
    %2878 = vmatpush2.msra.mxu0 0.0
    %2879 = vmatprep.subr.mxu0 0.0
    %2880 = vmatpush2.msra.mxu0 0.0
    %2881 = vmatprep.mubr.f32.mxu0 0.0
    %2882 = vmatmul.mubr.f32.gmra.mxu0 %v2815
    %v2883 = vpop.f32.mrf.mxu0
    %v2884 = vadd.f32 0.0, %v2883
    %v2885 = vpop.f32.mrf.mxu0
    %2886 = vdwg.mxu0
    %v2887 = vadd.f32 %v2814, %v2884
    %v2888 = vxor.u32 %v2887, 2147483648
    %v2889 = vmul.f32 %v2888, 1.442695
    %v2890 = vpow.pop %v2889
    %v2891 = vadd.f32 %v2890, 1.0
    %v2892 = vrcp.pop %v2891
    %v2893 = vmul.f32 1.0, %v2892
    %v2894 = vtanh.pop %v2887
    %2896 = vrot.lane.b32.xlu0 %v2802, 32
    %v2897 = vpop.permute.xlu0 %2896
    %v2899 = vmul.f32 %v2893, %v2897
    %2901 = vrot.lane.b32.xlu0 %v2894, 64
    %v2902 = vpop.permute.xlu0 %2901
    %v2904 = vmul.f32 %v2893, %v2902
    %2906 = vrot.lane.b32.xlu0 %v2904, 32
    %v2907 = vpop.permute.xlu0 %2906
    %v2909 = vadd.f32 %v2899, %v2907
    %v2910 = vtanh.pop %v2909
    %2912 = vrot.lane.b32.xlu0 %v2910, 64
    %v2913 = vpop.permute.xlu0 %2912
    %v2915 = vmul.f32 %v2893, %v2913
    %2917 = vrot.lane.b32.xlu0 %v2915, 32
    %v2918 = vpop.permute.xlu0 %2917
    %2920 = vst.msk [vmem:[#allocation3 + $0x2] sm:$0x3] %vm264, %v2918
    %v2921 = vld [vmem:[#allocation2 + $0x4] sm:$0x3]
    %v2922 = vsel %vm267, %v2918, 0
    %2924 = vmatprep.subr.mxu0 0.0
    %2925 = vmatpush1.msra.mxu0 0.0
    %2926 = vmatprep.subr.mxu0 0.0
    %2927 = vmatpush1.msra.mxu0 0.0
    %2928 = vmatprep.subr.mxu0 0.0
    %2929 = vmatpush1.msra.mxu0 0.0
    %2930 = vmatprep.subr.mxu0 0.0
    %2931 = vmatpush1.msra.mxu0 0.0
    %2932 = vmatprep.subr.mxu0 0.0
    %2933 = vmatpush1.msra.mxu0 0.0
    %2934 = vmatprep.subr.mxu0 0.0
    %2935 = vmatpush1.msra.mxu0 0.0
    %2936 = vmatprep.subr.mxu0 0.0
    %2937 = vmatpush1.msra.mxu0 0.0
    %2938 = vmatprep.subr.mxu0 0.0
    %2939 = vmatpush1.msra.mxu0 0.0
    %2940 = vmatprep.subr.mxu0 0.0
    %2941 = vmatpush1.msra.mxu0 0.0
    %2942 = vmatprep.subr.mxu0 0.0
    %2943 = vmatpush1.msra.mxu0 0.0
    %2944 = vmatprep.subr.mxu0 0.0
    %2945 = vmatpush1.msra.mxu0 0.0
    %2946 = vmatprep.subr.mxu0 0.0
    %2947 = vmatpush1.msra.mxu0 0.0
    %2948 = vmatprep.subr.mxu0 0.0
    %2949 = vmatpush1.msra.mxu0 %v2789
    %2950 = vmatprep.subr.mxu0 0.0
    %2951 = vmatpush1.msra.mxu0 %v2788
    %2952 = vmatprep.subr.mxu0 0.0
    %2953 = vmatpush1.msra.mxu0 %v2787
    %2954 = vmatprep.subr.mxu0 0.0
    %2955 = vmatpush1.msra.mxu0 %v2786
    %2956 = vmatprep.subr.mxu0 0.0
    %2957 = vmatpush2.msra.mxu0 0.0
    %2958 = vmatprep.subr.mxu0 0.0
    %2959 = vmatpush2.msra.mxu0 0.0
    %2960 = vmatprep.subr.mxu0 0.0
    %2961 = vmatpush2.msra.mxu0 0.0
    %2962 = vmatprep.subr.mxu0 0.0
    %2963 = vmatpush2.msra.mxu0 0.0
    %2964 = vmatprep.subr.mxu0 0.0
    %2965 = vmatpush2.msra.mxu0 0.0
    %2966 = vmatprep.subr.mxu0 0.0
    %2967 = vmatpush2.msra.mxu0 0.0
    %2968 = vmatprep.subr.mxu0 0.0
    %2969 = vmatpush2.msra.mxu0 0.0
    %2970 = vmatprep.subr.mxu0 0.0
    %2971 = vmatpush2.msra.mxu0 0.0
    %2972 = vmatprep.subr.mxu0 0.0
    %2973 = vmatpush2.msra.mxu0 0.0
    %2974 = vmatprep.subr.mxu0 0.0
    %2975 = vmatpush2.msra.mxu0 0.0
    %2976 = vmatprep.subr.mxu0 0.0
    %2977 = vmatpush2.msra.mxu0 0.0
    %2978 = vmatprep.subr.mxu0 0.0
    %2979 = vmatpush2.msra.mxu0 0.0
    %2980 = vmatprep.subr.mxu0 0.0
    %2981 = vmatpush2.msra.mxu0 0.0
    %2982 = vmatprep.subr.mxu0 0.0
    %2983 = vmatpush2.msra.mxu0 0.0
    %2984 = vmatprep.subr.mxu0 0.0
    %2985 = vmatpush2.msra.mxu0 0.0
    %2986 = vmatprep.subr.mxu0 0.0
    %2987 = vmatpush2.msra.mxu0 0.0
    %2988 = vmatprep.mubr.f32.mxu0 0.0
    %2989 = vmatmul.mubr.f32.gmra.mxu0 %v2922
    %v2990 = vpop.f32.mrf.mxu0
    %v2991 = vadd.f32 0.0, %v2990
    %v2992 = vpop.f32.mrf.mxu0
    %2993 = vdwg.mxu0
    %v2994 = vadd.f32 %v2921, %v2991
    %v2995 = vxor.u32 %v2994, 2147483648
    %v2996 = vmul.f32 %v2995, 1.442695
    %v2997 = vpow.pop %v2996
    %v2998 = vadd.f32 %v2997, 1.0
    %v2999 = vrcp.pop %v2998
    %v3000 = vmul.f32 1.0, %v2999
    %v3001 = vtanh.pop %v2994
    %v3002 = vmul.f32 %v3000, %v2909
    %3004 = vrot.lane.b32.xlu0 %v3001, 64
    %v3005 = vpop.permute.xlu0 %3004
    %v3007 = vmul.f32 %v3000, %v3005
    %3009 = vrot.lane.b32.xlu0 %v3007, 32
    %v3010 = vpop.permute.xlu0 %3009
    %v3012 = vadd.f32 %v3002, %v3010
    %v3013 = vtanh.pop %v3012
    %3015 = vrot.lane.b32.xlu0 %v3013, 64
    %v3016 = vpop.permute.xlu0 %3015
    %v3018 = vmul.f32 %v3000, %v3016
    %3020 = vrot.lane.b32.xlu0 %v3018, 32
    %v3021 = vpop.permute.xlu0 %3020
    %3023 = vst.msk [vmem:[#allocation3 + $0x4] sm:$0x3] %vm264, %v3021
    %v3024 = vld [vmem:[#allocation2 + $0x6] sm:$0x3]
    %v3025 = vsel %vm267, %v3021, 0
    %3027 = vmatprep.subr.mxu0 0.0
    %3028 = vmatpush1.msra.mxu0 0.0
    %3029 = vmatprep.subr.mxu0 0.0
    %3030 = vmatpush1.msra.mxu0 0.0
    %3031 = vmatprep.subr.mxu0 0.0
    %3032 = vmatpush1.msra.mxu0 0.0
    %3033 = vmatprep.subr.mxu0 0.0
    %3034 = vmatpush1.msra.mxu0 0.0
    %3035 = vmatprep.subr.mxu0 0.0
    %3036 = vmatpush1.msra.mxu0 0.0
    %3037 = vmatprep.subr.mxu0 0.0
    %3038 = vmatpush1.msra.mxu0 0.0
    %3039 = vmatprep.subr.mxu0 0.0
    %3040 = vmatpush1.msra.mxu0 0.0
    %3041 = vmatprep.subr.mxu0 0.0
    %3042 = vmatpush1.msra.mxu0 0.0
    %3043 = vmatprep.subr.mxu0 0.0
    %3044 = vmatpush1.msra.mxu0 0.0
    %3045 = vmatprep.subr.mxu0 0.0
    %3046 = vmatpush1.msra.mxu0 0.0
    %3047 = vmatprep.subr.mxu0 0.0
    %3048 = vmatpush1.msra.mxu0 0.0
    %3049 = vmatprep.subr.mxu0 0.0
    %3050 = vmatpush1.msra.mxu0 0.0
    %3051 = vmatprep.subr.mxu0 0.0
    %3052 = vmatpush1.msra.mxu0 %v2789
    %3053 = vmatprep.subr.mxu0 0.0
    %3054 = vmatpush1.msra.mxu0 %v2788
    %3055 = vmatprep.subr.mxu0 0.0
    %3056 = vmatpush1.msra.mxu0 %v2787
    %3057 = vmatprep.subr.mxu0 0.0
    %3058 = vmatpush1.msra.mxu0 %v2786
    %3059 = vmatprep.subr.mxu0 0.0
    %3060 = vmatpush2.msra.mxu0 0.0
    %3061 = vmatprep.subr.mxu0 0.0
    %3062 = vmatpush2.msra.mxu0 0.0
    %3063 = vmatprep.subr.mxu0 0.0
    %3064 = vmatpush2.msra.mxu0 0.0
    %3065 = vmatprep.subr.mxu0 0.0
    %3066 = vmatpush2.msra.mxu0 0.0
    %3067 = vmatprep.subr.mxu0 0.0
    %3068 = vmatpush2.msra.mxu0 0.0
    %3069 = vmatprep.subr.mxu0 0.0
    %3070 = vmatpush2.msra.mxu0 0.0
    %3071 = vmatprep.subr.mxu0 0.0
    %3072 = vmatpush2.msra.mxu0 0.0
    %3073 = vmatprep.subr.mxu0 0.0
    %3074 = vmatpush2.msra.mxu0 0.0
    %3075 = vmatprep.subr.mxu0 0.0
    %3076 = vmatpush2.msra.mxu0 0.0
    %3077 = vmatprep.subr.mxu0 0.0
    %3078 = vmatpush2.msra.mxu0 0.0
    %3079 = vmatprep.subr.mxu0 0.0
    %3080 = vmatpush2.msra.mxu0 0.0
    %3081 = vmatprep.subr.mxu0 0.0
    %3082 = vmatpush2.msra.mxu0 0.0
    %3083 = vmatprep.subr.mxu0 0.0
    %3084 = vmatpush2.msra.mxu0 0.0
    %3085 = vmatprep.subr.mxu0 0.0
    %3086 = vmatpush2.msra.mxu0 0.0
    %3087 = vmatprep.subr.mxu0 0.0
    %3088 = vmatpush2.msra.mxu0 0.0
    %3089 = vmatprep.subr.mxu0 0.0
    %3090 = vmatpush2.msra.mxu0 0.0
    %3091 = vmatprep.mubr.f32.mxu0 0.0
    %3092 = vmatmul.mubr.f32.gmra.mxu0 %v3025
    %v3093 = vpop.f32.mrf.mxu0
    %v3094 = vadd.f32 0.0, %v3093
    %v3095 = vpop.f32.mrf.mxu0
    %3096 = vdwg.mxu0
    %v3097 = vadd.f32 %v3024, %v3094
    %v3098 = vxor.u32 %v3097, 2147483648
    %v3099 = vmul.f32 %v3098, 1.442695
    %v3100 = vpow.pop %v3099
    %v3101 = vadd.f32 %v3100, 1.0
    %v3102 = vrcp.pop %v3101
    %v3103 = vmul.f32 1.0, %v3102
    %v3104 = vtanh.pop %v3097
    %v3105 = vmul.f32 %v3103, %v3012
    %3107 = vrot.lane.b32.xlu0 %v3104, 64
    %v3108 = vpop.permute.xlu0 %3107
    %v3110 = vmul.f32 %v3103, %v3108
    %3112 = vrot.lane.b32.xlu0 %v3110, 32
    %v3113 = vpop.permute.xlu0 %3112
    %v3115 = vadd.f32 %v3105, %v3113
    %v3116 = vtanh.pop %v3115
    %3118 = vrot.lane.b32.xlu0 %v3116, 64
    %v3119 = vpop.permute.xlu0 %3118
    %v3121 = vmul.f32 %v3103, %v3119
    %3123 = vrot.lane.b32.xlu0 %v3121, 32
    %v3124 = vpop.permute.xlu0 %3123
    %3126 = vst.msk [vmem:[#allocation3 + $0x6] sm:$0x3] %vm264, %v3124
    %v3127 = vld [vmem:[#allocation2 + $0x8] sm:$0x3]
    %v3128 = vsel %vm267, %v3124, 0
    %3130 = vmatprep.subr.mxu0 0.0
    %3131 = vmatpush1.msra.mxu0 0.0
    %3132 = vmatprep.subr.mxu0 0.0
    %3133 = vmatpush1.msra.mxu0 0.0
    %3134 = vmatprep.subr.mxu0 0.0
    %3135 = vmatpush1.msra.mxu0 0.0
    %3136 = vmatprep.subr.mxu0 0.0
    %3137 = vmatpush1.msra.mxu0 0.0
    %3138 = vmatprep.subr.mxu0 0.0
    %3139 = vmatpush1.msra.mxu0 0.0
    %3140 = vmatprep.subr.mxu0 0.0
    %3141 = vmatpush1.msra.mxu0 0.0
    %3142 = vmatprep.subr.mxu0 0.0
    %3143 = vmatpush1.msra.mxu0 0.0
    %3144 = vmatprep.subr.mxu0 0.0
    %3145 = vmatpush1.msra.mxu0 0.0
    %3146 = vmatprep.subr.mxu0 0.0
    %3147 = vmatpush1.msra.mxu0 0.0
    %3148 = vmatprep.subr.mxu0 0.0
    %3149 = vmatpush1.msra.mxu0 0.0
    %3150 = vmatprep.subr.mxu0 0.0
    %3151 = vmatpush1.msra.mxu0 0.0
    %3152 = vmatprep.subr.mxu0 0.0
    %3153 = vmatpush1.msra.mxu0 0.0
    %3154 = vmatprep.subr.mxu0 0.0
    %3155 = vmatpush1.msra.mxu0 %v2789
    %3156 = vmatprep.subr.mxu0 0.0
    %3157 = vmatpush1.msra.mxu0 %v2788
    %3158 = vmatprep.subr.mxu0 0.0
    %3159 = vmatpush1.msra.mxu0 %v2787
    %3160 = vmatprep.subr.mxu0 0.0
    %3161 = vmatpush1.msra.mxu0 %v2786
    %3162 = vmatprep.subr.mxu0 0.0
    %3163 = vmatpush2.msra.mxu0 0.0
    %3164 = vmatprep.subr.mxu0 0.0
    %3165 = vmatpush2.msra.mxu0 0.0
    %3166 = vmatprep.subr.mxu0 0.0
    %3167 = vmatpush2.msra.mxu0 0.0
    %3168 = vmatprep.subr.mxu0 0.0
    %3169 = vmatpush2.msra.mxu0 0.0
    %3170 = vmatprep.subr.mxu0 0.0
    %3171 = vmatpush2.msra.mxu0 0.0
    %3172 = vmatprep.subr.mxu0 0.0
    %3173 = vmatpush2.msra.mxu0 0.0
    %3174 = vmatprep.subr.mxu0 0.0
    %3175 = vmatpush2.msra.mxu0 0.0
    %3176 = vmatprep.subr.mxu0 0.0
    %3177 = vmatpush2.msra.mxu0 0.0
    %3178 = vmatprep.subr.mxu0 0.0
    %3179 = vmatpush2.msra.mxu0 0.0
    %3180 = vmatprep.subr.mxu0 0.0
    %3181 = vmatpush2.msra.mxu0 0.0
    %3182 = vmatprep.subr.mxu0 0.0
    %3183 = vmatpush2.msra.mxu0 0.0
    %3184 = vmatprep.subr.mxu0 0.0
    %3185 = vmatpush2.msra.mxu0 0.0
    %3186 = vmatprep.subr.mxu0 0.0
    %3187 = vmatpush2.msra.mxu0 0.0
    %3188 = vmatprep.subr.mxu0 0.0
    %3189 = vmatpush2.msra.mxu0 0.0
    %3190 = vmatprep.subr.mxu0 0.0
    %3191 = vmatpush2.msra.mxu0 0.0
    %3192 = vmatprep.subr.mxu0 0.0
    %3193 = vmatpush2.msra.mxu0 0.0
    %3194 = vmatprep.mubr.f32.mxu0 0.0
    %3195 = vmatmul.mubr.f32.gmra.mxu0 %v3128
    %v3196 = vpop.f32.mrf.mxu0
    %v3197 = vadd.f32 0.0, %v3196
    %v3198 = vpop.f32.mrf.mxu0
    %3199 = vdwg.mxu0
    %v3200 = vadd.f32 %v3127, %v3197
    %v3201 = vxor.u32 %v3200, 2147483648
    %v3202 = vmul.f32 %v3201, 1.442695
    %v3203 = vpow.pop %v3202
    %v3204 = vadd.f32 %v3203, 1.0
    %v3205 = vrcp.pop %v3204
    %v3206 = vmul.f32 1.0, %v3205
    %v3207 = vtanh.pop %v3200
    %v3208 = vmul.f32 %v3206, %v3115
    %3210 = vrot.lane.b32.xlu0 %v3207, 64
    %v3211 = vpop.permute.xlu0 %3210
    %v3213 = vmul.f32 %v3206, %v3211
    %3215 = vrot.lane.b32.xlu0 %v3213, 32
    %v3216 = vpop.permute.xlu0 %3215
    %v3218 = vadd.f32 %v3208, %v3216
    %v3219 = vtanh.pop %v3218
    %3221 = vrot.lane.b32.xlu0 %v3219, 64
    %v3222 = vpop.permute.xlu0 %3221
    %v3224 = vmul.f32 %v3206, %v3222
    %3226 = vrot.lane.b32.xlu0 %v3224, 32
    %v3227 = vpop.permute.xlu0 %3226
    %3229 = vst.msk [vmem:[#allocation3 + $0x8] sm:$0x3] %vm264, %v3227
    %v3230 = vld [vmem:[#allocation2 + $0xa] sm:$0x3]
    %v3231 = vsel %vm267, %v3227, 0
    %3233 = vmatprep.subr.mxu0 0.0
    %3234 = vmatpush1.msra.mxu0 0.0
    %3235 = vmatprep.subr.mxu0 0.0
    %3236 = vmatpush1.msra.mxu0 0.0
    %3237 = vmatprep.subr.mxu0 0.0
    %3238 = vmatpush1.msra.mxu0 0.0
    %3239 = vmatprep.subr.mxu0 0.0
    %3240 = vmatpush1.msra.mxu0 0.0
    %3241 = vmatprep.subr.mxu0 0.0
    %3242 = vmatpush1.msra.mxu0 0.0
    %3243 = vmatprep.subr.mxu0 0.0
    %3244 = vmatpush1.msra.mxu0 0.0
    %3245 = vmatprep.subr.mxu0 0.0
    %3246 = vmatpush1.msra.mxu0 0.0
    %3247 = vmatprep.subr.mxu0 0.0
    %3248 = vmatpush1.msra.mxu0 0.0
    %3249 = vmatprep.subr.mxu0 0.0
    %3250 = vmatpush1.msra.mxu0 0.0
    %3251 = vmatprep.subr.mxu0 0.0
    %3252 = vmatpush1.msra.mxu0 0.0
    %3253 = vmatprep.subr.mxu0 0.0
    %3254 = vmatpush1.msra.mxu0 0.0
    %3255 = vmatprep.subr.mxu0 0.0
    %3256 = vmatpush1.msra.mxu0 0.0
    %3257 = vmatprep.subr.mxu0 0.0
    %3258 = vmatpush1.msra.mxu0 %v2789
    %3259 = vmatprep.subr.mxu0 0.0
    %3260 = vmatpush1.msra.mxu0 %v2788
    %3261 = vmatprep.subr.mxu0 0.0
    %3262 = vmatpush1.msra.mxu0 %v2787
    %3263 = vmatprep.subr.mxu0 0.0
    %3264 = vmatpush1.msra.mxu0 %v2786
    %3265 = vmatprep.subr.mxu0 0.0
    %3266 = vmatpush2.msra.mxu0 0.0
    %3267 = vmatprep.subr.mxu0 0.0
    %3268 = vmatpush2.msra.mxu0 0.0
    %3269 = vmatprep.subr.mxu0 0.0
    %3270 = vmatpush2.msra.mxu0 0.0
    %3271 = vmatprep.subr.mxu0 0.0
    %3272 = vmatpush2.msra.mxu0 0.0
    %3273 = vmatprep.subr.mxu0 0.0
    %3274 = vmatpush2.msra.mxu0 0.0
    %3275 = vmatprep.subr.mxu0 0.0
    %3276 = vmatpush2.msra.mxu0 0.0
    %3277 = vmatprep.subr.mxu0 0.0
    %3278 = vmatpush2.msra.mxu0 0.0
    %3279 = vmatprep.subr.mxu0 0.0
    %3280 = vmatpush2.msra.mxu0 0.0
    %3281 = vmatprep.subr.mxu0 0.0
    %3282 = vmatpush2.msra.mxu0 0.0
    %3283 = vmatprep.subr.mxu0 0.0
    %3284 = vmatpush2.msra.mxu0 0.0
    %3285 = vmatprep.subr.mxu0 0.0
    %3286 = vmatpush2.msra.mxu0 0.0
    %3287 = vmatprep.subr.mxu0 0.0
    %3288 = vmatpush2.msra.mxu0 0.0
    %3289 = vmatprep.subr.mxu0 0.0
    %3290 = vmatpush2.msra.mxu0 0.0
    %3291 = vmatprep.subr.mxu0 0.0
    %3292 = vmatpush2.msra.mxu0 0.0
    %3293 = vmatprep.subr.mxu0 0.0
    %3294 = vmatpush2.msra.mxu0 0.0
    %3295 = vmatprep.subr.mxu0 0.0
    %3296 = vmatpush2.msra.mxu0 0.0
    %3297 = vmatprep.mubr.f32.mxu0 0.0
    %3298 = vmatmul.mubr.f32.gmra.mxu0 %v3231
    %v3299 = vpop.f32.mrf.mxu0
    %v3300 = vadd.f32 0.0, %v3299
    %v3301 = vpop.f32.mrf.mxu0
    %3302 = vdwg.mxu0
    %v3303 = vadd.f32 %v3230, %v3300
    %v3304 = vxor.u32 %v3303, 2147483648
    %v3305 = vmul.f32 %v3304, 1.442695
    %v3306 = vpow.pop %v3305
    %v3307 = vadd.f32 %v3306, 1.0
    %v3308 = vrcp.pop %v3307
    %v3309 = vmul.f32 1.0, %v3308
    %v3310 = vtanh.pop %v3303
    %v3311 = vmul.f32 %v3309, %v3218
    %3313 = vrot.lane.b32.xlu0 %v3310, 64
    %v3314 = vpop.permute.xlu0 %3313
    %v3316 = vmul.f32 %v3309, %v3314
    %3318 = vrot.lane.b32.xlu0 %v3316, 32
    %v3319 = vpop.permute.xlu0 %3318
    %v3321 = vadd.f32 %v3311, %v3319
    %v3322 = vtanh.pop %v3321
    %3324 = vrot.lane.b32.xlu0 %v3322, 64
    %v3325 = vpop.permute.xlu0 %3324
    %v3327 = vmul.f32 %v3309, %v3325
    %3329 = vrot.lane.b32.xlu0 %v3327, 32
    %v3330 = vpop.permute.xlu0 %3329
    %3332 = vst.msk [vmem:[#allocation3 + $0xa] sm:$0x3] %vm264, %v3330
    %v3333 = vld [vmem:[#allocation2 + $0xc] sm:$0x3]
    %v3334 = vsel %vm267, %v3330, 0
    %3336 = vmatprep.subr.mxu0 0.0
    %3337 = vmatpush1.msra.mxu0 0.0
    %3338 = vmatprep.subr.mxu0 0.0
    %3339 = vmatpush1.msra.mxu0 0.0
    %3340 = vmatprep.subr.mxu0 0.0
    %3341 = vmatpush1.msra.mxu0 0.0
    %3342 = vmatprep.subr.mxu0 0.0
    %3343 = vmatpush1.msra.mxu0 0.0
    %3344 = vmatprep.subr.mxu0 0.0
    %3345 = vmatpush1.msra.mxu0 0.0
    %3346 = vmatprep.subr.mxu0 0.0
    %3347 = vmatpush1.msra.mxu0 0.0
    %3348 = vmatprep.subr.mxu0 0.0
    %3349 = vmatpush1.msra.mxu0 0.0
    %3350 = vmatprep.subr.mxu0 0.0
    %3351 = vmatpush1.msra.mxu0 0.0
    %3352 = vmatprep.subr.mxu0 0.0
    %3353 = vmatpush1.msra.mxu0 0.0
    %3354 = vmatprep.subr.mxu0 0.0
    %3355 = vmatpush1.msra.mxu0 0.0
    %3356 = vmatprep.subr.mxu0 0.0
    %3357 = vmatpush1.msra.mxu0 0.0
    %3358 = vmatprep.subr.mxu0 0.0
    %3359 = vmatpush1.msra.mxu0 0.0
    %3360 = vmatprep.subr.mxu0 0.0
    %3361 = vmatpush1.msra.mxu0 %v2789
    %3362 = vmatprep.subr.mxu0 0.0
    %3363 = vmatpush1.msra.mxu0 %v2788
    %3364 = vmatprep.subr.mxu0 0.0
    %3365 = vmatpush1.msra.mxu0 %v2787
    %3366 = vmatprep.subr.mxu0 0.0
    %3367 = vmatpush1.msra.mxu0 %v2786
    %3368 = vmatprep.subr.mxu0 0.0
    %3369 = vmatpush2.msra.mxu0 0.0
    %3370 = vmatprep.subr.mxu0 0.0
    %3371 = vmatpush2.msra.mxu0 0.0
    %3372 = vmatprep.subr.mxu0 0.0
    %3373 = vmatpush2.msra.mxu0 0.0
    %3374 = vmatprep.subr.mxu0 0.0
    %3375 = vmatpush2.msra.mxu0 0.0
    %3376 = vmatprep.subr.mxu0 0.0
    %3377 = vmatpush2.msra.mxu0 0.0
    %3378 = vmatprep.subr.mxu0 0.0
    %3379 = vmatpush2.msra.mxu0 0.0
    %3380 = vmatprep.subr.mxu0 0.0
    %3381 = vmatpush2.msra.mxu0 0.0
    %3382 = vmatprep.subr.mxu0 0.0
    %3383 = vmatpush2.msra.mxu0 0.0
    %3384 = vmatprep.subr.mxu0 0.0
    %3385 = vmatpush2.msra.mxu0 0.0
    %3386 = vmatprep.subr.mxu0 0.0
    %3387 = vmatpush2.msra.mxu0 0.0
    %3388 = vmatprep.subr.mxu0 0.0
    %3389 = vmatpush2.msra.mxu0 0.0
    %3390 = vmatprep.subr.mxu0 0.0
    %3391 = vmatpush2.msra.mxu0 0.0
    %3392 = vmatprep.subr.mxu0 0.0
    %3393 = vmatpush2.msra.mxu0 0.0
    %3394 = vmatprep.subr.mxu0 0.0
    %3395 = vmatpush2.msra.mxu0 0.0
    %3396 = vmatprep.subr.mxu0 0.0
    %3397 = vmatpush2.msra.mxu0 0.0
    %3398 = vmatprep.subr.mxu0 0.0
    %3399 = vmatpush2.msra.mxu0 0.0
    %3400 = vmatprep.mubr.f32.mxu0 0.0
    %3401 = vmatmul.mubr.f32.gmra.mxu0 %v3334
    %v3402 = vpop.f32.mrf.mxu0
    %v3403 = vadd.f32 0.0, %v3402
    %v3404 = vpop.f32.mrf.mxu0
    %3405 = vdwg.mxu0
    %v3406 = vadd.f32 %v3333, %v3403
    %v3407 = vxor.u32 %v3406, 2147483648
    %v3408 = vmul.f32 %v3407, 1.442695
    %v3409 = vpow.pop %v3408
    %v3410 = vadd.f32 %v3409, 1.0
    %v3411 = vrcp.pop %v3410
    %v3412 = vmul.f32 1.0, %v3411
    %v3413 = vtanh.pop %v3406
    %v3414 = vmul.f32 %v3412, %v3321
    %3416 = vrot.lane.b32.xlu0 %v3413, 64
    %v3417 = vpop.permute.xlu0 %3416
    %v3419 = vmul.f32 %v3412, %v3417
    %3421 = vrot.lane.b32.xlu0 %v3419, 32
    %v3422 = vpop.permute.xlu0 %3421
    %v3424 = vadd.f32 %v3414, %v3422
    %v3425 = vtanh.pop %v3424
    %3427 = vrot.lane.b32.xlu0 %v3425, 64
    %v3428 = vpop.permute.xlu0 %3427
    %v3430 = vmul.f32 %v3412, %v3428
    %3432 = vrot.lane.b32.xlu0 %v3430, 32
    %v3433 = vpop.permute.xlu0 %3432
    %3435 = vst.msk [vmem:[#allocation3 + $0xc] sm:$0x3] %vm264, %v3433
    %v3436 = vld [vmem:[#allocation2 + $0xe] sm:$0x3]
    %v3437 = vsel %vm267, %v3433, 0
    %3439 = vmatprep.subr.mxu0 0.0
    %3440 = vmatpush1.msra.mxu0 0.0
    %3441 = vmatprep.subr.mxu0 0.0
    %3442 = vmatpush1.msra.mxu0 0.0
    %3443 = vmatprep.subr.mxu0 0.0
    %3444 = vmatpush1.msra.mxu0 0.0
    %3445 = vmatprep.subr.mxu0 0.0
    %3446 = vmatpush1.msra.mxu0 0.0
    %3447 = vmatprep.subr.mxu0 0.0
    %3448 = vmatpush1.msra.mxu0 0.0
    %3449 = vmatprep.subr.mxu0 0.0
    %3450 = vmatpush1.msra.mxu0 0.0
    %3451 = vmatprep.subr.mxu0 0.0
    %3452 = vmatpush1.msra.mxu0 0.0
    %3453 = vmatprep.subr.mxu0 0.0
    %3454 = vmatpush1.msra.mxu0 0.0
    %3455 = vmatprep.subr.mxu0 0.0
    %3456 = vmatpush1.msra.mxu0 0.0
    %3457 = vmatprep.subr.mxu0 0.0
    %3458 = vmatpush1.msra.mxu0 0.0
    %3459 = vmatprep.subr.mxu0 0.0
    %3460 = vmatpush1.msra.mxu0 0.0
    %3461 = vmatprep.subr.mxu0 0.0
    %3462 = vmatpush1.msra.mxu0 0.0
    %3463 = vmatprep.subr.mxu0 0.0
    %3464 = vmatpush1.msra.mxu0 %v2789
    %3465 = vmatprep.subr.mxu0 0.0
    %3466 = vmatpush1.msra.mxu0 %v2788
    %3467 = vmatprep.subr.mxu0 0.0
    %3468 = vmatpush1.msra.mxu0 %v2787
    %3469 = vmatprep.subr.mxu0 0.0
    %3470 = vmatpush1.msra.mxu0 %v2786
    %3471 = vmatprep.subr.mxu0 0.0
    %3472 = vmatpush2.msra.mxu0 0.0
    %3473 = vmatprep.subr.mxu0 0.0
    %3474 = vmatpush2.msra.mxu0 0.0
    %3475 = vmatprep.subr.mxu0 0.0
    %3476 = vmatpush2.msra.mxu0 0.0
    %3477 = vmatprep.subr.mxu0 0.0
    %3478 = vmatpush2.msra.mxu0 0.0
    %3479 = vmatprep.subr.mxu0 0.0
    %3480 = vmatpush2.msra.mxu0 0.0
    %3481 = vmatprep.subr.mxu0 0.0
    %3482 = vmatpush2.msra.mxu0 0.0
    %3483 = vmatprep.subr.mxu0 0.0
    %3484 = vmatpush2.msra.mxu0 0.0
    %3485 = vmatprep.subr.mxu0 0.0
    %3486 = vmatpush2.msra.mxu0 0.0
    %3487 = vmatprep.subr.mxu0 0.0
    %3488 = vmatpush2.msra.mxu0 0.0
    %3489 = vmatprep.subr.mxu0 0.0
    %3490 = vmatpush2.msra.mxu0 0.0
    %3491 = vmatprep.subr.mxu0 0.0
    %3492 = vmatpush2.msra.mxu0 0.0
    %3493 = vmatprep.subr.mxu0 0.0
    %3494 = vmatpush2.msra.mxu0 0.0
    %3495 = vmatprep.subr.mxu0 0.0
    %3496 = vmatpush2.msra.mxu0 0.0
    %3497 = vmatprep.subr.mxu0 0.0
    %3498 = vmatpush2.msra.mxu0 0.0
    %3499 = vmatprep.subr.mxu0 0.0
    %3500 = vmatpush2.msra.mxu0 0.0
    %3501 = vmatprep.subr.mxu0 0.0
    %3502 = vmatpush2.msra.mxu0 0.0
    %3503 = vmatprep.mubr.f32.mxu0 0.0
    %3504 = vmatmul.mubr.f32.gmra.mxu0 %v3437
    %v3505 = vpop.f32.mrf.mxu0
    %v3506 = vadd.f32 0.0, %v3505
    %v3507 = vpop.f32.mrf.mxu0
    %3508 = vdwg.mxu0
    %v3509 = vadd.f32 %v3436, %v3506
    %v3510 = vxor.u32 %v3509, 2147483648
    %v3511 = vmul.f32 %v3510, 1.442695
    %v3512 = vpow.pop %v3511
    %v3513 = vadd.f32 %v3512, 1.0
    %v3514 = vrcp.pop %v3513
    %v3515 = vmul.f32 1.0, %v3514
    %v3516 = vtanh.pop %v3509
    %v3517 = vmul.f32 %v3515, %v3424
    %3519 = vrot.lane.b32.xlu0 %v3516, 64
    %v3520 = vpop.permute.xlu0 %3519
    %v3522 = vmul.f32 %v3515, %v3520
    %3524 = vrot.lane.b32.xlu0 %v3522, 32
    %v3525 = vpop.permute.xlu0 %3524
    %v3527 = vadd.f32 %v3517, %v3525
    %v3528 = vtanh.pop %v3527
    %3530 = vrot.lane.b32.xlu0 %v3528, 64
    %v3531 = vpop.permute.xlu0 %3530
    %v3533 = vmul.f32 %v3515, %v3531
    %3535 = vrot.lane.b32.xlu0 %v3533, 32
    %v3536 = vpop.permute.xlu0 %3535
    %3538 = vst.msk [vmem:[#allocation3 + $0xe] sm:$0x3] %vm264, %v3536
    %v3539 = vld [vmem:[#allocation3] sm:$0xff]
    %v3540 = vld [vmem:[#allocation3 + $0x8] sm:$0xff]
    %v3541 = vld [vmem:[%s13] sm:$0xff]
    %v3542 = vld [vmem:[%s13 + $0x8] sm:$0xff]
    %v3543 = vld [vmem:[%s13 + $0x10] sm:$0xff]
    %v3544 = vld [vmem:[%s13 + $0x18] sm:$0xff]
    %v3545 = vld [vmem:[#allocation4] sm:$0x1]
    %v3547 = vlaneseq
    %v3548 = vshrl.u32 %v3547, 7
    %v3549 = vsub.s32 0, %v3548
    %v3550 = vrot.slane %v3545, %v3549
    %v3553 = vsel %vm267, %v3539, 0
    %v3556 = vsel %vm267, %v3540, 0
    %3558 = vmatprep.subr.mxu0 0.0
    %3559 = vmatpush1.msra.mxu0 0.0
    %3560 = vmatprep.subr.mxu0 0.0
    %3561 = vmatpush1.msra.mxu0 0.0
    %3562 = vmatprep.subr.mxu0 0.0
    %3563 = vmatpush1.msra.mxu0 0.0
    %3564 = vmatprep.subr.mxu0 0.0
    %3565 = vmatpush1.msra.mxu0 0.0
    %3566 = vmatprep.subr.mxu0 0.0
    %3567 = vmatpush1.msra.mxu0 0.0
    %3568 = vmatprep.subr.mxu0 0.0
    %3569 = vmatpush1.msra.mxu0 0.0
    %3570 = vmatprep.subr.mxu0 0.0
    %3571 = vmatpush1.msra.mxu0 0.0
    %3572 = vmatprep.subr.mxu0 0.0
    %3573 = vmatpush1.msra.mxu0 0.0
    %3574 = vmatprep.subr.mxu0 0.0
    %3575 = vmatpush1.msra.mxu0 0.0
    %3576 = vmatprep.subr.mxu0 0.0
    %3577 = vmatpush1.msra.mxu0 0.0
    %3578 = vmatprep.subr.mxu0 0.0
    %3579 = vmatpush1.msra.mxu0 0.0
    %3580 = vmatprep.subr.mxu0 0.0
    %3581 = vmatpush1.msra.mxu0 0.0
    %3582 = vmatprep.subr.mxu0 0.0
    %3583 = vmatpush1.msra.mxu0 %v3544
    %3584 = vmatprep.subr.mxu0 0.0
    %3585 = vmatpush1.msra.mxu0 %v3543
    %3586 = vmatprep.subr.mxu0 0.0
    %3587 = vmatpush1.msra.mxu0 %v3542
    %3588 = vmatprep.subr.mxu0 0.0
    %3589 = vmatpush1.msra.mxu0 %v3541
    %3590 = vmatprep.subr.mxu0 0.0
    %3591 = vmatpush2.msra.mxu0 0.0
    %3592 = vmatprep.subr.mxu0 0.0
    %3593 = vmatpush2.msra.mxu0 0.0
    %3594 = vmatprep.subr.mxu0 0.0
    %3595 = vmatpush2.msra.mxu0 0.0
    %3596 = vmatprep.subr.mxu0 0.0
    %3597 = vmatpush2.msra.mxu0 0.0
    %3598 = vmatprep.subr.mxu0 0.0
    %3599 = vmatpush2.msra.mxu0 0.0
    %3600 = vmatprep.subr.mxu0 0.0
    %3601 = vmatpush2.msra.mxu0 0.0
    %3602 = vmatprep.subr.mxu0 0.0
    %3603 = vmatpush2.msra.mxu0 0.0
    %3604 = vmatprep.subr.mxu0 0.0
    %3605 = vmatpush2.msra.mxu0 0.0
    %3606 = vmatprep.subr.mxu0 0.0
    %3607 = vmatpush2.msra.mxu0 0.0
    %3608 = vmatprep.subr.mxu0 0.0
    %3609 = vmatpush2.msra.mxu0 0.0
    %3610 = vmatprep.subr.mxu0 0.0
    %3611 = vmatpush2.msra.mxu0 0.0
    %3612 = vmatprep.subr.mxu0 0.0
    %3613 = vmatpush2.msra.mxu0 0.0
    %3614 = vmatprep.subr.mxu0 0.0
    %3615 = vmatpush2.msra.mxu0 0.0
    %3616 = vmatprep.subr.mxu0 0.0
    %3617 = vmatpush2.msra.mxu0 0.0
    %3618 = vmatprep.subr.mxu0 0.0
    %3619 = vmatpush2.msra.mxu0 0.0
    %3620 = vmatprep.subr.mxu0 0.0
    %3621 = vmatpush2.msra.mxu0 0.0
    %3622 = vmatprep.mubr.f32.mxu0 0.0
    %3623 = vmatmul.mubr.f32.gmra.mxu0 %v3553
    %v3624 = vpop.f32.mrf.mxu0
    %v3625 = vadd.f32 %v3550, %v3624
    %v3626 = vpop.f32.mrf.mxu0
    %3627 = vmatprep.mubr.f32.mxu0 0.0
    %3628 = vmatmul.mubr.f32.gmra.mxu0 %v3556
    %v3629 = vpop.f32.mrf.mxu0
    %v3630 = vadd.f32 %v3550, %v3629
    %v3631 = vpop.f32.mrf.mxu0
    %3632 = vdwg.mxu0
    %vm3633 = vcmask 7168
    %3634 = vst.msk [vmem:[%s15] sm:$0xff] %vm3633, %v3625
    %3635 = vst.msk [vmem:[%s15 + $0x8] sm:$0xff] %vm3633, %v3630
    // Predicated region
    $region90: #{tpu_custom_call.1} parent=1 // pred_check
      _
    $region91: #{tpu_custom_call.1} parent=1 // pred_check_branch
      %3637 = sbr.rel (0) target = $region93
    $region92: #{tpu_custom_call.1} parent=1 // pred_region
      _
    $region93: #{tpu_custom_call.1} parent=1 // pred_fallthru
      _
    // Predicated region
    $region94: #{tpu_custom_call.1} parent=1 // pred_check
      _
    $region95: #{tpu_custom_call.1} parent=1 // pred_check_branch
      %3639 = sbr.rel (0) target = $region97
    $region96: #{tpu_custom_call.1} parent=1 // pred_region
      _
    $region97: #{tpu_custom_call.1} parent=1 // pred_fallthru
      _
    %3640 = vsyncpa [#allocation6], 1
    %3641 = vsyncpa [#allocation8], 1
    %3642 = vsyncpa [#allocation11], 1
    %3643 = vsyncpa [#allocation14], 1

</llo_original>
